<compile_context>
chip_gen: v7x
topology: tpu7x:2x2x1
jax: 0.10.0
libtpu: 0.0.40
codegen_flags: <defaults>
</compile_context>

<pallas_src>
import functools

import jax
import jax.numpy as jnp
from jax import lax
from jax.experimental import pallas as pl
from jax.experimental.pallas import tpu as pltpu

BN_EPS = 1e-5
LANE = 128
SUBLANE_BF16 = 16          # bf16 packs 16 rows per sublane tile
MIB = 1024 * 1024


def _round_up(x, m):
    return (x + m - 1) // m * m


def _vmem_capacity_bytes():
    # Trace-time hardware query; fall back to the smallest generation (v7x, 64 MiB)
    # if the query is unavailable so tiling stays conservative.
    try:
        return int(pltpu.get_tpu_info().vmem_capacity_bytes)
    except Exception:
        return 64 * MIB


# --------------------------------------------------------------------------------------
# Fused kernel: conv-as-matmul -> resident f32 conv scratch -> (last step) batch stats,
# folded BN scale/shift, ReLU, lane-dense output store.
#   a_ref     : (Kp, tM)  bf16   im2col patch tile, lane axis = output positions
#   w_ref     : (Cp, Kp)  bf16   conv weights (resident across the grid)
#   gamma_ref : (Cp, 1)   f32
#   beta_ref  : (Cp, 1)   f32
#   o_ref     : (Cp, Mp)  out_dtype  full output block (written once, on last step)
#   conv_ref  : (Cp, Mp)  f32    VMEM scratch, persists across grid steps
# --------------------------------------------------------------------------------------
def _fused_conv_bn_relu_kernel(a_ref, w_ref, gamma_ref, beta_ref, o_ref, conv_ref,
                               *, valid_m, tile_m, total_m):
    i = pl.program_id(0)

    acc = jnp.dot(w_ref[...], a_ref[...], preferred_element_type=jnp.float32)
    if tile_m == total_m:
        conv_ref[...] = acc
    else:
        off = pl.multiple_of(i * tile_m, LANE)   # tile_m is a multiple of 128
        conv_ref[:, pl.ds(off, tile_m)] = acc

    @pl.when(i == pl.num_programs(0) - 1)
    def _finalize():
        conv = conv_ref[...]                               # (Cp, Mp) f32, VMEM-resident
        cp, mp = conv.shape
        inv_m = 1.0 / float(valid_m)

        if mp > valid_m:
            # Zero-padded M columns hold exactly 0 in conv (A was zero-padded), but the
            # centered-variance pass must mask them out explicitly.
            mask = lax.broadcasted_iota(jnp.int32, (cp, mp), 1) < valid_m
            sum_src = jnp.where(mask, conv, 0.0)
        else:
            mask = None
            sum_src = conv

        mean = jnp.sum(sum_src, axis=1, keepdims=True) * inv_m        # (Cp, 1)
        centered = conv - mean
        if mask is not None:
            centered = jnp.where(mask, centered, 0.0)
        var = jnp.sum(centered * centered, axis=1, keepdims=True) * inv_m  # biased var

        scale = gamma_ref[...] * lax.rsqrt(var + BN_EPS)               # BN fold, once
        shift = beta_ref[...] - mean * scale
        o_ref[...] = jnp.maximum(conv * scale + shift, 0.0).astype(o_ref.dtype)


def conv_bn_relu_layer(xc, w, gamma, beta, kernel_size, stride=2,
                       out_dtype=jnp.bfloat16):
    """One Conv3d(stride=2, padding=k//2, bias cancelled) + BatchNorm3d(train) + ReLU.

    xc is channels-outermost: (Cin, N, D, H, W).  Returns (Cout, N, Do, Ho, Wo) in
    out_dtype (bf16 for intermediate layers, f32 for the final layer).
    """
    Cin, N, D, H, W = xc.shape
    Cout = w.shape[0]
    k = kernel_size
    p = k // 2
    hk = (k - 1) // 2
    Do = (D + 2 * p - k) // stride + 1
    Ho = (H + 2 * p - k) // stride + 1
    Wo = (W + 2 * p - k) // stride + 1
    M = N * Do * Ho * Wo
    K = Cin * k * k * k

    Kp = _round_up(K, LANE)           # 128-lane aligned contraction
    Cp = _round_up(Cout, SUBLANE_BF16)  # bf16 sublane-packed channel axis

    # Per-generation A-tile double-buffer budget: v5e/v6e (128 MiB VMEM) get larger
    # tiles; v7x (64 MiB) / unknown keep the conservative 12 MiB budget.
    vmem_cap = _vmem_capacity_bytes()
    if vmem_cap >= 96 * MIB:
        a_budget, tm_cap = 24 * MIB, 2048
    else:
        a_budget, tm_cap = 12 * MIB, 1024
    tm_fit = max(LANE, (a_budget // (Kp * 2 * 2)) // LANE * LANE)
    tM = min(tm_cap, _round_up(M, LANE), tm_fit)
    Mp = _round_up(M, tM)
    n_tiles = Mp // tM
    # TODO(synk): for very large M the (Cp, Mp) resident conv scratch would need a
    # two-phase revisiting grid instead of a single resident block.

    # ---- XLA glue: patch matrix via stride-2 parity decomposition --------------------
    # The parity split is a single reshape+transpose (no strided slices); every per-tap
    # slice below is then contiguous, and the result is written straight into the
    # pre-padded lane-aligned (Kp, Mp) buffer.
    # TODO(synk): fully in-kernel patch construction from a VMEM-resident padded input
    # (removes the k^3/stride^3 HBM read blow-up) needs unaligned per-tap lane slices
    # or a relayout-free shift trick and is left for a follow-up.
    assert stride == 2, "parity decomposition assumes stride 2 (as in the module)"
    xb = xc.astype(jnp.bfloat16)
    Jd, Jh, Jw = Do + hk, Ho + hk, Wo + hk
    De, He, We = 2 * Jd, 2 * Jh, 2 * Jw
    xpad = jnp.pad(xb, ((0, 0), (0, 0),
                        (p, De - D - p), (p, He - H - p), (p, We - W - p)))
    # slabs[pd, ph, pw, ci, n, j, l, m] == xpad[ci, n, 2j+pd, 2l+ph, 2m+pw]
    slabs = xpad.reshape(Cin, N, Jd, 2, Jh, 2, Jw, 2)
    slabs = slabs.transpose(3, 5, 7, 0, 1, 2, 4, 6)

    taps = []
    for kd in range(k):
        a, pd = kd // 2, kd % 2
        for kh in range(k):
            b, ph = kh // 2, kh % 2
            for kw in range(k):
                c, pw = kw // 2, kw % 2
                taps.append(slabs[pd, ph, pw, :, :,
                                  a:a + Do, b:b + Ho, c:c + Wo])
    # (Cin, k^3, N, Do, Ho, Wo) -> (K, M); row order (ci, kd, kh, kw) matches
    # w.reshape(Cout, K), so no weight permutation is needed.
    patches = jnp.stack(taps, axis=1).reshape(K, M)
    if (Kp, Mp) == (K, M):
        a_t = patches
    else:
        a_t = jnp.zeros((Kp, Mp), jnp.bfloat16).at[:K, :M].set(patches)

    w_mat = jnp.zeros((Cp, Kp), jnp.bfloat16).at[:Cout, :K].set(
        w.reshape(Cout, K).astype(jnp.bfloat16))
    g2 = jnp.zeros((Cp, 1), jnp.float32).at[:Cout, 0].set(gamma.astype(jnp.float32))
    b2 = jnp.zeros((Cp, 1), jnp.float32).at[:Cout, 0].set(beta.astype(jnp.float32))

    # ---- Fused pallas_call ------------------------------------------------------------
    out_itemsize = jnp.dtype(out_dtype).itemsize
    buf_bytes = (Kp * tM * 2 * 2                    # A tiles (bf16, double-buffered)
                 + Cp * Kp * 2 * 2                  # weight block
                 + Cp * Mp * out_itemsize * 2       # output block
                 + Cp * Mp * 4                      # f32 conv scratch (resident)
                 + 4 * Cp * LANE * 4)               # gamma/beta (lane-padded) blocks
    vmem_limit = int(min(48 * MIB, max(16 * MIB, buf_bytes + 4 * MIB)))

    y = pl.pallas_call(
        functools.partial(_fused_conv_bn_relu_kernel,
                          valid_m=M, tile_m=tM, total_m=Mp),
        out_shape=jax.ShapeDtypeStruct((Cp, Mp), out_dtype),
        grid=(n_tiles,),
        in_specs=[pl.BlockSpec((Kp, tM), lambda i: (0, i)),
                  pl.BlockSpec((Cp, Kp), lambda i: (0, 0)),
                  pl.BlockSpec((Cp, 1), lambda i: (0, 0)),
                  pl.BlockSpec((Cp, 1), lambda i: (0, 0))],
        out_specs=pl.BlockSpec((Cp, Mp), lambda i: (0, 0)),
        scratch_shapes=[pltpu.VMEM((Cp, Mp), jnp.float32)],
        compiler_params=pltpu.CompilerParams(
            # Stats + the final write depend on all tiles -> the single axis must be
            # "arbitrary" (serial).  At these shapes n_tiles is 1-2, so megacore split
            # would be pure overhead anyway.
            # TODO(synk): for large M on v7x, split into (2, n_tiles//2) with per-core
            # partial stats combined in an epilogue to use both TensorCores.
            dimension_semantics=("arbitrary",),
            vmem_limit_bytes=vmem_limit),
        cost_estimate=pl.CostEstimate(
            flops=2 * Cp * Kp * Mp,
            transcendentals=Cp,
            bytes_accessed=Kp * Mp * 2 + Cp * Kp * 2 + Cp * Mp * out_itemsize),
    )(a_t, w_mat, g2, b2)

    # Drop channel / position padding; stay channels-outermost for the next layer.
    return y[:Cout, :M].reshape(Cout, N, Do, Ho, Wo)


def build_params(key, in_channels, out_channels, kernel_size, in_size, min_size):
    """Deterministic synthetic parameters mirroring the module's layer stack.

    Faithful to the PyTorch code, every layer is Conv3d(in_channels, out_channels),
    so stacking requires in_channels == out_channels.  The conv bias is omitted because
    training-mode BatchNorm cancels it exactly.
    """
    params = []
    current = in_size
    fan_in = in_channels * kernel_size ** 3
    while current > min_size:
        key, k1, k2, k3 = jax.random.split(key, 4)
        w = jax.random.normal(
            k1, (out_channels, in_channels, kernel_size, kernel_size, kernel_size),
            jnp.float32) / jnp.sqrt(float(fan_in))
        gamma = 1.0 + 0.1 * jax.random.normal(k2, (out_channels,), jnp.float32)
        beta = 0.1 * jax.random.normal(k3, (out_channels,), jnp.float32)
        params.append((w, gamma, beta))
        current = current // 2
    return params


def adaptive_spatial_condenser(x, params, kernel_size):
    # NCDHW -> channels-outermost (C, N, D, H, W) once at entry; layers keep this layout
    # (intermediate activations are bf16), back to NCDHW / f32 once at exit.
    xc = jnp.transpose(x, (1, 0, 2, 3, 4))
    n_layers = len(params)
    for idx, (w, gamma, beta) in enumerate(params):
        out_dtype = jnp.float32 if idx == n_layers - 1 else jnp.bfloat16
        xc = conv_bn_relu_layer(xc, w, gamma, beta, kernel_size, out_dtype=out_dtype)
    return jnp.transpose(xc, (1, 0, 2, 3, 4))
    # TODO(synk): BatchNorm running-stat (momentum) updates are training bookkeeping and
    # do not affect the forward output, so they are not materialized here.


if __name__ == "__main__":
    IN_CH = OUT_CH = 4                      # module requires in==out to chain layers
    KSIZE = 7                               # module default kernel size
    IN_SIZE, MIN_SIZE = 16, 4               # 2 condensing layers: 16 -> 8 -> 4

    key = jax.random.PRNGKey(0)
    kx, kp = jax.random.split(key)
    x = jax.random.normal(kx, (2, IN_CH, IN_SIZE, IN_SIZE, IN_SIZE), jnp.float32)
    params = build_params(kp, IN_CH, OUT_CH, KSIZE, IN_SIZE, MIN_SIZE)

    fwd = jax.jit(functools.partial(adaptive_spatial_condenser, kernel_size=KSIZE))
    y = fwd(x, params)
    jax.block_until_ready(y)

    assert y.shape == (2, OUT_CH, 4, 4, 4), y.shape
    print("KERNEL_OK")
</pallas_src>

<mosaic_0001>
module attributes {stable_mosaic.version = 11 : i64} {
  func.func @_fused_conv_bn_relu_kernel(%arg0: i32, %arg1: memref<1408x1024xbf16, #tpu.memory_space<vmem>>, %arg2: memref<16x1408xbf16, #tpu.memory_space<vmem>>, %arg3: memref<16x1xf32, #tpu.memory_space<vmem>>, %arg4: memref<16x1xf32, #tpu.memory_space<vmem>>, %arg5: memref<16x1024xbf16, #tpu.memory_space<vmem>>, %arg6: memref<16x1024xf32, #tpu.memory_space<vmem>>) attributes {dimension_semantics = [#tpu.dimension_semantics<arbitrary>], iteration_bounds = array<i64: 1>, scalar_prefetch = 0 : i64, scratch_operands = 1 : i64, tpu.core_type = #tpu.core_type<tc>, window_params = [{transform_indices = @transform_0, window_bounds = array<i64: 1408, 1024>}, {pipeline_mode = #tpu.pipeline_mode<synchronous>, transform_indices = @transform_1, window_bounds = array<i64: 16, 1408>}, {pipeline_mode = #tpu.pipeline_mode<synchronous>, transform_indices = @transform_2, window_bounds = array<i64: 16, 1>}, {pipeline_mode = #tpu.pipeline_mode<synchronous>, transform_indices = @transform_3, window_bounds = array<i64: 16, 1>}, {pipeline_mode = #tpu.pipeline_mode<synchronous>, transform_indices = @transform_4, window_bounds = array<i64: 16, 1024>}]} {
    %c0 = arith.constant 0 : index
    %c0_0 = arith.constant 0 : index
    %0 = vector.load %arg2[%c0, %c0_0] : memref<16x1408xbf16, #tpu.memory_space<vmem>>, vector<16x1408xbf16>
    %c0_1 = arith.constant 0 : index
    %c0_2 = arith.constant 0 : index
    %1 = vector.load %arg1[%c0_1, %c0_2] : memref<1408x1024xbf16, #tpu.memory_space<vmem>>, vector<1408x1024xbf16>
    %cst = arith.constant dense<0.000000e+00> : vector<16x1024xf32>
    %2 = tpu.matmul %0, %1, %cst {dimension_numbers = #tpu.dot_dimension_numbers<[1], [0], [0], [1], [0, 0, 1, 1], [], []>} : vector<16x1408xbf16>, vector<1408x1024xbf16>, vector<16x1024xf32> -> vector<16x1024xf32>
    %c0_3 = arith.constant 0 : index
    %c0_4 = arith.constant 0 : index
    %3 = vector.load %arg6[%c0_3, %c0_4] : memref<16x1024xf32, #tpu.memory_space<vmem>>, vector<16x1024xf32>
    tpu.vector_store %arg6[%c0_3, %c0_4], %2 {strides = array<i32>} : memref<16x1024xf32, #tpu.memory_space<vmem>>, vector<16x1024xf32>,
    %c0_i32 = arith.constant 0 : i32
    %4 = arith.cmpi eq, %arg0, %c0_i32 : i32
    %5 = arith.extui %4 : i1 to i32
    %c0_i32_5 = arith.constant 0 : i32
    %6 = arith.cmpi ne, %5, %c0_i32_5 : i32
    scf.if %6 {
      %c0_6 = arith.constant 0 : index
      %c0_7 = arith.constant 0 : index
      %7 = vector.load %arg6[%c0_6, %c0_7] : memref<16x1024xf32, #tpu.memory_space<vmem>>, vector<16x1024xf32>
      %cst_8 = arith.constant dense<0.000000e+00> : vector<16xf32>
      %8 = vector.multi_reduction <add>, %7, %cst_8 [1] : vector<16x1024xf32> to vector<16xf32>
      %9 = vector.shape_cast %8 : vector<16xf32> to vector<16x1xf32>
      %cst_9 = arith.constant 9.765625E-4 : f32
      %10 = vector.broadcast %cst_9 : f32 to vector<16x1xf32>
      %11 = arith.mulf %9, %10 : vector<16x1xf32>
      %12 = vector.broadcast %11 : vector<16x1xf32> to vector<16x1024xf32>
      %13 = arith.subf %7, %12 : vector<16x1024xf32>
      %14 = arith.mulf %13, %13 : vector<16x1024xf32>
      %cst_10 = arith.constant dense<0.000000e+00> : vector<16xf32>
      %15 = vector.multi_reduction <add>, %14, %cst_10 [1] : vector<16x1024xf32> to vector<16xf32>
      %16 = vector.shape_cast %15 : vector<16xf32> to vector<16x1xf32>
      %cst_11 = arith.constant 9.765625E-4 : f32
      %17 = vector.broadcast %cst_11 : f32 to vector<16x1xf32>
      %18 = arith.mulf %16, %17 : vector<16x1xf32>
      %c0_12 = arith.constant 0 : index
      %c0_13 = arith.constant 0 : index
      %19 = vector.load %arg3[%c0_12, %c0_13] : memref<16x1xf32, #tpu.memory_space<vmem>>, vector<16x1xf32>
      %cst_14 = arith.constant 9.99999974E-6 : f32
      %20 = vector.broadcast %cst_14 : f32 to vector<16x1xf32>
      %21 = arith.addf %18, %20 : vector<16x1xf32>
      %22 = math.rsqrt %21 : vector<16x1xf32>
      %23 = arith.mulf %19, %22 : vector<16x1xf32>
      %c0_15 = arith.constant 0 : index
      %c0_16 = arith.constant 0 : index
      %24 = vector.load %arg4[%c0_15, %c0_16] : memref<16x1xf32, #tpu.memory_space<vmem>>, vector<16x1xf32>
      %25 = arith.mulf %11, %23 : vector<16x1xf32>
      %26 = arith.subf %24, %25 : vector<16x1xf32>
      %27 = vector.broadcast %23 : vector<16x1xf32> to vector<16x1024xf32>
      %28 = arith.mulf %7, %27 : vector<16x1024xf32>
      %29 = vector.broadcast %26 : vector<16x1xf32> to vector<16x1024xf32>
      %30 = arith.addf %28, %29 : vector<16x1024xf32>
      %cst_17 = arith.constant 0.000000e+00 : f32
      %31 = vector.broadcast %cst_17 : f32 to vector<16x1024xf32>
      %32 = arith.maximumf %30, %31 : vector<16x1024xf32>
      %33 = arith.truncf %32 : vector<16x1024xf32> to vector<16x1024xbf16>
      %c0_18 = arith.constant 0 : index
      %c0_19 = arith.constant 0 : index
      %34 = vector.load %arg5[%c0_18, %c0_19] : memref<16x1024xbf16, #tpu.memory_space<vmem>>, vector<16x1024xbf16>
      tpu.vector_store %arg5[%c0_18, %c0_19], %33 {strides = array<i32>} : memref<16x1024xbf16, #tpu.memory_space<vmem>>, vector<16x1024xbf16>,
    } else {
    }
    return
  }
  func.func @transform_0(%arg0: i32) -> (i32, i32) {
    %c0_i32 = arith.constant 0 : i32
    %c0_i32_0 = arith.constant 0 : i32
    return %c0_i32, %arg0 : i32, i32
  }
  func.func @transform_1(%arg0: i32) -> (i32, i32) {
    %c0_i32 = arith.constant 0 : i32
    %c0_i32_0 = arith.constant 0 : i32
    %c0_i32_1 = arith.constant 0 : i32
    return %c0_i32, %c0_i32_0 : i32, i32
  }
  func.func @transform_2(%arg0: i32) -> (i32, i32) {
    %c0_i32 = arith.constant 0 : i32
    %c0_i32_0 = arith.constant 0 : i32
    %c0_i32_1 = arith.constant 0 : i32
    return %c0_i32, %c0_i32_0 : i32, i32
  }
  func.func @transform_3(%arg0: i32) -> (i32, i32) {
    %c0_i32 = arith.constant 0 : i32
    %c0_i32_0 = arith.constant 0 : i32
    %c0_i32_1 = arith.constant 0 : i32
    return %c0_i32, %c0_i32_0 : i32, i32
  }
  func.func @transform_4(%arg0: i32) -> (i32, i32) {
    %c0_i32 = arith.constant 0 : i32
    %c0_i32_0 = arith.constant 0 : i32
    %c0_i32_1 = arith.constant 0 : i32
    return %c0_i32, %c0_i32_0 : i32, i32
  }
}

module attributes {stable_mosaic.version = 11 : i64} {
  func.func @_fused_conv_bn_relu_kernel(%arg0: i32, %arg1: memref<1408x128xbf16, #tpu.memory_space<vmem>>, %arg2: memref<16x1408xbf16, #tpu.memory_space<vmem>>, %arg3: memref<16x1xf32, #tpu.memory_space<vmem>>, %arg4: memref<16x1xf32, #tpu.memory_space<vmem>>, %arg5: memref<16x128xf32, #tpu.memory_space<vmem>>, %arg6: memref<16x128xf32, #tpu.memory_space<vmem>>) attributes {dimension_semantics = [#tpu.dimension_semantics<arbitrary>], iteration_bounds = array<i64: 1>, scalar_prefetch = 0 : i64, scratch_operands = 1 : i64, tpu.core_type = #tpu.core_type<tc>, window_params = [{transform_indices = @transform_0, window_bounds = array<i64: 1408, 128>}, {pipeline_mode = #tpu.pipeline_mode<synchronous>, transform_indices = @transform_1, window_bounds = array<i64: 16, 1408>}, {pipeline_mode = #tpu.pipeline_mode<synchronous>, transform_indices = @transform_2, window_bounds = array<i64: 16, 1>}, {pipeline_mode = #tpu.pipeline_mode<synchronous>, transform_indices = @transform_3, window_bounds = array<i64: 16, 1>}, {pipeline_mode = #tpu.pipeline_mode<synchronous>, transform_indices = @transform_4, window_bounds = array<i64: 16, 128>}]} {
    %c0 = arith.constant 0 : index
    %c0_0 = arith.constant 0 : index
    %0 = vector.load %arg2[%c0, %c0_0] : memref<16x1408xbf16, #tpu.memory_space<vmem>>, vector<16x1408xbf16>
    %c0_1 = arith.constant 0 : index
    %c0_2 = arith.constant 0 : index
    %1 = vector.load %arg1[%c0_1, %c0_2] : memref<1408x128xbf16, #tpu.memory_space<vmem>>, vector<1408x128xbf16>
    %cst = arith.constant dense<0.000000e+00> : vector<16x128xf32>
    %2 = tpu.matmul %0, %1, %cst {dimension_numbers = #tpu.dot_dimension_numbers<[1], [0], [0], [1], [0, 0, 1, 1], [], []>} : vector<16x1408xbf16>, vector<1408x128xbf16>, vector<16x128xf32> -> vector<16x128xf32>
    %c0_3 = arith.constant 0 : index
    %c0_4 = arith.constant 0 : index
    %3 = vector.load %arg6[%c0_3, %c0_4] : memref<16x128xf32, #tpu.memory_space<vmem>>, vector<16x128xf32>
    tpu.vector_store %arg6[%c0_3, %c0_4], %2 {strides = array<i32>} : memref<16x128xf32, #tpu.memory_space<vmem>>, vector<16x128xf32>,
    %c0_i32 = arith.constant 0 : i32
    %4 = arith.cmpi eq, %arg0, %c0_i32 : i32
    %5 = arith.extui %4 : i1 to i32
    %c0_i32_5 = arith.constant 0 : i32
    %6 = arith.cmpi ne, %5, %c0_i32_5 : i32
    scf.if %6 {
      %c0_6 = arith.constant 0 : index
      %c0_7 = arith.constant 0 : index
      %7 = vector.load %arg6[%c0_6, %c0_7] : memref<16x128xf32, #tpu.memory_space<vmem>>, vector<16x128xf32>
      %cst_8 = arith.constant dense<0.000000e+00> : vector<16xf32>
      %8 = vector.multi_reduction <add>, %7, %cst_8 [1] : vector<16x128xf32> to vector<16xf32>
      %9 = vector.shape_cast %8 : vector<16xf32> to vector<16x1xf32>
      %cst_9 = arith.constant 7.812500e-03 : f32
      %10 = vector.broadcast %cst_9 : f32 to vector<16x1xf32>
      %11 = arith.mulf %9, %10 : vector<16x1xf32>
      %12 = vector.broadcast %11 : vector<16x1xf32> to vector<16x128xf32>
      %13 = arith.subf %7, %12 : vector<16x128xf32>
      %14 = arith.mulf %13, %13 : vector<16x128xf32>
      %cst_10 = arith.constant dense<0.000000e+00> : vector<16xf32>
      %15 = vector.multi_reduction <add>, %14, %cst_10 [1] : vector<16x128xf32> to vector<16xf32>
      %16 = vector.shape_cast %15 : vector<16xf32> to vector<16x1xf32>
      %cst_11 = arith.constant 7.812500e-03 : f32
      %17 = vector.broadcast %cst_11 : f32 to vector<16x1xf32>
      %18 = arith.mulf %16, %17 : vector<16x1xf32>
      %c0_12 = arith.constant 0 : index
      %c0_13 = arith.constant 0 : index
      %19 = vector.load %arg3[%c0_12, %c0_13] : memref<16x1xf32, #tpu.memory_space<vmem>>, vector<16x1xf32>
      %cst_14 = arith.constant 9.99999974E-6 : f32
      %20 = vector.broadcast %cst_14 : f32 to vector<16x1xf32>
      %21 = arith.addf %18, %20 : vector<16x1xf32>
      %22 = math.rsqrt %21 : vector<16x1xf32>
      %23 = arith.mulf %19, %22 : vector<16x1xf32>
      %c0_15 = arith.constant 0 : index
      %c0_16 = arith.constant 0 : index
      %24 = vector.load %arg4[%c0_15, %c0_16] : memref<16x1xf32, #tpu.memory_space<vmem>>, vector<16x1xf32>
      %25 = arith.mulf %11, %23 : vector<16x1xf32>
      %26 = arith.subf %24, %25 : vector<16x1xf32>
      %27 = vector.broadcast %23 : vector<16x1xf32> to vector<16x128xf32>
      %28 = arith.mulf %7, %27 : vector<16x128xf32>
      %29 = vector.broadcast %26 : vector<16x1xf32> to vector<16x128xf32>
      %30 = arith.addf %28, %29 : vector<16x128xf32>
      %cst_17 = arith.constant 0.000000e+00 : f32
      %31 = vector.broadcast %cst_17 : f32 to vector<16x128xf32>
      %32 = arith.maximumf %30, %31 : vector<16x128xf32>
      %c0_18 = arith.constant 0 : index
      %c0_19 = arith.constant 0 : index
      %33 = vector.load %arg5[%c0_18, %c0_19] : memref<16x128xf32, #tpu.memory_space<vmem>>, vector<16x128xf32>
      tpu.vector_store %arg5[%c0_18, %c0_19], %32 {strides = array<i32>} : memref<16x128xf32, #tpu.memory_space<vmem>>, vector<16x128xf32>,
    } else {
    }
    return
  }
  func.func @transform_0(%arg0: i32) -> (i32, i32) {
    %c0_i32 = arith.constant 0 : i32
    %c0_i32_0 = arith.constant 0 : i32
    return %c0_i32, %arg0 : i32, i32
  }
  func.func @transform_1(%arg0: i32) -> (i32, i32) {
    %c0_i32 = arith.constant 0 : i32
    %c0_i32_0 = arith.constant 0 : i32
    %c0_i32_1 = arith.constant 0 : i32
    return %c0_i32, %c0_i32_0 : i32, i32
  }
  func.func @transform_2(%arg0: i32) -> (i32, i32) {
    %c0_i32 = arith.constant 0 : i32
    %c0_i32_0 = arith.constant 0 : i32
    %c0_i32_1 = arith.constant 0 : i32
    return %c0_i32, %c0_i32_0 : i32, i32
  }
  func.func @transform_3(%arg0: i32) -> (i32, i32) {
    %c0_i32 = arith.constant 0 : i32
    %c0_i32_0 = arith.constant 0 : i32
    %c0_i32_1 = arith.constant 0 : i32
    return %c0_i32, %c0_i32_0 : i32, i32
  }
  func.func @transform_4(%arg0: i32) -> (i32, i32) {
    %c0_i32 = arith.constant 0 : i32
    %c0_i32_0 = arith.constant 0 : i32
    %c0_i32_1 = arith.constant 0 : i32
    return %c0_i32, %c0_i32_0 : i32, i32
  }
}

</mosaic_0001>

<llo_original>
// kernel: adaptive_spatial_condenser.2
$region0: #{adaptive_spatial_condenser.2}
  #allocation0 [shape = 'u32[]', space=smem, size = 0x4, offset = 0x4, fixed_abs, tag = 'smem constant byte address 0x4 - core index']
  #allocation1 [shape = 'u32[144,128]{1,0:T(1,128)}', space=vmem, size = 0x12000, scoped, tag = 'internal scratch']
  #allocation2 [shape = 'f32[16,1024]{1,0:T(8,128)}', space=vmem, size = 0x10000, scoped, tag = 'scratch operand']
  %s0 = inlined_call_operand.vmem [shape: bf16[1408,1024], index: 0, kind: input, shape index: {}]
  %s1 = inlined_call_operand.vmem [shape: bf16[16,1408], index: 1, kind: input, shape index: {}]
  %s2 = inlined_call_operand.vmem [shape: f32[16,1], index: 2, kind: input, shape index: {}]
  %s3 = inlined_call_operand.vmem [shape: f32[16,1], index: 3, kind: input, shape index: {}]
  %s4 = inlined_call_operand.vmem [shape: bf16[16,1024], index: 4, kind: output, shape index: {}]
  %s5 = sld [smem:[#allocation0]]
  $region30: #{adaptive_spatial_condenser.2} parent=0
    _
  %s7 = ssub.s32 1, %s5
  %s8 = scalar_select 0, %s7, %s5
  // Predicated region
  $region2: #{adaptive_spatial_condenser.2} parent=0 // pred_check
    _
  $region3: #{adaptive_spatial_condenser.2} parent=0 // pred_check_branch
    %10 = sbr.rel (0) target = $region5
  $region4: #{adaptive_spatial_condenser.2} parent=0 // pred_region
    _
  $region5: #{adaptive_spatial_condenser.2} parent=0 // pred_fallthru
    _
  // Predicated region
  $region6: #{adaptive_spatial_condenser.2} parent=0 // pred_check
    _
  $region7: #{adaptive_spatial_condenser.2} parent=0 // pred_check_branch
    %12 = sbr.rel (0) target = $region9
  $region8: #{adaptive_spatial_condenser.2} parent=0 // pred_region
    _
  $region9: #{adaptive_spatial_condenser.2} parent=0 // pred_fallthru
    _
  // Predicated region
  $region10: #{adaptive_spatial_condenser.2} parent=0 // pred_check
    _
  $region11: #{adaptive_spatial_condenser.2} parent=0 // pred_check_branch
    %14 = sbr.rel (0) target = $region13
  $region12: #{adaptive_spatial_condenser.2} parent=0 // pred_region
    _
  $region13: #{adaptive_spatial_condenser.2} parent=0 // pred_fallthru
    _
  // Predicated region
  $region14: #{adaptive_spatial_condenser.2} parent=0 // pred_check
    _
  $region15: #{adaptive_spatial_condenser.2} parent=0 // pred_check_branch
    %16 = sbr.rel (0) target = $region17
  $region16: #{adaptive_spatial_condenser.2} parent=0 // pred_region
    _
  $region17: #{adaptive_spatial_condenser.2} parent=0 // pred_fallthru
    _
  %v18 = vld [vmem:[%s1] sm:$0xff]
  %v19 = vld [vmem:[%s1 + $0x8] sm:$0xff]
  %v20 = vld [vmem:[%s1 + $0x10] sm:$0xff]
  %v21 = vld [vmem:[%s1 + $0x18] sm:$0xff]
  %v22 = vld [vmem:[%s1 + $0x20] sm:$0xff]
  %v23 = vld [vmem:[%s1 + $0x28] sm:$0xf]
  %v24 = vld [vmem:[%s1 + $0x2c] sm:$0xff]
  %v25 = vld [vmem:[%s1 + $0x34] sm:$0xff]
  %v26 = vld [vmem:[%s1 + $0x3c] sm:$0xff]
  %v27 = vld [vmem:[%s1 + $0x44] sm:$0xff]
  %v28 = vld [vmem:[%s1 + $0x4c] sm:$0xff]
  %v29 = vld [vmem:[%s1 + $0x54] sm:$0xf]
  %v30 = vld [vmem:[%s0] sm:$0xff]
  %v31 = vld [vmem:[%s0 + $0x8] sm:$0xff]
  %v32 = vld [vmem:[%s0 + $0x10] sm:$0xff]
  %v33 = vld [vmem:[%s0 + $0x18] sm:$0xff]
  %v34 = vld [vmem:[%s0 + $0x20] sm:$0xff]
  %v35 = vld [vmem:[%s0 + $0x28] sm:$0xff]
  %v36 = vld [vmem:[%s0 + $0x30] sm:$0xff]
  %v37 = vld [vmem:[%s0 + $0x38] sm:$0xff]
  %v38 = vld [vmem:[%s0 + $0x40] sm:$0xff]
  %v39 = vld [vmem:[%s0 + $0x48] sm:$0xff]
  %v40 = vld [vmem:[%s0 + $0x50] sm:$0xff]
  %v41 = vld [vmem:[%s0 + $0x58] sm:$0xff]
  %v42 = vld [vmem:[%s0 + $0x60] sm:$0xff]
  %v43 = vld [vmem:[%s0 + $0x68] sm:$0xff]
  %v44 = vld [vmem:[%s0 + $0x70] sm:$0xff]
  %v45 = vld [vmem:[%s0 + $0x78] sm:$0xff]
  %v46 = vld [vmem:[%s0 + $0x80] sm:$0xff]
  %v47 = vld [vmem:[%s0 + $0x88] sm:$0xff]
  %v48 = vld [vmem:[%s0 + $0x90] sm:$0xff]
  %v49 = vld [vmem:[%s0 + $0x98] sm:$0xff]
  %v50 = vld [vmem:[%s0 + $0xa0] sm:$0xff]
  %v51 = vld [vmem:[%s0 + $0xa8] sm:$0xff]
  %v52 = vld [vmem:[%s0 + $0xb0] sm:$0xff]
  %v53 = vld [vmem:[%s0 + $0xb8] sm:$0xff]
  %v54 = vld [vmem:[%s0 + $0xc0] sm:$0xff]
  %v55 = vld [vmem:[%s0 + $0xc8] sm:$0xff]
  %v56 = vld [vmem:[%s0 + $0xd0] sm:$0xff]
  %v57 = vld [vmem:[%s0 + $0xd8] sm:$0xff]
  %v58 = vld [vmem:[%s0 + $0xe0] sm:$0xff]
  %v59 = vld [vmem:[%s0 + $0xe8] sm:$0xff]
  %v60 = vld [vmem:[%s0 + $0xf0] sm:$0xff]
  %v61 = vld [vmem:[%s0 + $0xf8] sm:$0xff]
  %v62 = vld [vmem:[%s0 + $0x100] sm:$0xff]
  %v63 = vld [vmem:[%s0 + $0x108] sm:$0xff]
  %v64 = vld [vmem:[%s0 + $0x110] sm:$0xff]
  %v65 = vld [vmem:[%s0 + $0x118] sm:$0xff]
  %v66 = vld [vmem:[%s0 + $0x120] sm:$0xff]
  %v67 = vld [vmem:[%s0 + $0x128] sm:$0xff]
  %v68 = vld [vmem:[%s0 + $0x130] sm:$0xff]
  %v69 = vld [vmem:[%s0 + $0x138] sm:$0xff]
  %v70 = vld [vmem:[%s0 + $0x140] sm:$0xff]
  %v71 = vld [vmem:[%s0 + $0x148] sm:$0xff]
  %v72 = vld [vmem:[%s0 + $0x150] sm:$0xff]
  %v73 = vld [vmem:[%s0 + $0x158] sm:$0xff]
  %v74 = vld [vmem:[%s0 + $0x160] sm:$0xff]
  %v75 = vld [vmem:[%s0 + $0x168] sm:$0xff]
  %v76 = vld [vmem:[%s0 + $0x170] sm:$0xff]
  %v77 = vld [vmem:[%s0 + $0x178] sm:$0xff]
  %v78 = vld [vmem:[%s0 + $0x180] sm:$0xff]
  %v79 = vld [vmem:[%s0 + $0x188] sm:$0xff]
  %v80 = vld [vmem:[%s0 + $0x190] sm:$0xff]
  %v81 = vld [vmem:[%s0 + $0x198] sm:$0xff]
  %v82 = vld [vmem:[%s0 + $0x1a0] sm:$0xff]
  %v83 = vld [vmem:[%s0 + $0x1a8] sm:$0xff]
  %v84 = vld [vmem:[%s0 + $0x1b0] sm:$0xff]
  %v85 = vld [vmem:[%s0 + $0x1b8] sm:$0xff]
  %v86 = vld [vmem:[%s0 + $0x1c0] sm:$0xff]
  %v87 = vld [vmem:[%s0 + $0x1c8] sm:$0xff]
  %v88 = vld [vmem:[%s0 + $0x1d0] sm:$0xff]
  %v89 = vld [vmem:[%s0 + $0x1d8] sm:$0xff]
  %v90 = vld [vmem:[%s0 + $0x1e0] sm:$0xff]
  %v91 = vld [vmem:[%s0 + $0x1e8] sm:$0xff]
  %v92 = vld [vmem:[%s0 + $0x1f0] sm:$0xff]
  %v93 = vld [vmem:[%s0 + $0x1f8] sm:$0xff]
  %v94 = vld [vmem:[%s0 + $0x200] sm:$0xff]
  %v95 = vld [vmem:[%s0 + $0x208] sm:$0xff]
  %v96 = vld [vmem:[%s0 + $0x210] sm:$0xff]
  %v97 = vld [vmem:[%s0 + $0x218] sm:$0xff]
  %v98 = vld [vmem:[%s0 + $0x220] sm:$0xff]
  %v99 = vld [vmem:[%s0 + $0x228] sm:$0xff]
  %v100 = vld [vmem:[%s0 + $0x230] sm:$0xff]
  %v101 = vld [vmem:[%s0 + $0x238] sm:$0xff]
  %v102 = vld [vmem:[%s0 + $0x240] sm:$0xff]
  %v103 = vld [vmem:[%s0 + $0x248] sm:$0xff]
  %v104 = vld [vmem:[%s0 + $0x250] sm:$0xff]
  %v105 = vld [vmem:[%s0 + $0x258] sm:$0xff]
  %v106 = vld [vmem:[%s0 + $0x260] sm:$0xff]
  %v107 = vld [vmem:[%s0 + $0x268] sm:$0xff]
  %v108 = vld [vmem:[%s0 + $0x270] sm:$0xff]
  %v109 = vld [vmem:[%s0 + $0x278] sm:$0xff]
  %v110 = vld [vmem:[%s0 + $0x280] sm:$0xff]
  %v111 = vld [vmem:[%s0 + $0x288] sm:$0xff]
  %v112 = vld [vmem:[%s0 + $0x290] sm:$0xff]
  %v113 = vld [vmem:[%s0 + $0x298] sm:$0xff]
  %v114 = vld [vmem:[%s0 + $0x2a0] sm:$0xff]
  %v115 = vld [vmem:[%s0 + $0x2a8] sm:$0xff]
  %v116 = vld [vmem:[%s0 + $0x2b0] sm:$0xff]
  %v117 = vld [vmem:[%s0 + $0x2b8] sm:$0xff]
  %v118 = vld [vmem:[%s0 + $0x2c0] sm:$0xff]
  %v119 = vld [vmem:[%s0 + $0x2c8] sm:$0xff]
  %v120 = vld [vmem:[%s0 + $0x2d0] sm:$0xff]
  %v121 = vld [vmem:[%s0 + $0x2d8] sm:$0xff]
  %v122 = vld [vmem:[%s0 + $0x2e0] sm:$0xff]
  %v123 = vld [vmem:[%s0 + $0x2e8] sm:$0xff]
  %v124 = vld [vmem:[%s0 + $0x2f0] sm:$0xff]
  %v125 = vld [vmem:[%s0 + $0x2f8] sm:$0xff]
  %v126 = vld [vmem:[%s0 + $0x300] sm:$0xff]
  %v127 = vld [vmem:[%s0 + $0x308] sm:$0xff]
  %v128 = vld [vmem:[%s0 + $0x310] sm:$0xff]
  %v129 = vld [vmem:[%s0 + $0x318] sm:$0xff]
  %v130 = vld [vmem:[%s0 + $0x320] sm:$0xff]
  %v131 = vld [vmem:[%s0 + $0x328] sm:$0xff]
  %v132 = vld [vmem:[%s0 + $0x330] sm:$0xff]
  %v133 = vld [vmem:[%s0 + $0x338] sm:$0xff]
  %v134 = vld [vmem:[%s0 + $0x340] sm:$0xff]
  %v135 = vld [vmem:[%s0 + $0x348] sm:$0xff]
  %v136 = vld [vmem:[%s0 + $0x350] sm:$0xff]
  %v137 = vld [vmem:[%s0 + $0x358] sm:$0xff]
  %v138 = vld [vmem:[%s0 + $0x360] sm:$0xff]
  %v139 = vld [vmem:[%s0 + $0x368] sm:$0xff]
  %v140 = vld [vmem:[%s0 + $0x370] sm:$0xff]
  %v141 = vld [vmem:[%s0 + $0x378] sm:$0xff]
  %v142 = vld [vmem:[%s0 + $0x380] sm:$0xff]
  %v143 = vld [vmem:[%s0 + $0x388] sm:$0xff]
  %v144 = vld [vmem:[%s0 + $0x390] sm:$0xff]
  %v145 = vld [vmem:[%s0 + $0x398] sm:$0xff]
  %v146 = vld [vmem:[%s0 + $0x3a0] sm:$0xff]
  %v147 = vld [vmem:[%s0 + $0x3a8] sm:$0xff]
  %v148 = vld [vmem:[%s0 + $0x3b0] sm:$0xff]
  %v149 = vld [vmem:[%s0 + $0x3b8] sm:$0xff]
  %v150 = vld [vmem:[%s0 + $0x3c0] sm:$0xff]
  %v151 = vld [vmem:[%s0 + $0x3c8] sm:$0xff]
  %v152 = vld [vmem:[%s0 + $0x3d0] sm:$0xff]
  %v153 = vld [vmem:[%s0 + $0x3d8] sm:$0xff]
  %v154 = vld [vmem:[%s0 + $0x3e0] sm:$0xff]
  %v155 = vld [vmem:[%s0 + $0x3e8] sm:$0xff]
  %v156 = vld [vmem:[%s0 + $0x3f0] sm:$0xff]
  %v157 = vld [vmem:[%s0 + $0x3f8] sm:$0xff]
  %v158 = vld [vmem:[%s0 + $0x400] sm:$0xff]
  %v159 = vld [vmem:[%s0 + $0x408] sm:$0xff]
  %v160 = vld [vmem:[%s0 + $0x410] sm:$0xff]
  %v161 = vld [vmem:[%s0 + $0x418] sm:$0xff]
  %v162 = vld [vmem:[%s0 + $0x420] sm:$0xff]
  %v163 = vld [vmem:[%s0 + $0x428] sm:$0xff]
  %v164 = vld [vmem:[%s0 + $0x430] sm:$0xff]
  %v165 = vld [vmem:[%s0 + $0x438] sm:$0xff]
  %v166 = vld [vmem:[%s0 + $0x440] sm:$0xff]
  %v167 = vld [vmem:[%s0 + $0x448] sm:$0xff]
  %v168 = vld [vmem:[%s0 + $0x450] sm:$0xff]
  %v169 = vld [vmem:[%s0 + $0x458] sm:$0xff]
  %v170 = vld [vmem:[%s0 + $0x460] sm:$0xff]
  %v171 = vld [vmem:[%s0 + $0x468] sm:$0xff]
  %v172 = vld [vmem:[%s0 + $0x470] sm:$0xff]
  %v173 = vld [vmem:[%s0 + $0x478] sm:$0xff]
  %v174 = vld [vmem:[%s0 + $0x480] sm:$0xff]
  %v175 = vld [vmem:[%s0 + $0x488] sm:$0xff]
  %v176 = vld [vmem:[%s0 + $0x490] sm:$0xff]
  %v177 = vld [vmem:[%s0 + $0x498] sm:$0xff]
  %v178 = vld [vmem:[%s0 + $0x4a0] sm:$0xff]
  %v179 = vld [vmem:[%s0 + $0x4a8] sm:$0xff]
  %v180 = vld [vmem:[%s0 + $0x4b0] sm:$0xff]
  %v181 = vld [vmem:[%s0 + $0x4b8] sm:$0xff]
  %v182 = vld [vmem:[%s0 + $0x4c0] sm:$0xff]
  %v183 = vld [vmem:[%s0 + $0x4c8] sm:$0xff]
  %v184 = vld [vmem:[%s0 + $0x4d0] sm:$0xff]
  %v185 = vld [vmem:[%s0 + $0x4d8] sm:$0xff]
  %v186 = vld [vmem:[%s0 + $0x4e0] sm:$0xff]
  %v187 = vld [vmem:[%s0 + $0x4e8] sm:$0xff]
  %v188 = vld [vmem:[%s0 + $0x4f0] sm:$0xff]
  %v189 = vld [vmem:[%s0 + $0x4f8] sm:$0xff]
  %v190 = vld [vmem:[%s0 + $0x500] sm:$0xff]
  %v191 = vld [vmem:[%s0 + $0x508] sm:$0xff]
  %v192 = vld [vmem:[%s0 + $0x510] sm:$0xff]
  %v193 = vld [vmem:[%s0 + $0x518] sm:$0xff]
  %v194 = vld [vmem:[%s0 + $0x520] sm:$0xff]
  %v195 = vld [vmem:[%s0 + $0x528] sm:$0xff]
  %v196 = vld [vmem:[%s0 + $0x530] sm:$0xff]
  %v197 = vld [vmem:[%s0 + $0x538] sm:$0xff]
  %v198 = vld [vmem:[%s0 + $0x540] sm:$0xff]
  %v199 = vld [vmem:[%s0 + $0x548] sm:$0xff]
  %v200 = vld [vmem:[%s0 + $0x550] sm:$0xff]
  %v201 = vld [vmem:[%s0 + $0x558] sm:$0xff]
  %v202 = vld [vmem:[%s0 + $0x560] sm:$0xff]
  %v203 = vld [vmem:[%s0 + $0x568] sm:$0xff]
  %v204 = vld [vmem:[%s0 + $0x570] sm:$0xff]
  %v205 = vld [vmem:[%s0 + $0x578] sm:$0xff]
  %v206 = vld [vmem:[%s0 + $0x580] sm:$0xff]
  %v207 = vld [vmem:[%s0 + $0x588] sm:$0xff]
  %v208 = vld [vmem:[%s0 + $0x590] sm:$0xff]
  %v209 = vld [vmem:[%s0 + $0x598] sm:$0xff]
  %v210 = vld [vmem:[%s0 + $0x5a0] sm:$0xff]
  %v211 = vld [vmem:[%s0 + $0x5a8] sm:$0xff]
  %v212 = vld [vmem:[%s0 + $0x5b0] sm:$0xff]
  %v213 = vld [vmem:[%s0 + $0x5b8] sm:$0xff]
  %v214 = vld [vmem:[%s0 + $0x5c0] sm:$0xff]
  %v215 = vld [vmem:[%s0 + $0x5c8] sm:$0xff]
  %v216 = vld [vmem:[%s0 + $0x5d0] sm:$0xff]
  %v217 = vld [vmem:[%s0 + $0x5d8] sm:$0xff]
  %v218 = vld [vmem:[%s0 + $0x5e0] sm:$0xff]
  %v219 = vld [vmem:[%s0 + $0x5e8] sm:$0xff]
  %v220 = vld [vmem:[%s0 + $0x5f0] sm:$0xff]
  %v221 = vld [vmem:[%s0 + $0x5f8] sm:$0xff]
  %v222 = vld [vmem:[%s0 + $0x600] sm:$0xff]
  %v223 = vld [vmem:[%s0 + $0x608] sm:$0xff]
  %v224 = vld [vmem:[%s0 + $0x610] sm:$0xff]
  %v225 = vld [vmem:[%s0 + $0x618] sm:$0xff]
  %v226 = vld [vmem:[%s0 + $0x620] sm:$0xff]
  %v227 = vld [vmem:[%s0 + $0x628] sm:$0xff]
  %v228 = vld [vmem:[%s0 + $0x630] sm:$0xff]
  %v229 = vld [vmem:[%s0 + $0x638] sm:$0xff]
  %v230 = vld [vmem:[%s0 + $0x640] sm:$0xff]
  %v231 = vld [vmem:[%s0 + $0x648] sm:$0xff]
  %v232 = vld [vmem:[%s0 + $0x650] sm:$0xff]
  %v233 = vld [vmem:[%s0 + $0x658] sm:$0xff]
  %v234 = vld [vmem:[%s0 + $0x660] sm:$0xff]
  %v235 = vld [vmem:[%s0 + $0x668] sm:$0xff]
  %v236 = vld [vmem:[%s0 + $0x670] sm:$0xff]
  %v237 = vld [vmem:[%s0 + $0x678] sm:$0xff]
  %v238 = vld [vmem:[%s0 + $0x680] sm:$0xff]
  %v239 = vld [vmem:[%s0 + $0x688] sm:$0xff]
  %v240 = vld [vmem:[%s0 + $0x690] sm:$0xff]
  %v241 = vld [vmem:[%s0 + $0x698] sm:$0xff]
  %v242 = vld [vmem:[%s0 + $0x6a0] sm:$0xff]
  %v243 = vld [vmem:[%s0 + $0x6a8] sm:$0xff]
  %v244 = vld [vmem:[%s0 + $0x6b0] sm:$0xff]
  %v245 = vld [vmem:[%s0 + $0x6b8] sm:$0xff]
  %v246 = vld [vmem:[%s0 + $0x6c0] sm:$0xff]
  %v247 = vld [vmem:[%s0 + $0x6c8] sm:$0xff]
  %v248 = vld [vmem:[%s0 + $0x6d0] sm:$0xff]
  %v249 = vld [vmem:[%s0 + $0x6d8] sm:$0xff]
  %v250 = vld [vmem:[%s0 + $0x6e0] sm:$0xff]
  %v251 = vld [vmem:[%s0 + $0x6e8] sm:$0xff]
  %v252 = vld [vmem:[%s0 + $0x6f0] sm:$0xff]
  %v253 = vld [vmem:[%s0 + $0x6f8] sm:$0xff]
  %v254 = vld [vmem:[%s0 + $0x700] sm:$0xff]
  %v255 = vld [vmem:[%s0 + $0x708] sm:$0xff]
  %v256 = vld [vmem:[%s0 + $0x710] sm:$0xff]
  %v257 = vld [vmem:[%s0 + $0x718] sm:$0xff]
  %v258 = vld [vmem:[%s0 + $0x720] sm:$0xff]
  %v259 = vld [vmem:[%s0 + $0x728] sm:$0xff]
  %v260 = vld [vmem:[%s0 + $0x730] sm:$0xff]
  %v261 = vld [vmem:[%s0 + $0x738] sm:$0xff]
  %v262 = vld [vmem:[%s0 + $0x740] sm:$0xff]
  %v263 = vld [vmem:[%s0 + $0x748] sm:$0xff]
  %v264 = vld [vmem:[%s0 + $0x750] sm:$0xff]
  %v265 = vld [vmem:[%s0 + $0x758] sm:$0xff]
  %v266 = vld [vmem:[%s0 + $0x760] sm:$0xff]
  %v267 = vld [vmem:[%s0 + $0x768] sm:$0xff]
  %v268 = vld [vmem:[%s0 + $0x770] sm:$0xff]
  %v269 = vld [vmem:[%s0 + $0x778] sm:$0xff]
  %v270 = vld [vmem:[%s0 + $0x780] sm:$0xff]
  %v271 = vld [vmem:[%s0 + $0x788] sm:$0xff]
  %v272 = vld [vmem:[%s0 + $0x790] sm:$0xff]
  %v273 = vld [vmem:[%s0 + $0x798] sm:$0xff]
  %v274 = vld [vmem:[%s0 + $0x7a0] sm:$0xff]
  %v275 = vld [vmem:[%s0 + $0x7a8] sm:$0xff]
  %v276 = vld [vmem:[%s0 + $0x7b0] sm:$0xff]
  %v277 = vld [vmem:[%s0 + $0x7b8] sm:$0xff]
  %v278 = vld [vmem:[%s0 + $0x7c0] sm:$0xff]
  %v279 = vld [vmem:[%s0 + $0x7c8] sm:$0xff]
  %v280 = vld [vmem:[%s0 + $0x7d0] sm:$0xff]
  %v281 = vld [vmem:[%s0 + $0x7d8] sm:$0xff]
  %v282 = vld [vmem:[%s0 + $0x7e0] sm:$0xff]
  %v283 = vld [vmem:[%s0 + $0x7e8] sm:$0xff]
  %v284 = vld [vmem:[%s0 + $0x7f0] sm:$0xff]
  %v285 = vld [vmem:[%s0 + $0x7f8] sm:$0xff]
  %v286 = vld [vmem:[%s0 + $0x800] sm:$0xff]
  %v287 = vld [vmem:[%s0 + $0x808] sm:$0xff]
  %v288 = vld [vmem:[%s0 + $0x810] sm:$0xff]
  %v289 = vld [vmem:[%s0 + $0x818] sm:$0xff]
  %v290 = vld [vmem:[%s0 + $0x820] sm:$0xff]
  %v291 = vld [vmem:[%s0 + $0x828] sm:$0xff]
  %v292 = vld [vmem:[%s0 + $0x830] sm:$0xff]
  %v293 = vld [vmem:[%s0 + $0x838] sm:$0xff]
  %v294 = vld [vmem:[%s0 + $0x840] sm:$0xff]
  %v295 = vld [vmem:[%s0 + $0x848] sm:$0xff]
  %v296 = vld [vmem:[%s0 + $0x850] sm:$0xff]
  %v297 = vld [vmem:[%s0 + $0x858] sm:$0xff]
  %v298 = vld [vmem:[%s0 + $0x860] sm:$0xff]
  %v299 = vld [vmem:[%s0 + $0x868] sm:$0xff]
  %v300 = vld [vmem:[%s0 + $0x870] sm:$0xff]
  %v301 = vld [vmem:[%s0 + $0x878] sm:$0xff]
  %v302 = vld [vmem:[%s0 + $0x880] sm:$0xff]
  %v303 = vld [vmem:[%s0 + $0x888] sm:$0xff]
  %v304 = vld [vmem:[%s0 + $0x890] sm:$0xff]
  %v305 = vld [vmem:[%s0 + $0x898] sm:$0xff]
  %v306 = vld [vmem:[%s0 + $0x8a0] sm:$0xff]
  %v307 = vld [vmem:[%s0 + $0x8a8] sm:$0xff]
  %v308 = vld [vmem:[%s0 + $0x8b0] sm:$0xff]
  %v309 = vld [vmem:[%s0 + $0x8b8] sm:$0xff]
  %v310 = vld [vmem:[%s0 + $0x8c0] sm:$0xff]
  %v311 = vld [vmem:[%s0 + $0x8c8] sm:$0xff]
  %v312 = vld [vmem:[%s0 + $0x8d0] sm:$0xff]
  %v313 = vld [vmem:[%s0 + $0x8d8] sm:$0xff]
  %v314 = vld [vmem:[%s0 + $0x8e0] sm:$0xff]
  %v315 = vld [vmem:[%s0 + $0x8e8] sm:$0xff]
  %v316 = vld [vmem:[%s0 + $0x8f0] sm:$0xff]
  %v317 = vld [vmem:[%s0 + $0x8f8] sm:$0xff]
  %v318 = vld [vmem:[%s0 + $0x900] sm:$0xff]
  %v319 = vld [vmem:[%s0 + $0x908] sm:$0xff]
  %v320 = vld [vmem:[%s0 + $0x910] sm:$0xff]
  %v321 = vld [vmem:[%s0 + $0x918] sm:$0xff]
  %v322 = vld [vmem:[%s0 + $0x920] sm:$0xff]
  %v323 = vld [vmem:[%s0 + $0x928] sm:$0xff]
  %v324 = vld [vmem:[%s0 + $0x930] sm:$0xff]
  %v325 = vld [vmem:[%s0 + $0x938] sm:$0xff]
  %v326 = vld [vmem:[%s0 + $0x940] sm:$0xff]
  %v327 = vld [vmem:[%s0 + $0x948] sm:$0xff]
  %v328 = vld [vmem:[%s0 + $0x950] sm:$0xff]
  %v329 = vld [vmem:[%s0 + $0x958] sm:$0xff]
  %v330 = vld [vmem:[%s0 + $0x960] sm:$0xff]
  %v331 = vld [vmem:[%s0 + $0x968] sm:$0xff]
  %v332 = vld [vmem:[%s0 + $0x970] sm:$0xff]
  %v333 = vld [vmem:[%s0 + $0x978] sm:$0xff]
  %v334 = vld [vmem:[%s0 + $0x980] sm:$0xff]
  %v335 = vld [vmem:[%s0 + $0x988] sm:$0xff]
  %v336 = vld [vmem:[%s0 + $0x990] sm:$0xff]
  %v337 = vld [vmem:[%s0 + $0x998] sm:$0xff]
  %v338 = vld [vmem:[%s0 + $0x9a0] sm:$0xff]
  %v339 = vld [vmem:[%s0 + $0x9a8] sm:$0xff]
  %v340 = vld [vmem:[%s0 + $0x9b0] sm:$0xff]
  %v341 = vld [vmem:[%s0 + $0x9b8] sm:$0xff]
  %v342 = vld [vmem:[%s0 + $0x9c0] sm:$0xff]
  %v343 = vld [vmem:[%s0 + $0x9c8] sm:$0xff]
  %v344 = vld [vmem:[%s0 + $0x9d0] sm:$0xff]
  %v345 = vld [vmem:[%s0 + $0x9d8] sm:$0xff]
  %v346 = vld [vmem:[%s0 + $0x9e0] sm:$0xff]
  %v347 = vld [vmem:[%s0 + $0x9e8] sm:$0xff]
  %v348 = vld [vmem:[%s0 + $0x9f0] sm:$0xff]
  %v349 = vld [vmem:[%s0 + $0x9f8] sm:$0xff]
  %v350 = vld [vmem:[%s0 + $0xa00] sm:$0xff]
  %v351 = vld [vmem:[%s0 + $0xa08] sm:$0xff]
  %v352 = vld [vmem:[%s0 + $0xa10] sm:$0xff]
  %v353 = vld [vmem:[%s0 + $0xa18] sm:$0xff]
  %v354 = vld [vmem:[%s0 + $0xa20] sm:$0xff]
  %v355 = vld [vmem:[%s0 + $0xa28] sm:$0xff]
  %v356 = vld [vmem:[%s0 + $0xa30] sm:$0xff]
  %v357 = vld [vmem:[%s0 + $0xa38] sm:$0xff]
  %v358 = vld [vmem:[%s0 + $0xa40] sm:$0xff]
  %v359 = vld [vmem:[%s0 + $0xa48] sm:$0xff]
  %v360 = vld [vmem:[%s0 + $0xa50] sm:$0xff]
  %v361 = vld [vmem:[%s0 + $0xa58] sm:$0xff]
  %v362 = vld [vmem:[%s0 + $0xa60] sm:$0xff]
  %v363 = vld [vmem:[%s0 + $0xa68] sm:$0xff]
  %v364 = vld [vmem:[%s0 + $0xa70] sm:$0xff]
  %v365 = vld [vmem:[%s0 + $0xa78] sm:$0xff]
  %v366 = vld [vmem:[%s0 + $0xa80] sm:$0xff]
  %v367 = vld [vmem:[%s0 + $0xa88] sm:$0xff]
  %v368 = vld [vmem:[%s0 + $0xa90] sm:$0xff]
  %v369 = vld [vmem:[%s0 + $0xa98] sm:$0xff]
  %v370 = vld [vmem:[%s0 + $0xaa0] sm:$0xff]
  %v371 = vld [vmem:[%s0 + $0xaa8] sm:$0xff]
  %v372 = vld [vmem:[%s0 + $0xab0] sm:$0xff]
  %v373 = vld [vmem:[%s0 + $0xab8] sm:$0xff]
  %v374 = vld [vmem:[%s0 + $0xac0] sm:$0xff]
  %v375 = vld [vmem:[%s0 + $0xac8] sm:$0xff]
  %v376 = vld [vmem:[%s0 + $0xad0] sm:$0xff]
  %v377 = vld [vmem:[%s0 + $0xad8] sm:$0xff]
  %v378 = vld [vmem:[%s0 + $0xae0] sm:$0xff]
  %v379 = vld [vmem:[%s0 + $0xae8] sm:$0xff]
  %v380 = vld [vmem:[%s0 + $0xaf0] sm:$0xff]
  %v381 = vld [vmem:[%s0 + $0xaf8] sm:$0xff]
  %v382 = vld [vmem:[%s0 + $0xb00] sm:$0xff]
  %v383 = vld [vmem:[%s0 + $0xb08] sm:$0xff]
  %v384 = vld [vmem:[%s0 + $0xb10] sm:$0xff]
  %v385 = vld [vmem:[%s0 + $0xb18] sm:$0xff]
  %v386 = vld [vmem:[%s0 + $0xb20] sm:$0xff]
  %v387 = vld [vmem:[%s0 + $0xb28] sm:$0xff]
  %v388 = vld [vmem:[%s0 + $0xb30] sm:$0xff]
  %v389 = vld [vmem:[%s0 + $0xb38] sm:$0xff]
  %v390 = vld [vmem:[%s0 + $0xb40] sm:$0xff]
  %v391 = vld [vmem:[%s0 + $0xb48] sm:$0xff]
  %v392 = vld [vmem:[%s0 + $0xb50] sm:$0xff]
  %v393 = vld [vmem:[%s0 + $0xb58] sm:$0xff]
  %v394 = vld [vmem:[%s0 + $0xb60] sm:$0xff]
  %v395 = vld [vmem:[%s0 + $0xb68] sm:$0xff]
  %v396 = vld [vmem:[%s0 + $0xb70] sm:$0xff]
  %v397 = vld [vmem:[%s0 + $0xb78] sm:$0xff]
  %v398 = vld [vmem:[%s0 + $0xb80] sm:$0xff]
  %v399 = vld [vmem:[%s0 + $0xb88] sm:$0xff]
  %v400 = vld [vmem:[%s0 + $0xb90] sm:$0xff]
  %v401 = vld [vmem:[%s0 + $0xb98] sm:$0xff]
  %v402 = vld [vmem:[%s0 + $0xba0] sm:$0xff]
  %v403 = vld [vmem:[%s0 + $0xba8] sm:$0xff]
  %v404 = vld [vmem:[%s0 + $0xbb0] sm:$0xff]
  %v405 = vld [vmem:[%s0 + $0xbb8] sm:$0xff]
  %v406 = vld [vmem:[%s0 + $0xbc0] sm:$0xff]
  %v407 = vld [vmem:[%s0 + $0xbc8] sm:$0xff]
  %v408 = vld [vmem:[%s0 + $0xbd0] sm:$0xff]
  %v409 = vld [vmem:[%s0 + $0xbd8] sm:$0xff]
  %v410 = vld [vmem:[%s0 + $0xbe0] sm:$0xff]
  %v411 = vld [vmem:[%s0 + $0xbe8] sm:$0xff]
  %v412 = vld [vmem:[%s0 + $0xbf0] sm:$0xff]
  %v413 = vld [vmem:[%s0 + $0xbf8] sm:$0xff]
  %v414 = vld [vmem:[%s0 + $0xc00] sm:$0xff]
  %v415 = vld [vmem:[%s0 + $0xc08] sm:$0xff]
  %v416 = vld [vmem:[%s0 + $0xc10] sm:$0xff]
  %v417 = vld [vmem:[%s0 + $0xc18] sm:$0xff]
  %v418 = vld [vmem:[%s0 + $0xc20] sm:$0xff]
  %v419 = vld [vmem:[%s0 + $0xc28] sm:$0xff]
  %v420 = vld [vmem:[%s0 + $0xc30] sm:$0xff]
  %v421 = vld [vmem:[%s0 + $0xc38] sm:$0xff]
  %v422 = vld [vmem:[%s0 + $0xc40] sm:$0xff]
  %v423 = vld [vmem:[%s0 + $0xc48] sm:$0xff]
  %v424 = vld [vmem:[%s0 + $0xc50] sm:$0xff]
  %v425 = vld [vmem:[%s0 + $0xc58] sm:$0xff]
  %v426 = vld [vmem:[%s0 + $0xc60] sm:$0xff]
  %v427 = vld [vmem:[%s0 + $0xc68] sm:$0xff]
  %v428 = vld [vmem:[%s0 + $0xc70] sm:$0xff]
  %v429 = vld [vmem:[%s0 + $0xc78] sm:$0xff]
  %v430 = vld [vmem:[%s0 + $0xc80] sm:$0xff]
  %v431 = vld [vmem:[%s0 + $0xc88] sm:$0xff]
  %v432 = vld [vmem:[%s0 + $0xc90] sm:$0xff]
  %v433 = vld [vmem:[%s0 + $0xc98] sm:$0xff]
  %v434 = vld [vmem:[%s0 + $0xca0] sm:$0xff]
  %v435 = vld [vmem:[%s0 + $0xca8] sm:$0xff]
  %v436 = vld [vmem:[%s0 + $0xcb0] sm:$0xff]
  %v437 = vld [vmem:[%s0 + $0xcb8] sm:$0xff]
  %v438 = vld [vmem:[%s0 + $0xcc0] sm:$0xff]
  %v439 = vld [vmem:[%s0 + $0xcc8] sm:$0xff]
  %v440 = vld [vmem:[%s0 + $0xcd0] sm:$0xff]
  %v441 = vld [vmem:[%s0 + $0xcd8] sm:$0xff]
  %v442 = vld [vmem:[%s0 + $0xce0] sm:$0xff]
  %v443 = vld [vmem:[%s0 + $0xce8] sm:$0xff]
  %v444 = vld [vmem:[%s0 + $0xcf0] sm:$0xff]
  %v445 = vld [vmem:[%s0 + $0xcf8] sm:$0xff]
  %v446 = vld [vmem:[%s0 + $0xd00] sm:$0xff]
  %v447 = vld [vmem:[%s0 + $0xd08] sm:$0xff]
  %v448 = vld [vmem:[%s0 + $0xd10] sm:$0xff]
  %v449 = vld [vmem:[%s0 + $0xd18] sm:$0xff]
  %v450 = vld [vmem:[%s0 + $0xd20] sm:$0xff]
  %v451 = vld [vmem:[%s0 + $0xd28] sm:$0xff]
  %v452 = vld [vmem:[%s0 + $0xd30] sm:$0xff]
  %v453 = vld [vmem:[%s0 + $0xd38] sm:$0xff]
  %v454 = vld [vmem:[%s0 + $0xd40] sm:$0xff]
  %v455 = vld [vmem:[%s0 + $0xd48] sm:$0xff]
  %v456 = vld [vmem:[%s0 + $0xd50] sm:$0xff]
  %v457 = vld [vmem:[%s0 + $0xd58] sm:$0xff]
  %v458 = vld [vmem:[%s0 + $0xd60] sm:$0xff]
  %v459 = vld [vmem:[%s0 + $0xd68] sm:$0xff]
  %v460 = vld [vmem:[%s0 + $0xd70] sm:$0xff]
  %v461 = vld [vmem:[%s0 + $0xd78] sm:$0xff]
  %v462 = vld [vmem:[%s0 + $0xd80] sm:$0xff]
  %v463 = vld [vmem:[%s0 + $0xd88] sm:$0xff]
  %v464 = vld [vmem:[%s0 + $0xd90] sm:$0xff]
  %v465 = vld [vmem:[%s0 + $0xd98] sm:$0xff]
  %v466 = vld [vmem:[%s0 + $0xda0] sm:$0xff]
  %v467 = vld [vmem:[%s0 + $0xda8] sm:$0xff]
  %v468 = vld [vmem:[%s0 + $0xdb0] sm:$0xff]
  %v469 = vld [vmem:[%s0 + $0xdb8] sm:$0xff]
  %v470 = vld [vmem:[%s0 + $0xdc0] sm:$0xff]
  %v471 = vld [vmem:[%s0 + $0xdc8] sm:$0xff]
  %v472 = vld [vmem:[%s0 + $0xdd0] sm:$0xff]
  %v473 = vld [vmem:[%s0 + $0xdd8] sm:$0xff]
  %v474 = vld [vmem:[%s0 + $0xde0] sm:$0xff]
  %v475 = vld [vmem:[%s0 + $0xde8] sm:$0xff]
  %v476 = vld [vmem:[%s0 + $0xdf0] sm:$0xff]
  %v477 = vld [vmem:[%s0 + $0xdf8] sm:$0xff]
  %v478 = vld [vmem:[%s0 + $0xe00] sm:$0xff]
  %v479 = vld [vmem:[%s0 + $0xe08] sm:$0xff]
  %v480 = vld [vmem:[%s0 + $0xe10] sm:$0xff]
  %v481 = vld [vmem:[%s0 + $0xe18] sm:$0xff]
  %v482 = vld [vmem:[%s0 + $0xe20] sm:$0xff]
  %v483 = vld [vmem:[%s0 + $0xe28] sm:$0xff]
  %v484 = vld [vmem:[%s0 + $0xe30] sm:$0xff]
  %v485 = vld [vmem:[%s0 + $0xe38] sm:$0xff]
  %v486 = vld [vmem:[%s0 + $0xe40] sm:$0xff]
  %v487 = vld [vmem:[%s0 + $0xe48] sm:$0xff]
  %v488 = vld [vmem:[%s0 + $0xe50] sm:$0xff]
  %v489 = vld [vmem:[%s0 + $0xe58] sm:$0xff]
  %v490 = vld [vmem:[%s0 + $0xe60] sm:$0xff]
  %v491 = vld [vmem:[%s0 + $0xe68] sm:$0xff]
  %v492 = vld [vmem:[%s0 + $0xe70] sm:$0xff]
  %v493 = vld [vmem:[%s0 + $0xe78] sm:$0xff]
  %v494 = vld [vmem:[%s0 + $0xe80] sm:$0xff]
  %v495 = vld [vmem:[%s0 + $0xe88] sm:$0xff]
  %v496 = vld [vmem:[%s0 + $0xe90] sm:$0xff]
  %v497 = vld [vmem:[%s0 + $0xe98] sm:$0xff]
  %v498 = vld [vmem:[%s0 + $0xea0] sm:$0xff]
  %v499 = vld [vmem:[%s0 + $0xea8] sm:$0xff]
  %v500 = vld [vmem:[%s0 + $0xeb0] sm:$0xff]
  %v501 = vld [vmem:[%s0 + $0xeb8] sm:$0xff]
  %v502 = vld [vmem:[%s0 + $0xec0] sm:$0xff]
  %v503 = vld [vmem:[%s0 + $0xec8] sm:$0xff]
  %v504 = vld [vmem:[%s0 + $0xed0] sm:$0xff]
  %v505 = vld [vmem:[%s0 + $0xed8] sm:$0xff]
  %v506 = vld [vmem:[%s0 + $0xee0] sm:$0xff]
  %v507 = vld [vmem:[%s0 + $0xee8] sm:$0xff]
  %v508 = vld [vmem:[%s0 + $0xef0] sm:$0xff]
  %v509 = vld [vmem:[%s0 + $0xef8] sm:$0xff]
  %v510 = vld [vmem:[%s0 + $0xf00] sm:$0xff]
  %v511 = vld [vmem:[%s0 + $0xf08] sm:$0xff]
  %v512 = vld [vmem:[%s0 + $0xf10] sm:$0xff]
  %v513 = vld [vmem:[%s0 + $0xf18] sm:$0xff]
  %v514 = vld [vmem:[%s0 + $0xf20] sm:$0xff]
  %v515 = vld [vmem:[%s0 + $0xf28] sm:$0xff]
  %v516 = vld [vmem:[%s0 + $0xf30] sm:$0xff]
  %v517 = vld [vmem:[%s0 + $0xf38] sm:$0xff]
  %v518 = vld [vmem:[%s0 + $0xf40] sm:$0xff]
  %v519 = vld [vmem:[%s0 + $0xf48] sm:$0xff]
  %v520 = vld [vmem:[%s0 + $0xf50] sm:$0xff]
  %v521 = vld [vmem:[%s0 + $0xf58] sm:$0xff]
  %v522 = vld [vmem:[%s0 + $0xf60] sm:$0xff]
  %v523 = vld [vmem:[%s0 + $0xf68] sm:$0xff]
  %v524 = vld [vmem:[%s0 + $0xf70] sm:$0xff]
  %v525 = vld [vmem:[%s0 + $0xf78] sm:$0xff]
  %v526 = vld [vmem:[%s0 + $0xf80] sm:$0xff]
  %v527 = vld [vmem:[%s0 + $0xf88] sm:$0xff]
  %v528 = vld [vmem:[%s0 + $0xf90] sm:$0xff]
  %v529 = vld [vmem:[%s0 + $0xf98] sm:$0xff]
  %v530 = vld [vmem:[%s0 + $0xfa0] sm:$0xff]
  %v531 = vld [vmem:[%s0 + $0xfa8] sm:$0xff]
  %v532 = vld [vmem:[%s0 + $0xfb0] sm:$0xff]
  %v533 = vld [vmem:[%s0 + $0xfb8] sm:$0xff]
  %v534 = vld [vmem:[%s0 + $0xfc0] sm:$0xff]
  %v535 = vld [vmem:[%s0 + $0xfc8] sm:$0xff]
  %v536 = vld [vmem:[%s0 + $0xfd0] sm:$0xff]
  %v537 = vld [vmem:[%s0 + $0xfd8] sm:$0xff]
  %v538 = vld [vmem:[%s0 + $0xfe0] sm:$0xff]
  %v539 = vld [vmem:[%s0 + $0xfe8] sm:$0xff]
  %v540 = vld [vmem:[%s0 + $0xff0] sm:$0xff]
  %v541 = vld [vmem:[%s0 + $0xff8] sm:$0xff]
  %v542 = vld [vmem:[%s0 + $0x1000] sm:$0xff]
  %v543 = vld [vmem:[%s0 + $0x1008] sm:$0xff]
  %v544 = vld [vmem:[%s0 + $0x1010] sm:$0xff]
  %v545 = vld [vmem:[%s0 + $0x1018] sm:$0xff]
  %v546 = vld [vmem:[%s0 + $0x1020] sm:$0xff]
  %v547 = vld [vmem:[%s0 + $0x1028] sm:$0xff]
  %v548 = vld [vmem:[%s0 + $0x1030] sm:$0xff]
  %v549 = vld [vmem:[%s0 + $0x1038] sm:$0xff]
  %v550 = vld [vmem:[%s0 + $0x1040] sm:$0xff]
  %v551 = vld [vmem:[%s0 + $0x1048] sm:$0xff]
  %v552 = vld [vmem:[%s0 + $0x1050] sm:$0xff]
  %v553 = vld [vmem:[%s0 + $0x1058] sm:$0xff]
  %v554 = vld [vmem:[%s0 + $0x1060] sm:$0xff]
  %v555 = vld [vmem:[%s0 + $0x1068] sm:$0xff]
  %v556 = vld [vmem:[%s0 + $0x1070] sm:$0xff]
  %v557 = vld [vmem:[%s0 + $0x1078] sm:$0xff]
  %v558 = vld [vmem:[%s0 + $0x1080] sm:$0xff]
  %v559 = vld [vmem:[%s0 + $0x1088] sm:$0xff]
  %v560 = vld [vmem:[%s0 + $0x1090] sm:$0xff]
  %v561 = vld [vmem:[%s0 + $0x1098] sm:$0xff]
  %v562 = vld [vmem:[%s0 + $0x10a0] sm:$0xff]
  %v563 = vld [vmem:[%s0 + $0x10a8] sm:$0xff]
  %v564 = vld [vmem:[%s0 + $0x10b0] sm:$0xff]
  %v565 = vld [vmem:[%s0 + $0x10b8] sm:$0xff]
  %v566 = vld [vmem:[%s0 + $0x10c0] sm:$0xff]
  %v567 = vld [vmem:[%s0 + $0x10c8] sm:$0xff]
  %v568 = vld [vmem:[%s0 + $0x10d0] sm:$0xff]
  %v569 = vld [vmem:[%s0 + $0x10d8] sm:$0xff]
  %v570 = vld [vmem:[%s0 + $0x10e0] sm:$0xff]
  %v571 = vld [vmem:[%s0 + $0x10e8] sm:$0xff]
  %v572 = vld [vmem:[%s0 + $0x10f0] sm:$0xff]
  %v573 = vld [vmem:[%s0 + $0x10f8] sm:$0xff]
  %v574 = vld [vmem:[%s0 + $0x1100] sm:$0xff]
  %v575 = vld [vmem:[%s0 + $0x1108] sm:$0xff]
  %v576 = vld [vmem:[%s0 + $0x1110] sm:$0xff]
  %v577 = vld [vmem:[%s0 + $0x1118] sm:$0xff]
  %v578 = vld [vmem:[%s0 + $0x1120] sm:$0xff]
  %v579 = vld [vmem:[%s0 + $0x1128] sm:$0xff]
  %v580 = vld [vmem:[%s0 + $0x1130] sm:$0xff]
  %v581 = vld [vmem:[%s0 + $0x1138] sm:$0xff]
  %v582 = vld [vmem:[%s0 + $0x1140] sm:$0xff]
  %v583 = vld [vmem:[%s0 + $0x1148] sm:$0xff]
  %v584 = vld [vmem:[%s0 + $0x1150] sm:$0xff]
  %v585 = vld [vmem:[%s0 + $0x1158] sm:$0xff]
  %v586 = vld [vmem:[%s0 + $0x1160] sm:$0xff]
  %v587 = vld [vmem:[%s0 + $0x1168] sm:$0xff]
  %v588 = vld [vmem:[%s0 + $0x1170] sm:$0xff]
  %v589 = vld [vmem:[%s0 + $0x1178] sm:$0xff]
  %v590 = vld [vmem:[%s0 + $0x1180] sm:$0xff]
  %v591 = vld [vmem:[%s0 + $0x1188] sm:$0xff]
  %v592 = vld [vmem:[%s0 + $0x1190] sm:$0xff]
  %v593 = vld [vmem:[%s0 + $0x1198] sm:$0xff]
  %v594 = vld [vmem:[%s0 + $0x11a0] sm:$0xff]
  %v595 = vld [vmem:[%s0 + $0x11a8] sm:$0xff]
  %v596 = vld [vmem:[%s0 + $0x11b0] sm:$0xff]
  %v597 = vld [vmem:[%s0 + $0x11b8] sm:$0xff]
  %v598 = vld [vmem:[%s0 + $0x11c0] sm:$0xff]
  %v599 = vld [vmem:[%s0 + $0x11c8] sm:$0xff]
  %v600 = vld [vmem:[%s0 + $0x11d0] sm:$0xff]
  %v601 = vld [vmem:[%s0 + $0x11d8] sm:$0xff]
  %v602 = vld [vmem:[%s0 + $0x11e0] sm:$0xff]
  %v603 = vld [vmem:[%s0 + $0x11e8] sm:$0xff]
  %v604 = vld [vmem:[%s0 + $0x11f0] sm:$0xff]
  %v605 = vld [vmem:[%s0 + $0x11f8] sm:$0xff]
  %v606 = vld [vmem:[%s0 + $0x1200] sm:$0xff]
  %v607 = vld [vmem:[%s0 + $0x1208] sm:$0xff]
  %v608 = vld [vmem:[%s0 + $0x1210] sm:$0xff]
  %v609 = vld [vmem:[%s0 + $0x1218] sm:$0xff]
  %v610 = vld [vmem:[%s0 + $0x1220] sm:$0xff]
  %v611 = vld [vmem:[%s0 + $0x1228] sm:$0xff]
  %v612 = vld [vmem:[%s0 + $0x1230] sm:$0xff]
  %v613 = vld [vmem:[%s0 + $0x1238] sm:$0xff]
  %v614 = vld [vmem:[%s0 + $0x1240] sm:$0xff]
  %v615 = vld [vmem:[%s0 + $0x1248] sm:$0xff]
  %v616 = vld [vmem:[%s0 + $0x1250] sm:$0xff]
  %v617 = vld [vmem:[%s0 + $0x1258] sm:$0xff]
  %v618 = vld [vmem:[%s0 + $0x1260] sm:$0xff]
  %v619 = vld [vmem:[%s0 + $0x1268] sm:$0xff]
  %v620 = vld [vmem:[%s0 + $0x1270] sm:$0xff]
  %v621 = vld [vmem:[%s0 + $0x1278] sm:$0xff]
  %v622 = vld [vmem:[%s0 + $0x1280] sm:$0xff]
  %v623 = vld [vmem:[%s0 + $0x1288] sm:$0xff]
  %v624 = vld [vmem:[%s0 + $0x1290] sm:$0xff]
  %v625 = vld [vmem:[%s0 + $0x1298] sm:$0xff]
  %v626 = vld [vmem:[%s0 + $0x12a0] sm:$0xff]
  %v627 = vld [vmem:[%s0 + $0x12a8] sm:$0xff]
  %v628 = vld [vmem:[%s0 + $0x12b0] sm:$0xff]
  %v629 = vld [vmem:[%s0 + $0x12b8] sm:$0xff]
  %v630 = vld [vmem:[%s0 + $0x12c0] sm:$0xff]
  %v631 = vld [vmem:[%s0 + $0x12c8] sm:$0xff]
  %v632 = vld [vmem:[%s0 + $0x12d0] sm:$0xff]
  %v633 = vld [vmem:[%s0 + $0x12d8] sm:$0xff]
  %v634 = vld [vmem:[%s0 + $0x12e0] sm:$0xff]
  %v635 = vld [vmem:[%s0 + $0x12e8] sm:$0xff]
  %v636 = vld [vmem:[%s0 + $0x12f0] sm:$0xff]
  %v637 = vld [vmem:[%s0 + $0x12f8] sm:$0xff]
  %v638 = vld [vmem:[%s0 + $0x1300] sm:$0xff]
  %v639 = vld [vmem:[%s0 + $0x1308] sm:$0xff]
  %v640 = vld [vmem:[%s0 + $0x1310] sm:$0xff]
  %v641 = vld [vmem:[%s0 + $0x1318] sm:$0xff]
  %v642 = vld [vmem:[%s0 + $0x1320] sm:$0xff]
  %v643 = vld [vmem:[%s0 + $0x1328] sm:$0xff]
  %v644 = vld [vmem:[%s0 + $0x1330] sm:$0xff]
  %v645 = vld [vmem:[%s0 + $0x1338] sm:$0xff]
  %v646 = vld [vmem:[%s0 + $0x1340] sm:$0xff]
  %v647 = vld [vmem:[%s0 + $0x1348] sm:$0xff]
  %v648 = vld [vmem:[%s0 + $0x1350] sm:$0xff]
  %v649 = vld [vmem:[%s0 + $0x1358] sm:$0xff]
  %v650 = vld [vmem:[%s0 + $0x1360] sm:$0xff]
  %v651 = vld [vmem:[%s0 + $0x1368] sm:$0xff]
  %v652 = vld [vmem:[%s0 + $0x1370] sm:$0xff]
  %v653 = vld [vmem:[%s0 + $0x1378] sm:$0xff]
  %v654 = vld [vmem:[%s0 + $0x1380] sm:$0xff]
  %v655 = vld [vmem:[%s0 + $0x1388] sm:$0xff]
  %v656 = vld [vmem:[%s0 + $0x1390] sm:$0xff]
  %v657 = vld [vmem:[%s0 + $0x1398] sm:$0xff]
  %v658 = vld [vmem:[%s0 + $0x13a0] sm:$0xff]
  %v659 = vld [vmem:[%s0 + $0x13a8] sm:$0xff]
  %v660 = vld [vmem:[%s0 + $0x13b0] sm:$0xff]
  %v661 = vld [vmem:[%s0 + $0x13b8] sm:$0xff]
  %v662 = vld [vmem:[%s0 + $0x13c0] sm:$0xff]
  %v663 = vld [vmem:[%s0 + $0x13c8] sm:$0xff]
  %v664 = vld [vmem:[%s0 + $0x13d0] sm:$0xff]
  %v665 = vld [vmem:[%s0 + $0x13d8] sm:$0xff]
  %v666 = vld [vmem:[%s0 + $0x13e0] sm:$0xff]
  %v667 = vld [vmem:[%s0 + $0x13e8] sm:$0xff]
  %v668 = vld [vmem:[%s0 + $0x13f0] sm:$0xff]
  %v669 = vld [vmem:[%s0 + $0x13f8] sm:$0xff]
  %v670 = vld [vmem:[%s0 + $0x1400] sm:$0xff]
  %v671 = vld [vmem:[%s0 + $0x1408] sm:$0xff]
  %v672 = vld [vmem:[%s0 + $0x1410] sm:$0xff]
  %v673 = vld [vmem:[%s0 + $0x1418] sm:$0xff]
  %v674 = vld [vmem:[%s0 + $0x1420] sm:$0xff]
  %v675 = vld [vmem:[%s0 + $0x1428] sm:$0xff]
  %v676 = vld [vmem:[%s0 + $0x1430] sm:$0xff]
  %v677 = vld [vmem:[%s0 + $0x1438] sm:$0xff]
  %v678 = vld [vmem:[%s0 + $0x1440] sm:$0xff]
  %v679 = vld [vmem:[%s0 + $0x1448] sm:$0xff]
  %v680 = vld [vmem:[%s0 + $0x1450] sm:$0xff]
  %v681 = vld [vmem:[%s0 + $0x1458] sm:$0xff]
  %v682 = vld [vmem:[%s0 + $0x1460] sm:$0xff]
  %v683 = vld [vmem:[%s0 + $0x1468] sm:$0xff]
  %v684 = vld [vmem:[%s0 + $0x1470] sm:$0xff]
  %v685 = vld [vmem:[%s0 + $0x1478] sm:$0xff]
  %v686 = vld [vmem:[%s0 + $0x1480] sm:$0xff]
  %v687 = vld [vmem:[%s0 + $0x1488] sm:$0xff]
  %v688 = vld [vmem:[%s0 + $0x1490] sm:$0xff]
  %v689 = vld [vmem:[%s0 + $0x1498] sm:$0xff]
  %v690 = vld [vmem:[%s0 + $0x14a0] sm:$0xff]
  %v691 = vld [vmem:[%s0 + $0x14a8] sm:$0xff]
  %v692 = vld [vmem:[%s0 + $0x14b0] sm:$0xff]
  %v693 = vld [vmem:[%s0 + $0x14b8] sm:$0xff]
  %v694 = vld [vmem:[%s0 + $0x14c0] sm:$0xff]
  %v695 = vld [vmem:[%s0 + $0x14c8] sm:$0xff]
  %v696 = vld [vmem:[%s0 + $0x14d0] sm:$0xff]
  %v697 = vld [vmem:[%s0 + $0x14d8] sm:$0xff]
  %v698 = vld [vmem:[%s0 + $0x14e0] sm:$0xff]
  %v699 = vld [vmem:[%s0 + $0x14e8] sm:$0xff]
  %v700 = vld [vmem:[%s0 + $0x14f0] sm:$0xff]
  %v701 = vld [vmem:[%s0 + $0x14f8] sm:$0xff]
  %v702 = vld [vmem:[%s0 + $0x1500] sm:$0xff]
  %v703 = vld [vmem:[%s0 + $0x1508] sm:$0xff]
  %v704 = vld [vmem:[%s0 + $0x1510] sm:$0xff]
  %v705 = vld [vmem:[%s0 + $0x1518] sm:$0xff]
  %v706 = vld [vmem:[%s0 + $0x1520] sm:$0xff]
  %v707 = vld [vmem:[%s0 + $0x1528] sm:$0xff]
  %v708 = vld [vmem:[%s0 + $0x1530] sm:$0xff]
  %v709 = vld [vmem:[%s0 + $0x1538] sm:$0xff]
  %v710 = vld [vmem:[%s0 + $0x1540] sm:$0xff]
  %v711 = vld [vmem:[%s0 + $0x1548] sm:$0xff]
  %v712 = vld [vmem:[%s0 + $0x1550] sm:$0xff]
  %v713 = vld [vmem:[%s0 + $0x1558] sm:$0xff]
  %v714 = vld [vmem:[%s0 + $0x1560] sm:$0xff]
  %v715 = vld [vmem:[%s0 + $0x1568] sm:$0xff]
  %v716 = vld [vmem:[%s0 + $0x1570] sm:$0xff]
  %v717 = vld [vmem:[%s0 + $0x1578] sm:$0xff]
  %v718 = vld [vmem:[%s0 + $0x1580] sm:$0xff]
  %v719 = vld [vmem:[%s0 + $0x1588] sm:$0xff]
  %v720 = vld [vmem:[%s0 + $0x1590] sm:$0xff]
  %v721 = vld [vmem:[%s0 + $0x1598] sm:$0xff]
  %v722 = vld [vmem:[%s0 + $0x15a0] sm:$0xff]
  %v723 = vld [vmem:[%s0 + $0x15a8] sm:$0xff]
  %v724 = vld [vmem:[%s0 + $0x15b0] sm:$0xff]
  %v725 = vld [vmem:[%s0 + $0x15b8] sm:$0xff]
  %v726 = vld [vmem:[%s0 + $0x15c0] sm:$0xff]
  %v727 = vld [vmem:[%s0 + $0x15c8] sm:$0xff]
  %v728 = vld [vmem:[%s0 + $0x15d0] sm:$0xff]
  %v729 = vld [vmem:[%s0 + $0x15d8] sm:$0xff]
  %v730 = vld [vmem:[%s0 + $0x15e0] sm:$0xff]
  %v731 = vld [vmem:[%s0 + $0x15e8] sm:$0xff]
  %v732 = vld [vmem:[%s0 + $0x15f0] sm:$0xff]
  %v733 = vld [vmem:[%s0 + $0x15f8] sm:$0xff]
  %v746 = vunpack.c.l.b16 %v18
  %v747 = vunpack.c.h.b16 %v18
  %v748 = vunpack.c.l.b16 %v19
  %v749 = vunpack.c.h.b16 %v19
  %v750 = vunpack.c.l.b16 %v20
  %v751 = vunpack.c.h.b16 %v20
  %v752 = vunpack.c.l.b16 %v21
  %v753 = vunpack.c.h.b16 %v21
  %v754 = vunpack.c.l.b16 %v22
  %v755 = vunpack.c.h.b16 %v22
  %v756 = vunpack.c.l.b16 %v23
  %v757 = vunpack.c.l.b16 %v24
  %v758 = vunpack.c.h.b16 %v24
  %v759 = vunpack.c.l.b16 %v25
  %v760 = vunpack.c.h.b16 %v25
  %v761 = vunpack.c.l.b16 %v26
  %v762 = vunpack.c.h.b16 %v26
  %v763 = vunpack.c.l.b16 %v27
  %v764 = vunpack.c.h.b16 %v27
  %v765 = vunpack.c.l.b16 %v28
  %v766 = vunpack.c.h.b16 %v28
  %v767 = vunpack.c.l.b16 %v29
  %v768 = vpack.c.b16 %v757, %v746
  %v769 = vpack.c.b16 %v758, %v747
  %v770 = vpack.c.b16 %v759, %v748
  %v771 = vpack.c.b16 %v760, %v749
  %v772 = vpack.c.b16 %v761, %v750
  %v773 = vpack.c.b16 %v762, %v751
  %v774 = vpack.c.b16 %v763, %v752
  %v775 = vpack.c.b16 %v764, %v753
  %v776 = vpack.c.b16 %v765, %v754
  %v777 = vpack.c.b16 %v766, %v755
  %v778 = vpack.c.b16 %v767, %v756
  %v1494 = vunpack.c.l.b16 %v30
  %v1495 = vunpack.c.h.b16 %v30
  %v1496 = vunpack.c.l.b16 %v31
  %v1497 = vunpack.c.h.b16 %v31
  %v1498 = vunpack.c.l.b16 %v32
  %v1499 = vunpack.c.h.b16 %v32
  %v1500 = vunpack.c.l.b16 %v33
  %v1501 = vunpack.c.h.b16 %v33
  %v1502 = vunpack.c.l.b16 %v34
  %v1503 = vunpack.c.h.b16 %v34
  %v1504 = vunpack.c.l.b16 %v35
  %v1505 = vunpack.c.h.b16 %v35
  %v1506 = vunpack.c.l.b16 %v36
  %v1507 = vunpack.c.h.b16 %v36
  %v1508 = vunpack.c.l.b16 %v37
  %v1509 = vunpack.c.h.b16 %v37
  %v1510 = vunpack.c.l.b16 %v38
  %v1511 = vunpack.c.h.b16 %v38
  %v1512 = vunpack.c.l.b16 %v39
  %v1513 = vunpack.c.h.b16 %v39
  %v1514 = vunpack.c.l.b16 %v40
  %v1515 = vunpack.c.h.b16 %v40
  %v1516 = vunpack.c.l.b16 %v41
  %v1517 = vunpack.c.h.b16 %v41
  %v1518 = vunpack.c.l.b16 %v42
  %v1519 = vunpack.c.h.b16 %v42
  %v1520 = vunpack.c.l.b16 %v43
  %v1521 = vunpack.c.h.b16 %v43
  %v1522 = vunpack.c.l.b16 %v44
  %v1523 = vunpack.c.h.b16 %v44
  %v1524 = vunpack.c.l.b16 %v45
  %v1525 = vunpack.c.h.b16 %v45
  %v1526 = vunpack.c.l.b16 %v46
  %v1527 = vunpack.c.h.b16 %v46
  %v1528 = vunpack.c.l.b16 %v47
  %v1529 = vunpack.c.h.b16 %v47
  %v1530 = vunpack.c.l.b16 %v48
  %v1531 = vunpack.c.h.b16 %v48
  %v1532 = vunpack.c.l.b16 %v49
  %v1533 = vunpack.c.h.b16 %v49
  %v1534 = vunpack.c.l.b16 %v50
  %v1535 = vunpack.c.h.b16 %v50
  %v1536 = vunpack.c.l.b16 %v51
  %v1537 = vunpack.c.h.b16 %v51
  %v1538 = vunpack.c.l.b16 %v52
  %v1539 = vunpack.c.h.b16 %v52
  %v1540 = vunpack.c.l.b16 %v53
  %v1541 = vunpack.c.h.b16 %v53
  %v1542 = vunpack.c.l.b16 %v54
  %v1543 = vunpack.c.h.b16 %v54
  %v1544 = vunpack.c.l.b16 %v55
  %v1545 = vunpack.c.h.b16 %v55
  %v1546 = vunpack.c.l.b16 %v56
  %v1547 = vunpack.c.h.b16 %v56
  %v1548 = vunpack.c.l.b16 %v57
  %v1549 = vunpack.c.h.b16 %v57
  %v1550 = vunpack.c.l.b16 %v58
  %v1551 = vunpack.c.h.b16 %v58
  %v1552 = vunpack.c.l.b16 %v59
  %v1553 = vunpack.c.h.b16 %v59
  %v1554 = vunpack.c.l.b16 %v60
  %v1555 = vunpack.c.h.b16 %v60
  %v1556 = vunpack.c.l.b16 %v61
  %v1557 = vunpack.c.h.b16 %v61
  %v1558 = vunpack.c.l.b16 %v62
  %v1559 = vunpack.c.h.b16 %v62
  %v1560 = vunpack.c.l.b16 %v63
  %v1561 = vunpack.c.h.b16 %v63
  %v1562 = vunpack.c.l.b16 %v64
  %v1563 = vunpack.c.h.b16 %v64
  %v1564 = vunpack.c.l.b16 %v65
  %v1565 = vunpack.c.h.b16 %v65
  %v1566 = vunpack.c.l.b16 %v66
  %v1567 = vunpack.c.h.b16 %v66
  %v1568 = vunpack.c.l.b16 %v67
  %v1569 = vunpack.c.h.b16 %v67
  %v1570 = vunpack.c.l.b16 %v68
  %v1571 = vunpack.c.h.b16 %v68
  %v1572 = vunpack.c.l.b16 %v69
  %v1573 = vunpack.c.h.b16 %v69
  %v1574 = vunpack.c.l.b16 %v70
  %v1575 = vunpack.c.h.b16 %v70
  %v1576 = vunpack.c.l.b16 %v71
  %v1577 = vunpack.c.h.b16 %v71
  %v1578 = vunpack.c.l.b16 %v72
  %v1579 = vunpack.c.h.b16 %v72
  %v1580 = vunpack.c.l.b16 %v73
  %v1581 = vunpack.c.h.b16 %v73
  %v1582 = vunpack.c.l.b16 %v74
  %v1583 = vunpack.c.h.b16 %v74
  %v1584 = vunpack.c.l.b16 %v75
  %v1585 = vunpack.c.h.b16 %v75
  %v1586 = vunpack.c.l.b16 %v76
  %v1587 = vunpack.c.h.b16 %v76
  %v1588 = vunpack.c.l.b16 %v77
  %v1589 = vunpack.c.h.b16 %v77
  %v1590 = vunpack.c.l.b16 %v78
  %v1591 = vunpack.c.h.b16 %v78
  %v1592 = vunpack.c.l.b16 %v79
  %v1593 = vunpack.c.h.b16 %v79
  %v1594 = vunpack.c.l.b16 %v80
  %v1595 = vunpack.c.h.b16 %v80
  %v1596 = vunpack.c.l.b16 %v81
  %v1597 = vunpack.c.h.b16 %v81
  %v1598 = vunpack.c.l.b16 %v82
  %v1599 = vunpack.c.h.b16 %v82
  %v1600 = vunpack.c.l.b16 %v83
  %v1601 = vunpack.c.h.b16 %v83
  %v1602 = vunpack.c.l.b16 %v84
  %v1603 = vunpack.c.h.b16 %v84
  %v1604 = vunpack.c.l.b16 %v85
  %v1605 = vunpack.c.h.b16 %v85
  %v1606 = vunpack.c.l.b16 %v86
  %v1607 = vunpack.c.h.b16 %v86
  %v1608 = vunpack.c.l.b16 %v87
  %v1609 = vunpack.c.h.b16 %v87
  %v1610 = vunpack.c.l.b16 %v88
  %v1611 = vunpack.c.h.b16 %v88
  %v1612 = vunpack.c.l.b16 %v89
  %v1613 = vunpack.c.h.b16 %v89
  %v1614 = vunpack.c.l.b16 %v90
  %v1615 = vunpack.c.h.b16 %v90
  %v1616 = vunpack.c.l.b16 %v91
  %v1617 = vunpack.c.h.b16 %v91
  %v1618 = vunpack.c.l.b16 %v92
  %v1619 = vunpack.c.h.b16 %v92
  %v1620 = vunpack.c.l.b16 %v93
  %v1621 = vunpack.c.h.b16 %v93
  %v1622 = vunpack.c.l.b16 %v94
  %v1623 = vunpack.c.h.b16 %v94
  %v1624 = vunpack.c.l.b16 %v95
  %v1625 = vunpack.c.h.b16 %v95
  %v1626 = vunpack.c.l.b16 %v96
  %v1627 = vunpack.c.h.b16 %v96
  %v1628 = vunpack.c.l.b16 %v97
  %v1629 = vunpack.c.h.b16 %v97
  %v1630 = vunpack.c.l.b16 %v98
  %v1631 = vunpack.c.h.b16 %v98
  %v1632 = vunpack.c.l.b16 %v99
  %v1633 = vunpack.c.h.b16 %v99
  %v1634 = vunpack.c.l.b16 %v100
  %v1635 = vunpack.c.h.b16 %v100
  %v1636 = vunpack.c.l.b16 %v101
  %v1637 = vunpack.c.h.b16 %v101
  %v1638 = vunpack.c.l.b16 %v102
  %v1639 = vunpack.c.h.b16 %v102
  %v1640 = vunpack.c.l.b16 %v103
  %v1641 = vunpack.c.h.b16 %v103
  %v1642 = vunpack.c.l.b16 %v104
  %v1643 = vunpack.c.h.b16 %v104
  %v1644 = vunpack.c.l.b16 %v105
  %v1645 = vunpack.c.h.b16 %v105
  %v1646 = vunpack.c.l.b16 %v106
  %v1647 = vunpack.c.h.b16 %v106
  %v1648 = vunpack.c.l.b16 %v107
  %v1649 = vunpack.c.h.b16 %v107
  %v1650 = vunpack.c.l.b16 %v108
  %v1651 = vunpack.c.h.b16 %v108
  %v1652 = vunpack.c.l.b16 %v109
  %v1653 = vunpack.c.h.b16 %v109
  %v1654 = vunpack.c.l.b16 %v110
  %v1655 = vunpack.c.h.b16 %v110
  %v1656 = vunpack.c.l.b16 %v111
  %v1657 = vunpack.c.h.b16 %v111
  %v1658 = vunpack.c.l.b16 %v112
  %v1659 = vunpack.c.h.b16 %v112
  %v1660 = vunpack.c.l.b16 %v113
  %v1661 = vunpack.c.h.b16 %v113
  %v1662 = vunpack.c.l.b16 %v114
  %v1663 = vunpack.c.h.b16 %v114
  %v1664 = vunpack.c.l.b16 %v115
  %v1665 = vunpack.c.h.b16 %v115
  %v1666 = vunpack.c.l.b16 %v116
  %v1667 = vunpack.c.h.b16 %v116
  %v1668 = vunpack.c.l.b16 %v117
  %v1669 = vunpack.c.h.b16 %v117
  %v1670 = vunpack.c.l.b16 %v118
  %v1671 = vunpack.c.h.b16 %v118
  %v1672 = vunpack.c.l.b16 %v119
  %v1673 = vunpack.c.h.b16 %v119
  %v1674 = vunpack.c.l.b16 %v120
  %v1675 = vunpack.c.h.b16 %v120
  %v1676 = vunpack.c.l.b16 %v121
  %v1677 = vunpack.c.h.b16 %v121
  %v1678 = vunpack.c.l.b16 %v122
  %v1679 = vunpack.c.h.b16 %v122
  %v1680 = vunpack.c.l.b16 %v123
  %v1681 = vunpack.c.h.b16 %v123
  %v1682 = vunpack.c.l.b16 %v124
  %v1683 = vunpack.c.h.b16 %v124
  %v1684 = vunpack.c.l.b16 %v125
  %v1685 = vunpack.c.h.b16 %v125
  %v1686 = vunpack.c.l.b16 %v126
  %v1687 = vunpack.c.h.b16 %v126
  %v1688 = vunpack.c.l.b16 %v127
  %v1689 = vunpack.c.h.b16 %v127
  %v1690 = vunpack.c.l.b16 %v128
  %v1691 = vunpack.c.h.b16 %v128
  %v1692 = vunpack.c.l.b16 %v129
  %v1693 = vunpack.c.h.b16 %v129
  %v1694 = vunpack.c.l.b16 %v130
  %v1695 = vunpack.c.h.b16 %v130
  %v1696 = vunpack.c.l.b16 %v131
  %v1697 = vunpack.c.h.b16 %v131
  %v1698 = vunpack.c.l.b16 %v132
  %v1699 = vunpack.c.h.b16 %v132
  %v1700 = vunpack.c.l.b16 %v133
  %v1701 = vunpack.c.h.b16 %v133
  %v1702 = vunpack.c.l.b16 %v134
  %v1703 = vunpack.c.h.b16 %v134
  %v1704 = vunpack.c.l.b16 %v135
  %v1705 = vunpack.c.h.b16 %v135
  %v1706 = vunpack.c.l.b16 %v136
  %v1707 = vunpack.c.h.b16 %v136
  %v1708 = vunpack.c.l.b16 %v137
  %v1709 = vunpack.c.h.b16 %v137
  %v1710 = vunpack.c.l.b16 %v138
  %v1711 = vunpack.c.h.b16 %v138
  %v1712 = vunpack.c.l.b16 %v139
  %v1713 = vunpack.c.h.b16 %v139
  %v1714 = vunpack.c.l.b16 %v140
  %v1715 = vunpack.c.h.b16 %v140
  %v1716 = vunpack.c.l.b16 %v141
  %v1717 = vunpack.c.h.b16 %v141
  %v1718 = vunpack.c.l.b16 %v142
  %v1719 = vunpack.c.h.b16 %v142
  %v1720 = vunpack.c.l.b16 %v143
  %v1721 = vunpack.c.h.b16 %v143
  %v1722 = vunpack.c.l.b16 %v144
  %v1723 = vunpack.c.h.b16 %v144
  %v1724 = vunpack.c.l.b16 %v145
  %v1725 = vunpack.c.h.b16 %v145
  %v1726 = vunpack.c.l.b16 %v146
  %v1727 = vunpack.c.h.b16 %v146
  %v1728 = vunpack.c.l.b16 %v147
  %v1729 = vunpack.c.h.b16 %v147
  %v1730 = vunpack.c.l.b16 %v148
  %v1731 = vunpack.c.h.b16 %v148
  %v1732 = vunpack.c.l.b16 %v149
  %v1733 = vunpack.c.h.b16 %v149
  %v1734 = vunpack.c.l.b16 %v150
  %v1735 = vunpack.c.h.b16 %v150
  %v1736 = vunpack.c.l.b16 %v151
  %v1737 = vunpack.c.h.b16 %v151
  %v1738 = vunpack.c.l.b16 %v152
  %v1739 = vunpack.c.h.b16 %v152
  %v1740 = vunpack.c.l.b16 %v153
  %v1741 = vunpack.c.h.b16 %v153
  %v1742 = vunpack.c.l.b16 %v154
  %v1743 = vunpack.c.h.b16 %v154
  %v1744 = vunpack.c.l.b16 %v155
  %v1745 = vunpack.c.h.b16 %v155
  %v1746 = vunpack.c.l.b16 %v156
  %v1747 = vunpack.c.h.b16 %v156
  %v1748 = vunpack.c.l.b16 %v157
  %v1749 = vunpack.c.h.b16 %v157
  %v1750 = vunpack.c.l.b16 %v158
  %v1751 = vunpack.c.h.b16 %v158
  %v1752 = vunpack.c.l.b16 %v159
  %v1753 = vunpack.c.h.b16 %v159
  %v1754 = vunpack.c.l.b16 %v160
  %v1755 = vunpack.c.h.b16 %v160
  %v1756 = vunpack.c.l.b16 %v161
  %v1757 = vunpack.c.h.b16 %v161
  %v1758 = vunpack.c.l.b16 %v162
  %v1759 = vunpack.c.h.b16 %v162
  %v1760 = vunpack.c.l.b16 %v163
  %v1761 = vunpack.c.h.b16 %v163
  %v1762 = vunpack.c.l.b16 %v164
  %v1763 = vunpack.c.h.b16 %v164
  %v1764 = vunpack.c.l.b16 %v165
  %v1765 = vunpack.c.h.b16 %v165
  %v1766 = vunpack.c.l.b16 %v166
  %v1767 = vunpack.c.h.b16 %v166
  %v1768 = vunpack.c.l.b16 %v167
  %v1769 = vunpack.c.h.b16 %v167
  %v1770 = vunpack.c.l.b16 %v168
  %v1771 = vunpack.c.h.b16 %v168
  %v1772 = vunpack.c.l.b16 %v169
  %v1773 = vunpack.c.h.b16 %v169
  %v1774 = vunpack.c.l.b16 %v170
  %v1775 = vunpack.c.h.b16 %v170
  %v1776 = vunpack.c.l.b16 %v171
  %v1777 = vunpack.c.h.b16 %v171
  %v1778 = vunpack.c.l.b16 %v172
  %v1779 = vunpack.c.h.b16 %v172
  %v1780 = vunpack.c.l.b16 %v173
  %v1781 = vunpack.c.h.b16 %v173
  %v1782 = vunpack.c.l.b16 %v174
  %v1783 = vunpack.c.h.b16 %v174
  %v1784 = vunpack.c.l.b16 %v175
  %v1785 = vunpack.c.h.b16 %v175
  %v1786 = vunpack.c.l.b16 %v176
  %v1787 = vunpack.c.h.b16 %v176
  %v1788 = vunpack.c.l.b16 %v177
  %v1789 = vunpack.c.h.b16 %v177
  %v1790 = vunpack.c.l.b16 %v178
  %v1791 = vunpack.c.h.b16 %v178
  %v1792 = vunpack.c.l.b16 %v179
  %v1793 = vunpack.c.h.b16 %v179
  %v1794 = vunpack.c.l.b16 %v180
  %v1795 = vunpack.c.h.b16 %v180
  %v1796 = vunpack.c.l.b16 %v181
  %v1797 = vunpack.c.h.b16 %v181
  %v1798 = vunpack.c.l.b16 %v182
  %v1799 = vunpack.c.h.b16 %v182
  %v1800 = vunpack.c.l.b16 %v183
  %v1801 = vunpack.c.h.b16 %v183
  %v1802 = vunpack.c.l.b16 %v184
  %v1803 = vunpack.c.h.b16 %v184
  %v1804 = vunpack.c.l.b16 %v185
  %v1805 = vunpack.c.h.b16 %v185
  %v1806 = vunpack.c.l.b16 %v186
  %v1807 = vunpack.c.h.b16 %v186
  %v1808 = vunpack.c.l.b16 %v187
  %v1809 = vunpack.c.h.b16 %v187
  %v1810 = vunpack.c.l.b16 %v188
  %v1811 = vunpack.c.h.b16 %v188
  %v1812 = vunpack.c.l.b16 %v189
  %v1813 = vunpack.c.h.b16 %v189
  %v1814 = vunpack.c.l.b16 %v190
  %v1815 = vunpack.c.h.b16 %v190
  %v1816 = vunpack.c.l.b16 %v191
  %v1817 = vunpack.c.h.b16 %v191
  %v1818 = vunpack.c.l.b16 %v192
  %v1819 = vunpack.c.h.b16 %v192
  %v1820 = vunpack.c.l.b16 %v193
  %v1821 = vunpack.c.h.b16 %v193
  %v1822 = vunpack.c.l.b16 %v194
  %v1823 = vunpack.c.h.b16 %v194
  %v1824 = vunpack.c.l.b16 %v195
  %v1825 = vunpack.c.h.b16 %v195
  %v1826 = vunpack.c.l.b16 %v196
  %v1827 = vunpack.c.h.b16 %v196
  %v1828 = vunpack.c.l.b16 %v197
  %v1829 = vunpack.c.h.b16 %v197
  %v1830 = vunpack.c.l.b16 %v198
  %v1831 = vunpack.c.h.b16 %v198
  %v1832 = vunpack.c.l.b16 %v199
  %v1833 = vunpack.c.h.b16 %v199
  %v1834 = vunpack.c.l.b16 %v200
  %v1835 = vunpack.c.h.b16 %v200
  %v1836 = vunpack.c.l.b16 %v201
  %v1837 = vunpack.c.h.b16 %v201
  %v1838 = vunpack.c.l.b16 %v202
  %v1839 = vunpack.c.h.b16 %v202
  %v1840 = vunpack.c.l.b16 %v203
  %v1841 = vunpack.c.h.b16 %v203
  %v1842 = vunpack.c.l.b16 %v204
  %v1843 = vunpack.c.h.b16 %v204
  %v1844 = vunpack.c.l.b16 %v205
  %v1845 = vunpack.c.h.b16 %v205
  %v1846 = vunpack.c.l.b16 %v206
  %v1847 = vunpack.c.h.b16 %v206
  %v1848 = vunpack.c.l.b16 %v207
  %v1849 = vunpack.c.h.b16 %v207
  %v1850 = vunpack.c.l.b16 %v208
  %v1851 = vunpack.c.h.b16 %v208
  %v1852 = vunpack.c.l.b16 %v209
  %v1853 = vunpack.c.h.b16 %v209
  %v1854 = vunpack.c.l.b16 %v210
  %v1855 = vunpack.c.h.b16 %v210
  %v1856 = vunpack.c.l.b16 %v211
  %v1857 = vunpack.c.h.b16 %v211
  %v1858 = vunpack.c.l.b16 %v212
  %v1859 = vunpack.c.h.b16 %v212
  %v1860 = vunpack.c.l.b16 %v213
  %v1861 = vunpack.c.h.b16 %v213
  %v1862 = vunpack.c.l.b16 %v214
  %v1863 = vunpack.c.h.b16 %v214
  %v1864 = vunpack.c.l.b16 %v215
  %v1865 = vunpack.c.h.b16 %v215
  %v1866 = vunpack.c.l.b16 %v216
  %v1867 = vunpack.c.h.b16 %v216
  %v1868 = vunpack.c.l.b16 %v217
  %v1869 = vunpack.c.h.b16 %v217
  %v1870 = vunpack.c.l.b16 %v218
  %v1871 = vunpack.c.h.b16 %v218
  %v1872 = vunpack.c.l.b16 %v219
  %v1873 = vunpack.c.h.b16 %v219
  %v1874 = vunpack.c.l.b16 %v220
  %v1875 = vunpack.c.h.b16 %v220
  %v1876 = vunpack.c.l.b16 %v221
  %v1877 = vunpack.c.h.b16 %v221
  %v1878 = vunpack.c.l.b16 %v222
  %v1879 = vunpack.c.h.b16 %v222
  %v1880 = vunpack.c.l.b16 %v223
  %v1881 = vunpack.c.h.b16 %v223
  %v1882 = vunpack.c.l.b16 %v224
  %v1883 = vunpack.c.h.b16 %v224
  %v1884 = vunpack.c.l.b16 %v225
  %v1885 = vunpack.c.h.b16 %v225
  %v1886 = vunpack.c.l.b16 %v226
  %v1887 = vunpack.c.h.b16 %v226
  %v1888 = vunpack.c.l.b16 %v227
  %v1889 = vunpack.c.h.b16 %v227
  %v1890 = vunpack.c.l.b16 %v228
  %v1891 = vunpack.c.h.b16 %v228
  %v1892 = vunpack.c.l.b16 %v229
  %v1893 = vunpack.c.h.b16 %v229
  %v1894 = vunpack.c.l.b16 %v230
  %v1895 = vunpack.c.h.b16 %v230
  %v1896 = vunpack.c.l.b16 %v231
  %v1897 = vunpack.c.h.b16 %v231
  %v1898 = vunpack.c.l.b16 %v232
  %v1899 = vunpack.c.h.b16 %v232
  %v1900 = vunpack.c.l.b16 %v233
  %v1901 = vunpack.c.h.b16 %v233
  %v1902 = vunpack.c.l.b16 %v234
  %v1903 = vunpack.c.h.b16 %v234
  %v1904 = vunpack.c.l.b16 %v235
  %v1905 = vunpack.c.h.b16 %v235
  %v1906 = vunpack.c.l.b16 %v236
  %v1907 = vunpack.c.h.b16 %v236
  %v1908 = vunpack.c.l.b16 %v237
  %v1909 = vunpack.c.h.b16 %v237
  %v1910 = vunpack.c.l.b16 %v238
  %v1911 = vunpack.c.h.b16 %v238
  %v1912 = vunpack.c.l.b16 %v239
  %v1913 = vunpack.c.h.b16 %v239
  %v1914 = vunpack.c.l.b16 %v240
  %v1915 = vunpack.c.h.b16 %v240
  %v1916 = vunpack.c.l.b16 %v241
  %v1917 = vunpack.c.h.b16 %v241
  %v1918 = vunpack.c.l.b16 %v242
  %v1919 = vunpack.c.h.b16 %v242
  %v1920 = vunpack.c.l.b16 %v243
  %v1921 = vunpack.c.h.b16 %v243
  %v1922 = vunpack.c.l.b16 %v244
  %v1923 = vunpack.c.h.b16 %v244
  %v1924 = vunpack.c.l.b16 %v245
  %v1925 = vunpack.c.h.b16 %v245
  %v1926 = vunpack.c.l.b16 %v246
  %v1927 = vunpack.c.h.b16 %v246
  %v1928 = vunpack.c.l.b16 %v247
  %v1929 = vunpack.c.h.b16 %v247
  %v1930 = vunpack.c.l.b16 %v248
  %v1931 = vunpack.c.h.b16 %v248
  %v1932 = vunpack.c.l.b16 %v249
  %v1933 = vunpack.c.h.b16 %v249
  %v1934 = vunpack.c.l.b16 %v250
  %v1935 = vunpack.c.h.b16 %v250
  %v1936 = vunpack.c.l.b16 %v251
  %v1937 = vunpack.c.h.b16 %v251
  %v1938 = vunpack.c.l.b16 %v252
  %v1939 = vunpack.c.h.b16 %v252
  %v1940 = vunpack.c.l.b16 %v253
  %v1941 = vunpack.c.h.b16 %v253
  %v1942 = vunpack.c.l.b16 %v254
  %v1943 = vunpack.c.h.b16 %v254
  %v1944 = vunpack.c.l.b16 %v255
  %v1945 = vunpack.c.h.b16 %v255
  %v1946 = vunpack.c.l.b16 %v256
  %v1947 = vunpack.c.h.b16 %v256
  %v1948 = vunpack.c.l.b16 %v257
  %v1949 = vunpack.c.h.b16 %v257
  %v1950 = vunpack.c.l.b16 %v258
  %v1951 = vunpack.c.h.b16 %v258
  %v1952 = vunpack.c.l.b16 %v259
  %v1953 = vunpack.c.h.b16 %v259
  %v1954 = vunpack.c.l.b16 %v260
  %v1955 = vunpack.c.h.b16 %v260
  %v1956 = vunpack.c.l.b16 %v261
  %v1957 = vunpack.c.h.b16 %v261
  %v1958 = vunpack.c.l.b16 %v262
  %v1959 = vunpack.c.h.b16 %v262
  %v1960 = vunpack.c.l.b16 %v263
  %v1961 = vunpack.c.h.b16 %v263
  %v1962 = vunpack.c.l.b16 %v264
  %v1963 = vunpack.c.h.b16 %v264
  %v1964 = vunpack.c.l.b16 %v265
  %v1965 = vunpack.c.h.b16 %v265
  %v1966 = vunpack.c.l.b16 %v266
  %v1967 = vunpack.c.h.b16 %v266
  %v1968 = vunpack.c.l.b16 %v267
  %v1969 = vunpack.c.h.b16 %v267
  %v1970 = vunpack.c.l.b16 %v268
  %v1971 = vunpack.c.h.b16 %v268
  %v1972 = vunpack.c.l.b16 %v269
  %v1973 = vunpack.c.h.b16 %v269
  %v1974 = vunpack.c.l.b16 %v270
  %v1975 = vunpack.c.h.b16 %v270
  %v1976 = vunpack.c.l.b16 %v271
  %v1977 = vunpack.c.h.b16 %v271
  %v1978 = vunpack.c.l.b16 %v272
  %v1979 = vunpack.c.h.b16 %v272
  %v1980 = vunpack.c.l.b16 %v273
  %v1981 = vunpack.c.h.b16 %v273
  %v1982 = vunpack.c.l.b16 %v274
  %v1983 = vunpack.c.h.b16 %v274
  %v1984 = vunpack.c.l.b16 %v275
  %v1985 = vunpack.c.h.b16 %v275
  %v1986 = vunpack.c.l.b16 %v276
  %v1987 = vunpack.c.h.b16 %v276
  %v1988 = vunpack.c.l.b16 %v277
  %v1989 = vunpack.c.h.b16 %v277
  %v1990 = vunpack.c.l.b16 %v278
  %v1991 = vunpack.c.h.b16 %v278
  %v1992 = vunpack.c.l.b16 %v279
  %v1993 = vunpack.c.h.b16 %v279
  %v1994 = vunpack.c.l.b16 %v280
  %v1995 = vunpack.c.h.b16 %v280
  %v1996 = vunpack.c.l.b16 %v281
  %v1997 = vunpack.c.h.b16 %v281
  %v1998 = vunpack.c.l.b16 %v282
  %v1999 = vunpack.c.h.b16 %v282
  %v2000 = vunpack.c.l.b16 %v283
  %v2001 = vunpack.c.h.b16 %v283
  %v2002 = vunpack.c.l.b16 %v284
  %v2003 = vunpack.c.h.b16 %v284
  %v2004 = vunpack.c.l.b16 %v285
  %v2005 = vunpack.c.h.b16 %v285
  %v2006 = vunpack.c.l.b16 %v286
  %v2007 = vunpack.c.h.b16 %v286
  %v2008 = vunpack.c.l.b16 %v287
  %v2009 = vunpack.c.h.b16 %v287
  %v2010 = vunpack.c.l.b16 %v288
  %v2011 = vunpack.c.h.b16 %v288
  %v2012 = vunpack.c.l.b16 %v289
  %v2013 = vunpack.c.h.b16 %v289
  %v2014 = vunpack.c.l.b16 %v290
  %v2015 = vunpack.c.h.b16 %v290
  %v2016 = vunpack.c.l.b16 %v291
  %v2017 = vunpack.c.h.b16 %v291
  %v2018 = vunpack.c.l.b16 %v292
  %v2019 = vunpack.c.h.b16 %v292
  %v2020 = vunpack.c.l.b16 %v293
  %v2021 = vunpack.c.h.b16 %v293
  %v2022 = vunpack.c.l.b16 %v294
  %v2023 = vunpack.c.h.b16 %v294
  %v2024 = vunpack.c.l.b16 %v295
  %v2025 = vunpack.c.h.b16 %v295
  %v2026 = vunpack.c.l.b16 %v296
  %v2027 = vunpack.c.h.b16 %v296
  %v2028 = vunpack.c.l.b16 %v297
  %v2029 = vunpack.c.h.b16 %v297
  %v2030 = vunpack.c.l.b16 %v298
  %v2031 = vunpack.c.h.b16 %v298
  %v2032 = vunpack.c.l.b16 %v299
  %v2033 = vunpack.c.h.b16 %v299
  %v2034 = vunpack.c.l.b16 %v300
  %v2035 = vunpack.c.h.b16 %v300
  %v2036 = vunpack.c.l.b16 %v301
  %v2037 = vunpack.c.h.b16 %v301
  %v2038 = vunpack.c.l.b16 %v302
  %v2039 = vunpack.c.h.b16 %v302
  %v2040 = vunpack.c.l.b16 %v303
  %v2041 = vunpack.c.h.b16 %v303
  %v2042 = vunpack.c.l.b16 %v304
  %v2043 = vunpack.c.h.b16 %v304
  %v2044 = vunpack.c.l.b16 %v305
  %v2045 = vunpack.c.h.b16 %v305
  %v2046 = vunpack.c.l.b16 %v306
  %v2047 = vunpack.c.h.b16 %v306
  %v2048 = vunpack.c.l.b16 %v307
  %v2049 = vunpack.c.h.b16 %v307
  %v2050 = vunpack.c.l.b16 %v308
  %v2051 = vunpack.c.h.b16 %v308
  %v2052 = vunpack.c.l.b16 %v309
  %v2053 = vunpack.c.h.b16 %v309
  %v2054 = vunpack.c.l.b16 %v310
  %v2055 = vunpack.c.h.b16 %v310
  %v2056 = vunpack.c.l.b16 %v311
  %v2057 = vunpack.c.h.b16 %v311
  %v2058 = vunpack.c.l.b16 %v312
  %v2059 = vunpack.c.h.b16 %v312
  %v2060 = vunpack.c.l.b16 %v313
  %v2061 = vunpack.c.h.b16 %v313
  %v2062 = vunpack.c.l.b16 %v314
  %v2063 = vunpack.c.h.b16 %v314
  %v2064 = vunpack.c.l.b16 %v315
  %v2065 = vunpack.c.h.b16 %v315
  %v2066 = vunpack.c.l.b16 %v316
  %v2067 = vunpack.c.h.b16 %v316
  %v2068 = vunpack.c.l.b16 %v317
  %v2069 = vunpack.c.h.b16 %v317
  %v2070 = vunpack.c.l.b16 %v318
  %v2071 = vunpack.c.h.b16 %v318
  %v2072 = vunpack.c.l.b16 %v319
  %v2073 = vunpack.c.h.b16 %v319
  %v2074 = vunpack.c.l.b16 %v320
  %v2075 = vunpack.c.h.b16 %v320
  %v2076 = vunpack.c.l.b16 %v321
  %v2077 = vunpack.c.h.b16 %v321
  %v2078 = vunpack.c.l.b16 %v322
  %v2079 = vunpack.c.h.b16 %v322
  %v2080 = vunpack.c.l.b16 %v323
  %v2081 = vunpack.c.h.b16 %v323
  %v2082 = vunpack.c.l.b16 %v324
  %v2083 = vunpack.c.h.b16 %v324
  %v2084 = vunpack.c.l.b16 %v325
  %v2085 = vunpack.c.h.b16 %v325
  %v2086 = vunpack.c.l.b16 %v326
  %v2087 = vunpack.c.h.b16 %v326
  %v2088 = vunpack.c.l.b16 %v327
  %v2089 = vunpack.c.h.b16 %v327
  %v2090 = vunpack.c.l.b16 %v328
  %v2091 = vunpack.c.h.b16 %v328
  %v2092 = vunpack.c.l.b16 %v329
  %v2093 = vunpack.c.h.b16 %v329
  %v2094 = vunpack.c.l.b16 %v330
  %v2095 = vunpack.c.h.b16 %v330
  %v2096 = vunpack.c.l.b16 %v331
  %v2097 = vunpack.c.h.b16 %v331
  %v2098 = vunpack.c.l.b16 %v332
  %v2099 = vunpack.c.h.b16 %v332
  %v2100 = vunpack.c.l.b16 %v333
  %v2101 = vunpack.c.h.b16 %v333
  %v2102 = vunpack.c.l.b16 %v334
  %v2103 = vunpack.c.h.b16 %v334
  %v2104 = vunpack.c.l.b16 %v335
  %v2105 = vunpack.c.h.b16 %v335
  %v2106 = vunpack.c.l.b16 %v336
  %v2107 = vunpack.c.h.b16 %v336
  %v2108 = vunpack.c.l.b16 %v337
  %v2109 = vunpack.c.h.b16 %v337
  %v2110 = vunpack.c.l.b16 %v338
  %v2111 = vunpack.c.h.b16 %v338
  %v2112 = vunpack.c.l.b16 %v339
  %v2113 = vunpack.c.h.b16 %v339
  %v2114 = vunpack.c.l.b16 %v340
  %v2115 = vunpack.c.h.b16 %v340
  %v2116 = vunpack.c.l.b16 %v341
  %v2117 = vunpack.c.h.b16 %v341
  %v2118 = vunpack.c.l.b16 %v342
  %v2119 = vunpack.c.h.b16 %v342
  %v2120 = vunpack.c.l.b16 %v343
  %v2121 = vunpack.c.h.b16 %v343
  %v2122 = vunpack.c.l.b16 %v344
  %v2123 = vunpack.c.h.b16 %v344
  %v2124 = vunpack.c.l.b16 %v345
  %v2125 = vunpack.c.h.b16 %v345
  %v2126 = vunpack.c.l.b16 %v346
  %v2127 = vunpack.c.h.b16 %v346
  %v2128 = vunpack.c.l.b16 %v347
  %v2129 = vunpack.c.h.b16 %v347
  %v2130 = vunpack.c.l.b16 %v348
  %v2131 = vunpack.c.h.b16 %v348
  %v2132 = vunpack.c.l.b16 %v349
  %v2133 = vunpack.c.h.b16 %v349
  %v2134 = vunpack.c.l.b16 %v350
  %v2135 = vunpack.c.h.b16 %v350
  %v2136 = vunpack.c.l.b16 %v351
  %v2137 = vunpack.c.h.b16 %v351
  %v2138 = vunpack.c.l.b16 %v352
  %v2139 = vunpack.c.h.b16 %v352
  %v2140 = vunpack.c.l.b16 %v353
  %v2141 = vunpack.c.h.b16 %v353
  %v2142 = vunpack.c.l.b16 %v354
  %v2143 = vunpack.c.h.b16 %v354
  %v2144 = vunpack.c.l.b16 %v355
  %v2145 = vunpack.c.h.b16 %v355
  %v2146 = vunpack.c.l.b16 %v356
  %v2147 = vunpack.c.h.b16 %v356
  %v2148 = vunpack.c.l.b16 %v357
  %v2149 = vunpack.c.h.b16 %v357
  %v2150 = vunpack.c.l.b16 %v358
  %v2151 = vunpack.c.h.b16 %v358
  %v2152 = vunpack.c.l.b16 %v359
  %v2153 = vunpack.c.h.b16 %v359
  %v2154 = vunpack.c.l.b16 %v360
  %v2155 = vunpack.c.h.b16 %v360
  %v2156 = vunpack.c.l.b16 %v361
  %v2157 = vunpack.c.h.b16 %v361
  %v2158 = vunpack.c.l.b16 %v362
  %v2159 = vunpack.c.h.b16 %v362
  %v2160 = vunpack.c.l.b16 %v363
  %v2161 = vunpack.c.h.b16 %v363
  %v2162 = vunpack.c.l.b16 %v364
  %v2163 = vunpack.c.h.b16 %v364
  %v2164 = vunpack.c.l.b16 %v365
  %v2165 = vunpack.c.h.b16 %v365
  %v2166 = vunpack.c.l.b16 %v366
  %v2167 = vunpack.c.h.b16 %v366
  %v2168 = vunpack.c.l.b16 %v367
  %v2169 = vunpack.c.h.b16 %v367
  %v2170 = vunpack.c.l.b16 %v368
  %v2171 = vunpack.c.h.b16 %v368
  %v2172 = vunpack.c.l.b16 %v369
  %v2173 = vunpack.c.h.b16 %v369
  %v2174 = vunpack.c.l.b16 %v370
  %v2175 = vunpack.c.h.b16 %v370
  %v2176 = vunpack.c.l.b16 %v371
  %v2177 = vunpack.c.h.b16 %v371
  %v2178 = vunpack.c.l.b16 %v372
  %v2179 = vunpack.c.h.b16 %v372
  %v2180 = vunpack.c.l.b16 %v373
  %v2181 = vunpack.c.h.b16 %v373
  %v2182 = vunpack.c.l.b16 %v374
  %v2183 = vunpack.c.h.b16 %v374
  %v2184 = vunpack.c.l.b16 %v375
  %v2185 = vunpack.c.h.b16 %v375
  %v2186 = vunpack.c.l.b16 %v376
  %v2187 = vunpack.c.h.b16 %v376
  %v2188 = vunpack.c.l.b16 %v377
  %v2189 = vunpack.c.h.b16 %v377
  %v2190 = vunpack.c.l.b16 %v378
  %v2191 = vunpack.c.h.b16 %v378
  %v2192 = vunpack.c.l.b16 %v379
  %v2193 = vunpack.c.h.b16 %v379
  %v2194 = vunpack.c.l.b16 %v380
  %v2195 = vunpack.c.h.b16 %v380
  %v2196 = vunpack.c.l.b16 %v381
  %v2197 = vunpack.c.h.b16 %v381
  %v2198 = vunpack.c.l.b16 %v382
  %v2199 = vunpack.c.h.b16 %v382
  %v2200 = vunpack.c.l.b16 %v383
  %v2201 = vunpack.c.h.b16 %v383
  %v2202 = vunpack.c.l.b16 %v384
  %v2203 = vunpack.c.h.b16 %v384
  %v2204 = vunpack.c.l.b16 %v385
  %v2205 = vunpack.c.h.b16 %v385
  %v2206 = vunpack.c.l.b16 %v386
  %v2207 = vunpack.c.h.b16 %v386
  %v2208 = vunpack.c.l.b16 %v387
  %v2209 = vunpack.c.h.b16 %v387
  %v2210 = vunpack.c.l.b16 %v388
  %v2211 = vunpack.c.h.b16 %v388
  %v2212 = vunpack.c.l.b16 %v389
  %v2213 = vunpack.c.h.b16 %v389
  %v2214 = vunpack.c.l.b16 %v390
  %v2215 = vunpack.c.h.b16 %v390
  %v2216 = vunpack.c.l.b16 %v391
  %v2217 = vunpack.c.h.b16 %v391
  %v2218 = vunpack.c.l.b16 %v392
  %v2219 = vunpack.c.h.b16 %v392
  %v2220 = vunpack.c.l.b16 %v393
  %v2221 = vunpack.c.h.b16 %v393
  %v2222 = vunpack.c.l.b16 %v394
  %v2223 = vunpack.c.h.b16 %v394
  %v2224 = vunpack.c.l.b16 %v395
  %v2225 = vunpack.c.h.b16 %v395
  %v2226 = vunpack.c.l.b16 %v396
  %v2227 = vunpack.c.h.b16 %v396
  %v2228 = vunpack.c.l.b16 %v397
  %v2229 = vunpack.c.h.b16 %v397
  %v2230 = vunpack.c.l.b16 %v398
  %v2231 = vunpack.c.h.b16 %v398
  %v2232 = vunpack.c.l.b16 %v399
  %v2233 = vunpack.c.h.b16 %v399
  %v2234 = vunpack.c.l.b16 %v400
  %v2235 = vunpack.c.h.b16 %v400
  %v2236 = vunpack.c.l.b16 %v401
  %v2237 = vunpack.c.h.b16 %v401
  %v2238 = vunpack.c.l.b16 %v402
  %v2239 = vunpack.c.h.b16 %v402
  %v2240 = vunpack.c.l.b16 %v403
  %v2241 = vunpack.c.h.b16 %v403
  %v2242 = vunpack.c.l.b16 %v404
  %v2243 = vunpack.c.h.b16 %v404
  %v2244 = vunpack.c.l.b16 %v405
  %v2245 = vunpack.c.h.b16 %v405
  %v2246 = vunpack.c.l.b16 %v406
  %v2247 = vunpack.c.h.b16 %v406
  %v2248 = vunpack.c.l.b16 %v407
  %v2249 = vunpack.c.h.b16 %v407
  %v2250 = vunpack.c.l.b16 %v408
  %v2251 = vunpack.c.h.b16 %v408
  %v2252 = vunpack.c.l.b16 %v409
  %v2253 = vunpack.c.h.b16 %v409
  %v2254 = vunpack.c.l.b16 %v410
  %v2255 = vunpack.c.h.b16 %v410
  %v2256 = vunpack.c.l.b16 %v411
  %v2257 = vunpack.c.h.b16 %v411
  %v2258 = vunpack.c.l.b16 %v412
  %v2259 = vunpack.c.h.b16 %v412
  %v2260 = vunpack.c.l.b16 %v413
  %v2261 = vunpack.c.h.b16 %v413
  %v2262 = vunpack.c.l.b16 %v414
  %v2263 = vunpack.c.h.b16 %v414
  %v2264 = vunpack.c.l.b16 %v415
  %v2265 = vunpack.c.h.b16 %v415
  %v2266 = vunpack.c.l.b16 %v416
  %v2267 = vunpack.c.h.b16 %v416
  %v2268 = vunpack.c.l.b16 %v417
  %v2269 = vunpack.c.h.b16 %v417
  %v2270 = vunpack.c.l.b16 %v418
  %v2271 = vunpack.c.h.b16 %v418
  %v2272 = vunpack.c.l.b16 %v419
  %v2273 = vunpack.c.h.b16 %v419
  %v2274 = vunpack.c.l.b16 %v420
  %v2275 = vunpack.c.h.b16 %v420
  %v2276 = vunpack.c.l.b16 %v421
  %v2277 = vunpack.c.h.b16 %v421
  %v2278 = vunpack.c.l.b16 %v422
  %v2279 = vunpack.c.h.b16 %v422
  %v2280 = vunpack.c.l.b16 %v423
  %v2281 = vunpack.c.h.b16 %v423
  %v2282 = vunpack.c.l.b16 %v424
  %v2283 = vunpack.c.h.b16 %v424
  %v2284 = vunpack.c.l.b16 %v425
  %v2285 = vunpack.c.h.b16 %v425
  %v2286 = vunpack.c.l.b16 %v426
  %v2287 = vunpack.c.h.b16 %v426
  %v2288 = vunpack.c.l.b16 %v427
  %v2289 = vunpack.c.h.b16 %v427
  %v2290 = vunpack.c.l.b16 %v428
  %v2291 = vunpack.c.h.b16 %v428
  %v2292 = vunpack.c.l.b16 %v429
  %v2293 = vunpack.c.h.b16 %v429
  %v2294 = vunpack.c.l.b16 %v430
  %v2295 = vunpack.c.h.b16 %v430
  %v2296 = vunpack.c.l.b16 %v431
  %v2297 = vunpack.c.h.b16 %v431
  %v2298 = vunpack.c.l.b16 %v432
  %v2299 = vunpack.c.h.b16 %v432
  %v2300 = vunpack.c.l.b16 %v433
  %v2301 = vunpack.c.h.b16 %v433
  %v2302 = vunpack.c.l.b16 %v434
  %v2303 = vunpack.c.h.b16 %v434
  %v2304 = vunpack.c.l.b16 %v435
  %v2305 = vunpack.c.h.b16 %v435
  %v2306 = vunpack.c.l.b16 %v436
  %v2307 = vunpack.c.h.b16 %v436
  %v2308 = vunpack.c.l.b16 %v437
  %v2309 = vunpack.c.h.b16 %v437
  %v2310 = vunpack.c.l.b16 %v438
  %v2311 = vunpack.c.h.b16 %v438
  %v2312 = vunpack.c.l.b16 %v439
  %v2313 = vunpack.c.h.b16 %v439
  %v2314 = vunpack.c.l.b16 %v440
  %v2315 = vunpack.c.h.b16 %v440
  %v2316 = vunpack.c.l.b16 %v441
  %v2317 = vunpack.c.h.b16 %v441
  %v2318 = vunpack.c.l.b16 %v442
  %v2319 = vunpack.c.h.b16 %v442
  %v2320 = vunpack.c.l.b16 %v443
  %v2321 = vunpack.c.h.b16 %v443
  %v2322 = vunpack.c.l.b16 %v444
  %v2323 = vunpack.c.h.b16 %v444
  %v2324 = vunpack.c.l.b16 %v445
  %v2325 = vunpack.c.h.b16 %v445
  %v2326 = vunpack.c.l.b16 %v446
  %v2327 = vunpack.c.h.b16 %v446
  %v2328 = vunpack.c.l.b16 %v447
  %v2329 = vunpack.c.h.b16 %v447
  %v2330 = vunpack.c.l.b16 %v448
  %v2331 = vunpack.c.h.b16 %v448
  %v2332 = vunpack.c.l.b16 %v449
  %v2333 = vunpack.c.h.b16 %v449
  %v2334 = vunpack.c.l.b16 %v450
  %v2335 = vunpack.c.h.b16 %v450
  %v2336 = vunpack.c.l.b16 %v451
  %v2337 = vunpack.c.h.b16 %v451
  %v2338 = vunpack.c.l.b16 %v452
  %v2339 = vunpack.c.h.b16 %v452
  %v2340 = vunpack.c.l.b16 %v453
  %v2341 = vunpack.c.h.b16 %v453
  %v2342 = vunpack.c.l.b16 %v454
  %v2343 = vunpack.c.h.b16 %v454
  %v2344 = vunpack.c.l.b16 %v455
  %v2345 = vunpack.c.h.b16 %v455
  %v2346 = vunpack.c.l.b16 %v456
  %v2347 = vunpack.c.h.b16 %v456
  %v2348 = vunpack.c.l.b16 %v457
  %v2349 = vunpack.c.h.b16 %v457
  %v2350 = vunpack.c.l.b16 %v458
  %v2351 = vunpack.c.h.b16 %v458
  %v2352 = vunpack.c.l.b16 %v459
  %v2353 = vunpack.c.h.b16 %v459
  %v2354 = vunpack.c.l.b16 %v460
  %v2355 = vunpack.c.h.b16 %v460
  %v2356 = vunpack.c.l.b16 %v461
  %v2357 = vunpack.c.h.b16 %v461
  %v2358 = vunpack.c.l.b16 %v462
  %v2359 = vunpack.c.h.b16 %v462
  %v2360 = vunpack.c.l.b16 %v463
  %v2361 = vunpack.c.h.b16 %v463
  %v2362 = vunpack.c.l.b16 %v464
  %v2363 = vunpack.c.h.b16 %v464
  %v2364 = vunpack.c.l.b16 %v465
  %v2365 = vunpack.c.h.b16 %v465
  %v2366 = vunpack.c.l.b16 %v466
  %v2367 = vunpack.c.h.b16 %v466
  %v2368 = vunpack.c.l.b16 %v467
  %v2369 = vunpack.c.h.b16 %v467
  %v2370 = vunpack.c.l.b16 %v468
  %v2371 = vunpack.c.h.b16 %v468
  %v2372 = vunpack.c.l.b16 %v469
  %v2373 = vunpack.c.h.b16 %v469
  %v2374 = vunpack.c.l.b16 %v470
  %v2375 = vunpack.c.h.b16 %v470
  %v2376 = vunpack.c.l.b16 %v471
  %v2377 = vunpack.c.h.b16 %v471
  %v2378 = vunpack.c.l.b16 %v472
  %v2379 = vunpack.c.h.b16 %v472
  %v2380 = vunpack.c.l.b16 %v473
  %v2381 = vunpack.c.h.b16 %v473
  %v2382 = vunpack.c.l.b16 %v474
  %v2383 = vunpack.c.h.b16 %v474
  %v2384 = vunpack.c.l.b16 %v475
  %v2385 = vunpack.c.h.b16 %v475
  %v2386 = vunpack.c.l.b16 %v476
  %v2387 = vunpack.c.h.b16 %v476
  %v2388 = vunpack.c.l.b16 %v477
  %v2389 = vunpack.c.h.b16 %v477
  %v2390 = vunpack.c.l.b16 %v478
  %v2391 = vunpack.c.h.b16 %v478
  %v2392 = vunpack.c.l.b16 %v479
  %v2393 = vunpack.c.h.b16 %v479
  %v2394 = vunpack.c.l.b16 %v480
  %v2395 = vunpack.c.h.b16 %v480
  %v2396 = vunpack.c.l.b16 %v481
  %v2397 = vunpack.c.h.b16 %v481
  %v2398 = vunpack.c.l.b16 %v482
  %v2399 = vunpack.c.h.b16 %v482
  %v2400 = vunpack.c.l.b16 %v483
  %v2401 = vunpack.c.h.b16 %v483
  %v2402 = vunpack.c.l.b16 %v484
  %v2403 = vunpack.c.h.b16 %v484
  %v2404 = vunpack.c.l.b16 %v485
  %v2405 = vunpack.c.h.b16 %v485
  %v2406 = vunpack.c.l.b16 %v486
  %v2407 = vunpack.c.h.b16 %v486
  %v2408 = vunpack.c.l.b16 %v487
  %v2409 = vunpack.c.h.b16 %v487
  %v2410 = vunpack.c.l.b16 %v488
  %v2411 = vunpack.c.h.b16 %v488
  %v2412 = vunpack.c.l.b16 %v489
  %v2413 = vunpack.c.h.b16 %v489
  %v2414 = vunpack.c.l.b16 %v490
  %v2415 = vunpack.c.h.b16 %v490
  %v2416 = vunpack.c.l.b16 %v491
  %v2417 = vunpack.c.h.b16 %v491
  %v2418 = vunpack.c.l.b16 %v492
  %v2419 = vunpack.c.h.b16 %v492
  %v2420 = vunpack.c.l.b16 %v493
  %v2421 = vunpack.c.h.b16 %v493
  %v2422 = vunpack.c.l.b16 %v494
  %v2423 = vunpack.c.h.b16 %v494
  %v2424 = vunpack.c.l.b16 %v495
  %v2425 = vunpack.c.h.b16 %v495
  %v2426 = vunpack.c.l.b16 %v496
  %v2427 = vunpack.c.h.b16 %v496
  %v2428 = vunpack.c.l.b16 %v497
  %v2429 = vunpack.c.h.b16 %v497
  %v2430 = vunpack.c.l.b16 %v498
  %v2431 = vunpack.c.h.b16 %v498
  %v2432 = vunpack.c.l.b16 %v499
  %v2433 = vunpack.c.h.b16 %v499
  %v2434 = vunpack.c.l.b16 %v500
  %v2435 = vunpack.c.h.b16 %v500
  %v2436 = vunpack.c.l.b16 %v501
  %v2437 = vunpack.c.h.b16 %v501
  %v2438 = vunpack.c.l.b16 %v502
  %v2439 = vunpack.c.h.b16 %v502
  %v2440 = vunpack.c.l.b16 %v503
  %v2441 = vunpack.c.h.b16 %v503
  %v2442 = vunpack.c.l.b16 %v504
  %v2443 = vunpack.c.h.b16 %v504
  %v2444 = vunpack.c.l.b16 %v505
  %v2445 = vunpack.c.h.b16 %v505
  %v2446 = vunpack.c.l.b16 %v506
  %v2447 = vunpack.c.h.b16 %v506
  %v2448 = vunpack.c.l.b16 %v507
  %v2449 = vunpack.c.h.b16 %v507
  %v2450 = vunpack.c.l.b16 %v508
  %v2451 = vunpack.c.h.b16 %v508
  %v2452 = vunpack.c.l.b16 %v509
  %v2453 = vunpack.c.h.b16 %v509
  %v2454 = vunpack.c.l.b16 %v510
  %v2455 = vunpack.c.h.b16 %v510
  %v2456 = vunpack.c.l.b16 %v511
  %v2457 = vunpack.c.h.b16 %v511
  %v2458 = vunpack.c.l.b16 %v512
  %v2459 = vunpack.c.h.b16 %v512
  %v2460 = vunpack.c.l.b16 %v513
  %v2461 = vunpack.c.h.b16 %v513
  %v2462 = vunpack.c.l.b16 %v514
  %v2463 = vunpack.c.h.b16 %v514
  %v2464 = vunpack.c.l.b16 %v515
  %v2465 = vunpack.c.h.b16 %v515
  %v2466 = vunpack.c.l.b16 %v516
  %v2467 = vunpack.c.h.b16 %v516
  %v2468 = vunpack.c.l.b16 %v517
  %v2469 = vunpack.c.h.b16 %v517
  %v2470 = vunpack.c.l.b16 %v518
  %v2471 = vunpack.c.h.b16 %v518
  %v2472 = vunpack.c.l.b16 %v519
  %v2473 = vunpack.c.h.b16 %v519
  %v2474 = vunpack.c.l.b16 %v520
  %v2475 = vunpack.c.h.b16 %v520
  %v2476 = vunpack.c.l.b16 %v521
  %v2477 = vunpack.c.h.b16 %v521
  %v2478 = vunpack.c.l.b16 %v522
  %v2479 = vunpack.c.h.b16 %v522
  %v2480 = vunpack.c.l.b16 %v523
  %v2481 = vunpack.c.h.b16 %v523
  %v2482 = vunpack.c.l.b16 %v524
  %v2483 = vunpack.c.h.b16 %v524
  %v2484 = vunpack.c.l.b16 %v525
  %v2485 = vunpack.c.h.b16 %v525
  %v2486 = vunpack.c.l.b16 %v526
  %v2487 = vunpack.c.h.b16 %v526
  %v2488 = vunpack.c.l.b16 %v527
  %v2489 = vunpack.c.h.b16 %v527
  %v2490 = vunpack.c.l.b16 %v528
  %v2491 = vunpack.c.h.b16 %v528
  %v2492 = vunpack.c.l.b16 %v529
  %v2493 = vunpack.c.h.b16 %v529
  %v2494 = vunpack.c.l.b16 %v530
  %v2495 = vunpack.c.h.b16 %v530
  %v2496 = vunpack.c.l.b16 %v531
  %v2497 = vunpack.c.h.b16 %v531
  %v2498 = vunpack.c.l.b16 %v532
  %v2499 = vunpack.c.h.b16 %v532
  %v2500 = vunpack.c.l.b16 %v533
  %v2501 = vunpack.c.h.b16 %v533
  %v2502 = vunpack.c.l.b16 %v534
  %v2503 = vunpack.c.h.b16 %v534
  %v2504 = vunpack.c.l.b16 %v535
  %v2505 = vunpack.c.h.b16 %v535
  %v2506 = vunpack.c.l.b16 %v536
  %v2507 = vunpack.c.h.b16 %v536
  %v2508 = vunpack.c.l.b16 %v537
  %v2509 = vunpack.c.h.b16 %v537
  %v2510 = vunpack.c.l.b16 %v538
  %v2511 = vunpack.c.h.b16 %v538
  %v2512 = vunpack.c.l.b16 %v539
  %v2513 = vunpack.c.h.b16 %v539
  %v2514 = vunpack.c.l.b16 %v540
  %v2515 = vunpack.c.h.b16 %v540
  %v2516 = vunpack.c.l.b16 %v541
  %v2517 = vunpack.c.h.b16 %v541
  %v2518 = vunpack.c.l.b16 %v542
  %v2519 = vunpack.c.h.b16 %v542
  %v2520 = vunpack.c.l.b16 %v543
  %v2521 = vunpack.c.h.b16 %v543
  %v2522 = vunpack.c.l.b16 %v544
  %v2523 = vunpack.c.h.b16 %v544
  %v2524 = vunpack.c.l.b16 %v545
  %v2525 = vunpack.c.h.b16 %v545
  %v2526 = vunpack.c.l.b16 %v546
  %v2527 = vunpack.c.h.b16 %v546
  %v2528 = vunpack.c.l.b16 %v547
  %v2529 = vunpack.c.h.b16 %v547
  %v2530 = vunpack.c.l.b16 %v548
  %v2531 = vunpack.c.h.b16 %v548
  %v2532 = vunpack.c.l.b16 %v549
  %v2533 = vunpack.c.h.b16 %v549
  %v2534 = vunpack.c.l.b16 %v550
  %v2535 = vunpack.c.h.b16 %v550
  %v2536 = vunpack.c.l.b16 %v551
  %v2537 = vunpack.c.h.b16 %v551
  %v2538 = vunpack.c.l.b16 %v552
  %v2539 = vunpack.c.h.b16 %v552
  %v2540 = vunpack.c.l.b16 %v553
  %v2541 = vunpack.c.h.b16 %v553
  %v2542 = vunpack.c.l.b16 %v554
  %v2543 = vunpack.c.h.b16 %v554
  %v2544 = vunpack.c.l.b16 %v555
  %v2545 = vunpack.c.h.b16 %v555
  %v2546 = vunpack.c.l.b16 %v556
  %v2547 = vunpack.c.h.b16 %v556
  %v2548 = vunpack.c.l.b16 %v557
  %v2549 = vunpack.c.h.b16 %v557
  %v2550 = vunpack.c.l.b16 %v558
  %v2551 = vunpack.c.h.b16 %v558
  %v2552 = vunpack.c.l.b16 %v559
  %v2553 = vunpack.c.h.b16 %v559
  %v2554 = vunpack.c.l.b16 %v560
  %v2555 = vunpack.c.h.b16 %v560
  %v2556 = vunpack.c.l.b16 %v561
  %v2557 = vunpack.c.h.b16 %v561
  %v2558 = vunpack.c.l.b16 %v562
  %v2559 = vunpack.c.h.b16 %v562
  %v2560 = vunpack.c.l.b16 %v563
  %v2561 = vunpack.c.h.b16 %v563
  %v2562 = vunpack.c.l.b16 %v564
  %v2563 = vunpack.c.h.b16 %v564
  %v2564 = vunpack.c.l.b16 %v565
  %v2565 = vunpack.c.h.b16 %v565
  %v2566 = vunpack.c.l.b16 %v566
  %v2567 = vunpack.c.h.b16 %v566
  %v2568 = vunpack.c.l.b16 %v567
  %v2569 = vunpack.c.h.b16 %v567
  %v2570 = vunpack.c.l.b16 %v568
  %v2571 = vunpack.c.h.b16 %v568
  %v2572 = vunpack.c.l.b16 %v569
  %v2573 = vunpack.c.h.b16 %v569
  %v2574 = vunpack.c.l.b16 %v570
  %v2575 = vunpack.c.h.b16 %v570
  %v2576 = vunpack.c.l.b16 %v571
  %v2577 = vunpack.c.h.b16 %v571
  %v2578 = vunpack.c.l.b16 %v572
  %v2579 = vunpack.c.h.b16 %v572
  %v2580 = vunpack.c.l.b16 %v573
  %v2581 = vunpack.c.h.b16 %v573
  %v2582 = vunpack.c.l.b16 %v574
  %v2583 = vunpack.c.h.b16 %v574
  %v2584 = vunpack.c.l.b16 %v575
  %v2585 = vunpack.c.h.b16 %v575
  %v2586 = vunpack.c.l.b16 %v576
  %v2587 = vunpack.c.h.b16 %v576
  %v2588 = vunpack.c.l.b16 %v577
  %v2589 = vunpack.c.h.b16 %v577
  %v2590 = vunpack.c.l.b16 %v578
  %v2591 = vunpack.c.h.b16 %v578
  %v2592 = vunpack.c.l.b16 %v579
  %v2593 = vunpack.c.h.b16 %v579
  %v2594 = vunpack.c.l.b16 %v580
  %v2595 = vunpack.c.h.b16 %v580
  %v2596 = vunpack.c.l.b16 %v581
  %v2597 = vunpack.c.h.b16 %v581
  %v2598 = vunpack.c.l.b16 %v582
  %v2599 = vunpack.c.h.b16 %v582
  %v2600 = vunpack.c.l.b16 %v583
  %v2601 = vunpack.c.h.b16 %v583
  %v2602 = vunpack.c.l.b16 %v584
  %v2603 = vunpack.c.h.b16 %v584
  %v2604 = vunpack.c.l.b16 %v585
  %v2605 = vunpack.c.h.b16 %v585
  %v2606 = vunpack.c.l.b16 %v586
  %v2607 = vunpack.c.h.b16 %v586
  %v2608 = vunpack.c.l.b16 %v587
  %v2609 = vunpack.c.h.b16 %v587
  %v2610 = vunpack.c.l.b16 %v588
  %v2611 = vunpack.c.h.b16 %v588
  %v2612 = vunpack.c.l.b16 %v589
  %v2613 = vunpack.c.h.b16 %v589
  %v2614 = vunpack.c.l.b16 %v590
  %v2615 = vunpack.c.h.b16 %v590
  %v2616 = vunpack.c.l.b16 %v591
  %v2617 = vunpack.c.h.b16 %v591
  %v2618 = vunpack.c.l.b16 %v592
  %v2619 = vunpack.c.h.b16 %v592
  %v2620 = vunpack.c.l.b16 %v593
  %v2621 = vunpack.c.h.b16 %v593
  %v2622 = vunpack.c.l.b16 %v594
  %v2623 = vunpack.c.h.b16 %v594
  %v2624 = vunpack.c.l.b16 %v595
  %v2625 = vunpack.c.h.b16 %v595
  %v2626 = vunpack.c.l.b16 %v596
  %v2627 = vunpack.c.h.b16 %v596
  %v2628 = vunpack.c.l.b16 %v597
  %v2629 = vunpack.c.h.b16 %v597
  %v2630 = vunpack.c.l.b16 %v598
  %v2631 = vunpack.c.h.b16 %v598
  %v2632 = vunpack.c.l.b16 %v599
  %v2633 = vunpack.c.h.b16 %v599
  %v2634 = vunpack.c.l.b16 %v600
  %v2635 = vunpack.c.h.b16 %v600
  %v2636 = vunpack.c.l.b16 %v601
  %v2637 = vunpack.c.h.b16 %v601
  %v2638 = vunpack.c.l.b16 %v602
  %v2639 = vunpack.c.h.b16 %v602
  %v2640 = vunpack.c.l.b16 %v603
  %v2641 = vunpack.c.h.b16 %v603
  %v2642 = vunpack.c.l.b16 %v604
  %v2643 = vunpack.c.h.b16 %v604
  %v2644 = vunpack.c.l.b16 %v605
  %v2645 = vunpack.c.h.b16 %v605
  %v2646 = vunpack.c.l.b16 %v606
  %v2647 = vunpack.c.h.b16 %v606
  %v2648 = vunpack.c.l.b16 %v607
  %v2649 = vunpack.c.h.b16 %v607
  %v2650 = vunpack.c.l.b16 %v608
  %v2651 = vunpack.c.h.b16 %v608
  %v2652 = vunpack.c.l.b16 %v609
  %v2653 = vunpack.c.h.b16 %v609
  %v2654 = vunpack.c.l.b16 %v610
  %v2655 = vunpack.c.h.b16 %v610
  %v2656 = vunpack.c.l.b16 %v611
  %v2657 = vunpack.c.h.b16 %v611
  %v2658 = vunpack.c.l.b16 %v612
  %v2659 = vunpack.c.h.b16 %v612
  %v2660 = vunpack.c.l.b16 %v613
  %v2661 = vunpack.c.h.b16 %v613
  %v2662 = vunpack.c.l.b16 %v614
  %v2663 = vunpack.c.h.b16 %v614
  %v2664 = vunpack.c.l.b16 %v615
  %v2665 = vunpack.c.h.b16 %v615
  %v2666 = vunpack.c.l.b16 %v616
  %v2667 = vunpack.c.h.b16 %v616
  %v2668 = vunpack.c.l.b16 %v617
  %v2669 = vunpack.c.h.b16 %v617
  %v2670 = vunpack.c.l.b16 %v618
  %v2671 = vunpack.c.h.b16 %v618
  %v2672 = vunpack.c.l.b16 %v619
  %v2673 = vunpack.c.h.b16 %v619
  %v2674 = vunpack.c.l.b16 %v620
  %v2675 = vunpack.c.h.b16 %v620
  %v2676 = vunpack.c.l.b16 %v621
  %v2677 = vunpack.c.h.b16 %v621
  %v2678 = vunpack.c.l.b16 %v622
  %v2679 = vunpack.c.h.b16 %v622
  %v2680 = vunpack.c.l.b16 %v623
  %v2681 = vunpack.c.h.b16 %v623
  %v2682 = vunpack.c.l.b16 %v624
  %v2683 = vunpack.c.h.b16 %v624
  %v2684 = vunpack.c.l.b16 %v625
  %v2685 = vunpack.c.h.b16 %v625
  %v2686 = vunpack.c.l.b16 %v626
  %v2687 = vunpack.c.h.b16 %v626
  %v2688 = vunpack.c.l.b16 %v627
  %v2689 = vunpack.c.h.b16 %v627
  %v2690 = vunpack.c.l.b16 %v628
  %v2691 = vunpack.c.h.b16 %v628
  %v2692 = vunpack.c.l.b16 %v629
  %v2693 = vunpack.c.h.b16 %v629
  %v2694 = vunpack.c.l.b16 %v630
  %v2695 = vunpack.c.h.b16 %v630
  %v2696 = vunpack.c.l.b16 %v631
  %v2697 = vunpack.c.h.b16 %v631
  %v2698 = vunpack.c.l.b16 %v632
  %v2699 = vunpack.c.h.b16 %v632
  %v2700 = vunpack.c.l.b16 %v633
  %v2701 = vunpack.c.h.b16 %v633
  %v2702 = vunpack.c.l.b16 %v634
  %v2703 = vunpack.c.h.b16 %v634
  %v2704 = vunpack.c.l.b16 %v635
  %v2705 = vunpack.c.h.b16 %v635
  %v2706 = vunpack.c.l.b16 %v636
  %v2707 = vunpack.c.h.b16 %v636
  %v2708 = vunpack.c.l.b16 %v637
  %v2709 = vunpack.c.h.b16 %v637
  %v2710 = vunpack.c.l.b16 %v638
  %v2711 = vunpack.c.h.b16 %v638
  %v2712 = vunpack.c.l.b16 %v639
  %v2713 = vunpack.c.h.b16 %v639
  %v2714 = vunpack.c.l.b16 %v640
  %v2715 = vunpack.c.h.b16 %v640
  %v2716 = vunpack.c.l.b16 %v641
  %v2717 = vunpack.c.h.b16 %v641
  %v2718 = vunpack.c.l.b16 %v642
  %v2719 = vunpack.c.h.b16 %v642
  %v2720 = vunpack.c.l.b16 %v643
  %v2721 = vunpack.c.h.b16 %v643
  %v2722 = vunpack.c.l.b16 %v644
  %v2723 = vunpack.c.h.b16 %v644
  %v2724 = vunpack.c.l.b16 %v645
  %v2725 = vunpack.c.h.b16 %v645
  %v2726 = vunpack.c.l.b16 %v646
  %v2727 = vunpack.c.h.b16 %v646
  %v2728 = vunpack.c.l.b16 %v647
  %v2729 = vunpack.c.h.b16 %v647
  %v2730 = vunpack.c.l.b16 %v648
  %v2731 = vunpack.c.h.b16 %v648
  %v2732 = vunpack.c.l.b16 %v649
  %v2733 = vunpack.c.h.b16 %v649
  %v2734 = vunpack.c.l.b16 %v650
  %v2735 = vunpack.c.h.b16 %v650
  %v2736 = vunpack.c.l.b16 %v651
  %v2737 = vunpack.c.h.b16 %v651
  %v2738 = vunpack.c.l.b16 %v652
  %v2739 = vunpack.c.h.b16 %v652
  %v2740 = vunpack.c.l.b16 %v653
  %v2741 = vunpack.c.h.b16 %v653
  %v2742 = vunpack.c.l.b16 %v654
  %v2743 = vunpack.c.h.b16 %v654
  %v2744 = vunpack.c.l.b16 %v655
  %v2745 = vunpack.c.h.b16 %v655
  %v2746 = vunpack.c.l.b16 %v656
  %v2747 = vunpack.c.h.b16 %v656
  %v2748 = vunpack.c.l.b16 %v657
  %v2749 = vunpack.c.h.b16 %v657
  %v2750 = vunpack.c.l.b16 %v658
  %v2751 = vunpack.c.h.b16 %v658
  %v2752 = vunpack.c.l.b16 %v659
  %v2753 = vunpack.c.h.b16 %v659
  %v2754 = vunpack.c.l.b16 %v660
  %v2755 = vunpack.c.h.b16 %v660
  %v2756 = vunpack.c.l.b16 %v661
  %v2757 = vunpack.c.h.b16 %v661
  %v2758 = vunpack.c.l.b16 %v662
  %v2759 = vunpack.c.h.b16 %v662
  %v2760 = vunpack.c.l.b16 %v663
  %v2761 = vunpack.c.h.b16 %v663
  %v2762 = vunpack.c.l.b16 %v664
  %v2763 = vunpack.c.h.b16 %v664
  %v2764 = vunpack.c.l.b16 %v665
  %v2765 = vunpack.c.h.b16 %v665
  %v2766 = vunpack.c.l.b16 %v666
  %v2767 = vunpack.c.h.b16 %v666
  %v2768 = vunpack.c.l.b16 %v667
  %v2769 = vunpack.c.h.b16 %v667
  %v2770 = vunpack.c.l.b16 %v668
  %v2771 = vunpack.c.h.b16 %v668
  %v2772 = vunpack.c.l.b16 %v669
  %v2773 = vunpack.c.h.b16 %v669
  %v2774 = vunpack.c.l.b16 %v670
  %v2775 = vunpack.c.h.b16 %v670
  %v2776 = vunpack.c.l.b16 %v671
  %v2777 = vunpack.c.h.b16 %v671
  %v2778 = vunpack.c.l.b16 %v672
  %v2779 = vunpack.c.h.b16 %v672
  %v2780 = vunpack.c.l.b16 %v673
  %v2781 = vunpack.c.h.b16 %v673
  %v2782 = vunpack.c.l.b16 %v674
  %v2783 = vunpack.c.h.b16 %v674
  %v2784 = vunpack.c.l.b16 %v675
  %v2785 = vunpack.c.h.b16 %v675
  %v2786 = vunpack.c.l.b16 %v676
  %v2787 = vunpack.c.h.b16 %v676
  %v2788 = vunpack.c.l.b16 %v677
  %v2789 = vunpack.c.h.b16 %v677
  %v2790 = vunpack.c.l.b16 %v678
  %v2791 = vunpack.c.h.b16 %v678
  %v2792 = vunpack.c.l.b16 %v679
  %v2793 = vunpack.c.h.b16 %v679
  %v2794 = vunpack.c.l.b16 %v680
  %v2795 = vunpack.c.h.b16 %v680
  %v2796 = vunpack.c.l.b16 %v681
  %v2797 = vunpack.c.h.b16 %v681
  %v2798 = vunpack.c.l.b16 %v682
  %v2799 = vunpack.c.h.b16 %v682
  %v2800 = vunpack.c.l.b16 %v683
  %v2801 = vunpack.c.h.b16 %v683
  %v2802 = vunpack.c.l.b16 %v684
  %v2803 = vunpack.c.h.b16 %v684
  %v2804 = vunpack.c.l.b16 %v685
  %v2805 = vunpack.c.h.b16 %v685
  %v2806 = vunpack.c.l.b16 %v686
  %v2807 = vunpack.c.h.b16 %v686
  %v2808 = vunpack.c.l.b16 %v687
  %v2809 = vunpack.c.h.b16 %v687
  %v2810 = vunpack.c.l.b16 %v688
  %v2811 = vunpack.c.h.b16 %v688
  %v2812 = vunpack.c.l.b16 %v689
  %v2813 = vunpack.c.h.b16 %v689
  %v2814 = vunpack.c.l.b16 %v690
  %v2815 = vunpack.c.h.b16 %v690
  %v2816 = vunpack.c.l.b16 %v691
  %v2817 = vunpack.c.h.b16 %v691
  %v2818 = vunpack.c.l.b16 %v692
  %v2819 = vunpack.c.h.b16 %v692
  %v2820 = vunpack.c.l.b16 %v693
  %v2821 = vunpack.c.h.b16 %v693
  %v2822 = vunpack.c.l.b16 %v694
  %v2823 = vunpack.c.h.b16 %v694
  %v2824 = vunpack.c.l.b16 %v695
  %v2825 = vunpack.c.h.b16 %v695
  %v2826 = vunpack.c.l.b16 %v696
  %v2827 = vunpack.c.h.b16 %v696
  %v2828 = vunpack.c.l.b16 %v697
  %v2829 = vunpack.c.h.b16 %v697
  %v2830 = vunpack.c.l.b16 %v698
  %v2831 = vunpack.c.h.b16 %v698
  %v2832 = vunpack.c.l.b16 %v699
  %v2833 = vunpack.c.h.b16 %v699
  %v2834 = vunpack.c.l.b16 %v700
  %v2835 = vunpack.c.h.b16 %v700
  %v2836 = vunpack.c.l.b16 %v701
  %v2837 = vunpack.c.h.b16 %v701
  %v2838 = vunpack.c.l.b16 %v702
  %v2839 = vunpack.c.h.b16 %v702
  %v2840 = vunpack.c.l.b16 %v703
  %v2841 = vunpack.c.h.b16 %v703
  %v2842 = vunpack.c.l.b16 %v704
  %v2843 = vunpack.c.h.b16 %v704
  %v2844 = vunpack.c.l.b16 %v705
  %v2845 = vunpack.c.h.b16 %v705
  %v2846 = vunpack.c.l.b16 %v706
  %v2847 = vunpack.c.h.b16 %v706
  %v2848 = vunpack.c.l.b16 %v707
  %v2849 = vunpack.c.h.b16 %v707
  %v2850 = vunpack.c.l.b16 %v708
  %v2851 = vunpack.c.h.b16 %v708
  %v2852 = vunpack.c.l.b16 %v709
  %v2853 = vunpack.c.h.b16 %v709
  %v2854 = vunpack.c.l.b16 %v710
  %v2855 = vunpack.c.h.b16 %v710
  %v2856 = vunpack.c.l.b16 %v711
  %v2857 = vunpack.c.h.b16 %v711
  %v2858 = vunpack.c.l.b16 %v712
  %v2859 = vunpack.c.h.b16 %v712
  %v2860 = vunpack.c.l.b16 %v713
  %v2861 = vunpack.c.h.b16 %v713
  %v2862 = vunpack.c.l.b16 %v714
  %v2863 = vunpack.c.h.b16 %v714
  %v2864 = vunpack.c.l.b16 %v715
  %v2865 = vunpack.c.h.b16 %v715
  %v2866 = vunpack.c.l.b16 %v716
  %v2867 = vunpack.c.h.b16 %v716
  %v2868 = vunpack.c.l.b16 %v717
  %v2869 = vunpack.c.h.b16 %v717
  %v2870 = vunpack.c.l.b16 %v718
  %v2871 = vunpack.c.h.b16 %v718
  %v2872 = vunpack.c.l.b16 %v719
  %v2873 = vunpack.c.h.b16 %v719
  %v2874 = vunpack.c.l.b16 %v720
  %v2875 = vunpack.c.h.b16 %v720
  %v2876 = vunpack.c.l.b16 %v721
  %v2877 = vunpack.c.h.b16 %v721
  %v2878 = vunpack.c.l.b16 %v722
  %v2879 = vunpack.c.h.b16 %v722
  %v2880 = vunpack.c.l.b16 %v723
  %v2881 = vunpack.c.h.b16 %v723
  %v2882 = vunpack.c.l.b16 %v724
  %v2883 = vunpack.c.h.b16 %v724
  %v2884 = vunpack.c.l.b16 %v725
  %v2885 = vunpack.c.h.b16 %v725
  %v2886 = vunpack.c.l.b16 %v726
  %v2887 = vunpack.c.h.b16 %v726
  %v2888 = vunpack.c.l.b16 %v727
  %v2889 = vunpack.c.h.b16 %v727
  %v2890 = vunpack.c.l.b16 %v728
  %v2891 = vunpack.c.h.b16 %v728
  %v2892 = vunpack.c.l.b16 %v729
  %v2893 = vunpack.c.h.b16 %v729
  %v2894 = vunpack.c.l.b16 %v730
  %v2895 = vunpack.c.h.b16 %v730
  %v2896 = vunpack.c.l.b16 %v731
  %v2897 = vunpack.c.h.b16 %v731
  %v2898 = vunpack.c.l.b16 %v732
  %v2899 = vunpack.c.h.b16 %v732
  %v2900 = vunpack.c.l.b16 %v733
  %v2901 = vunpack.c.h.b16 %v733
  %v2902 = vpack.c.b16 %v1502, %v1494
  %v2903 = vpack.c.b16 %v1503, %v1495
  %v2904 = vpack.c.b16 %v1504, %v1496
  %v2905 = vpack.c.b16 %v1505, %v1497
  %v2906 = vpack.c.b16 %v1506, %v1498
  %v2907 = vpack.c.b16 %v1507, %v1499
  %v2908 = vpack.c.b16 %v1508, %v1500
  %v2909 = vpack.c.b16 %v1509, %v1501
  %v2910 = vpack.c.b16 %v1518, %v1510
  %v2911 = vpack.c.b16 %v1519, %v1511
  %v2912 = vpack.c.b16 %v1520, %v1512
  %v2913 = vpack.c.b16 %v1521, %v1513
  %v2914 = vpack.c.b16 %v1522, %v1514
  %v2915 = vpack.c.b16 %v1523, %v1515
  %v2916 = vpack.c.b16 %v1524, %v1516
  %v2917 = vpack.c.b16 %v1525, %v1517
  %v2918 = vpack.c.b16 %v1534, %v1526
  %v2919 = vpack.c.b16 %v1535, %v1527
  %v2920 = vpack.c.b16 %v1536, %v1528
  %v2921 = vpack.c.b16 %v1537, %v1529
  %v2922 = vpack.c.b16 %v1538, %v1530
  %v2923 = vpack.c.b16 %v1539, %v1531
  %v2924 = vpack.c.b16 %v1540, %v1532
  %v2925 = vpack.c.b16 %v1541, %v1533
  %v2926 = vpack.c.b16 %v1550, %v1542
  %v2927 = vpack.c.b16 %v1551, %v1543
  %v2928 = vpack.c.b16 %v1552, %v1544
  %v2929 = vpack.c.b16 %v1553, %v1545
  %v2930 = vpack.c.b16 %v1554, %v1546
  %v2931 = vpack.c.b16 %v1555, %v1547
  %v2932 = vpack.c.b16 %v1556, %v1548
  %v2933 = vpack.c.b16 %v1557, %v1549
  %v2934 = vpack.c.b16 %v1566, %v1558
  %v2935 = vpack.c.b16 %v1567, %v1559
  %v2936 = vpack.c.b16 %v1568, %v1560
  %v2937 = vpack.c.b16 %v1569, %v1561
  %v2938 = vpack.c.b16 %v1570, %v1562
  %v2939 = vpack.c.b16 %v1571, %v1563
  %v2940 = vpack.c.b16 %v1572, %v1564
  %v2941 = vpack.c.b16 %v1573, %v1565
  %v2942 = vpack.c.b16 %v1582, %v1574
  %v2943 = vpack.c.b16 %v1583, %v1575
  %v2944 = vpack.c.b16 %v1584, %v1576
  %v2945 = vpack.c.b16 %v1585, %v1577
  %v2946 = vpack.c.b16 %v1586, %v1578
  %v2947 = vpack.c.b16 %v1587, %v1579
  %v2948 = vpack.c.b16 %v1588, %v1580
  %v2949 = vpack.c.b16 %v1589, %v1581
  %v2950 = vpack.c.b16 %v1598, %v1590
  %v2951 = vpack.c.b16 %v1599, %v1591
  %v2952 = vpack.c.b16 %v1600, %v1592
  %v2953 = vpack.c.b16 %v1601, %v1593
  %v2954 = vpack.c.b16 %v1602, %v1594
  %v2955 = vpack.c.b16 %v1603, %v1595
  %v2956 = vpack.c.b16 %v1604, %v1596
  %v2957 = vpack.c.b16 %v1605, %v1597
  %v2958 = vpack.c.b16 %v1614, %v1606
  %v2959 = vpack.c.b16 %v1615, %v1607
  %v2960 = vpack.c.b16 %v1616, %v1608
  %v2961 = vpack.c.b16 %v1617, %v1609
  %v2962 = vpack.c.b16 %v1618, %v1610
  %v2963 = vpack.c.b16 %v1619, %v1611
  %v2964 = vpack.c.b16 %v1620, %v1612
  %v2965 = vpack.c.b16 %v1621, %v1613
  %v2966 = vpack.c.b16 %v1630, %v1622
  %v2967 = vpack.c.b16 %v1631, %v1623
  %v2968 = vpack.c.b16 %v1632, %v1624
  %v2969 = vpack.c.b16 %v1633, %v1625
  %v2970 = vpack.c.b16 %v1634, %v1626
  %v2971 = vpack.c.b16 %v1635, %v1627
  %v2972 = vpack.c.b16 %v1636, %v1628
  %v2973 = vpack.c.b16 %v1637, %v1629
  %v2974 = vpack.c.b16 %v1646, %v1638
  %v2975 = vpack.c.b16 %v1647, %v1639
  %v2976 = vpack.c.b16 %v1648, %v1640
  %v2977 = vpack.c.b16 %v1649, %v1641
  %v2978 = vpack.c.b16 %v1650, %v1642
  %v2979 = vpack.c.b16 %v1651, %v1643
  %v2980 = vpack.c.b16 %v1652, %v1644
  %v2981 = vpack.c.b16 %v1653, %v1645
  %v2982 = vpack.c.b16 %v1662, %v1654
  %v2983 = vpack.c.b16 %v1663, %v1655
  %v2984 = vpack.c.b16 %v1664, %v1656
  %v2985 = vpack.c.b16 %v1665, %v1657
  %v2986 = vpack.c.b16 %v1666, %v1658
  %v2987 = vpack.c.b16 %v1667, %v1659
  %v2988 = vpack.c.b16 %v1668, %v1660
  %v2989 = vpack.c.b16 %v1669, %v1661
  %v2990 = vpack.c.b16 %v1678, %v1670
  %v2991 = vpack.c.b16 %v1679, %v1671
  %v2992 = vpack.c.b16 %v1680, %v1672
  %v2993 = vpack.c.b16 %v1681, %v1673
  %v2994 = vpack.c.b16 %v1682, %v1674
  %v2995 = vpack.c.b16 %v1683, %v1675
  %v2996 = vpack.c.b16 %v1684, %v1676
  %v2997 = vpack.c.b16 %v1685, %v1677
  %v2998 = vpack.c.b16 %v1694, %v1686
  %v2999 = vpack.c.b16 %v1695, %v1687
  %v3000 = vpack.c.b16 %v1696, %v1688
  %v3001 = vpack.c.b16 %v1697, %v1689
  %v3002 = vpack.c.b16 %v1698, %v1690
  %v3003 = vpack.c.b16 %v1699, %v1691
  %v3004 = vpack.c.b16 %v1700, %v1692
  %v3005 = vpack.c.b16 %v1701, %v1693
  %v3006 = vpack.c.b16 %v1710, %v1702
  %v3007 = vpack.c.b16 %v1711, %v1703
  %v3008 = vpack.c.b16 %v1712, %v1704
  %v3009 = vpack.c.b16 %v1713, %v1705
  %v3010 = vpack.c.b16 %v1714, %v1706
  %v3011 = vpack.c.b16 %v1715, %v1707
  %v3012 = vpack.c.b16 %v1716, %v1708
  %v3013 = vpack.c.b16 %v1717, %v1709
  %v3014 = vpack.c.b16 %v1726, %v1718
  %v3015 = vpack.c.b16 %v1727, %v1719
  %v3016 = vpack.c.b16 %v1728, %v1720
  %v3017 = vpack.c.b16 %v1729, %v1721
  %v3018 = vpack.c.b16 %v1730, %v1722
  %v3019 = vpack.c.b16 %v1731, %v1723
  %v3020 = vpack.c.b16 %v1732, %v1724
  %v3021 = vpack.c.b16 %v1733, %v1725
  %v3022 = vpack.c.b16 %v1742, %v1734
  %v3023 = vpack.c.b16 %v1743, %v1735
  %v3024 = vpack.c.b16 %v1744, %v1736
  %v3025 = vpack.c.b16 %v1745, %v1737
  %v3026 = vpack.c.b16 %v1746, %v1738
  %v3027 = vpack.c.b16 %v1747, %v1739
  %v3028 = vpack.c.b16 %v1748, %v1740
  %v3029 = vpack.c.b16 %v1749, %v1741
  %v3030 = vpack.c.b16 %v1758, %v1750
  %v3031 = vpack.c.b16 %v1759, %v1751
  %v3032 = vpack.c.b16 %v1760, %v1752
  %v3033 = vpack.c.b16 %v1761, %v1753
  %v3034 = vpack.c.b16 %v1762, %v1754
  %v3035 = vpack.c.b16 %v1763, %v1755
  %v3036 = vpack.c.b16 %v1764, %v1756
  %v3037 = vpack.c.b16 %v1765, %v1757
  %v3038 = vpack.c.b16 %v1774, %v1766
  %v3039 = vpack.c.b16 %v1775, %v1767
  %v3040 = vpack.c.b16 %v1776, %v1768
  %v3041 = vpack.c.b16 %v1777, %v1769
  %v3042 = vpack.c.b16 %v1778, %v1770
  %v3043 = vpack.c.b16 %v1779, %v1771
  %v3044 = vpack.c.b16 %v1780, %v1772
  %v3045 = vpack.c.b16 %v1781, %v1773
  %v3046 = vpack.c.b16 %v1790, %v1782
  %v3047 = vpack.c.b16 %v1791, %v1783
  %v3048 = vpack.c.b16 %v1792, %v1784
  %v3049 = vpack.c.b16 %v1793, %v1785
  %v3050 = vpack.c.b16 %v1794, %v1786
  %v3051 = vpack.c.b16 %v1795, %v1787
  %v3052 = vpack.c.b16 %v1796, %v1788
  %v3053 = vpack.c.b16 %v1797, %v1789
  %v3054 = vpack.c.b16 %v1806, %v1798
  %v3055 = vpack.c.b16 %v1807, %v1799
  %v3056 = vpack.c.b16 %v1808, %v1800
  %v3057 = vpack.c.b16 %v1809, %v1801
  %v3058 = vpack.c.b16 %v1810, %v1802
  %v3059 = vpack.c.b16 %v1811, %v1803
  %v3060 = vpack.c.b16 %v1812, %v1804
  %v3061 = vpack.c.b16 %v1813, %v1805
  %v3062 = vpack.c.b16 %v1822, %v1814
  %v3063 = vpack.c.b16 %v1823, %v1815
  %v3064 = vpack.c.b16 %v1824, %v1816
  %v3065 = vpack.c.b16 %v1825, %v1817
  %v3066 = vpack.c.b16 %v1826, %v1818
  %v3067 = vpack.c.b16 %v1827, %v1819
  %v3068 = vpack.c.b16 %v1828, %v1820
  %v3069 = vpack.c.b16 %v1829, %v1821
  %v3070 = vpack.c.b16 %v1838, %v1830
  %v3071 = vpack.c.b16 %v1839, %v1831
  %v3072 = vpack.c.b16 %v1840, %v1832
  %v3073 = vpack.c.b16 %v1841, %v1833
  %v3074 = vpack.c.b16 %v1842, %v1834
  %v3075 = vpack.c.b16 %v1843, %v1835
  %v3076 = vpack.c.b16 %v1844, %v1836
  %v3077 = vpack.c.b16 %v1845, %v1837
  %v3078 = vpack.c.b16 %v1854, %v1846
  %v3079 = vpack.c.b16 %v1855, %v1847
  %v3080 = vpack.c.b16 %v1856, %v1848
  %v3081 = vpack.c.b16 %v1857, %v1849
  %v3082 = vpack.c.b16 %v1858, %v1850
  %v3083 = vpack.c.b16 %v1859, %v1851
  %v3084 = vpack.c.b16 %v1860, %v1852
  %v3085 = vpack.c.b16 %v1861, %v1853
  %v3086 = vpack.c.b16 %v1870, %v1862
  %v3087 = vpack.c.b16 %v1871, %v1863
  %v3088 = vpack.c.b16 %v1872, %v1864
  %v3089 = vpack.c.b16 %v1873, %v1865
  %v3090 = vpack.c.b16 %v1874, %v1866
  %v3091 = vpack.c.b16 %v1875, %v1867
  %v3092 = vpack.c.b16 %v1876, %v1868
  %v3093 = vpack.c.b16 %v1877, %v1869
  %v3094 = vpack.c.b16 %v1886, %v1878
  %v3095 = vpack.c.b16 %v1887, %v1879
  %v3096 = vpack.c.b16 %v1888, %v1880
  %v3097 = vpack.c.b16 %v1889, %v1881
  %v3098 = vpack.c.b16 %v1890, %v1882
  %v3099 = vpack.c.b16 %v1891, %v1883
  %v3100 = vpack.c.b16 %v1892, %v1884
  %v3101 = vpack.c.b16 %v1893, %v1885
  %v3102 = vpack.c.b16 %v1902, %v1894
  %v3103 = vpack.c.b16 %v1903, %v1895
  %v3104 = vpack.c.b16 %v1904, %v1896
  %v3105 = vpack.c.b16 %v1905, %v1897
  %v3106 = vpack.c.b16 %v1906, %v1898
  %v3107 = vpack.c.b16 %v1907, %v1899
  %v3108 = vpack.c.b16 %v1908, %v1900
  %v3109 = vpack.c.b16 %v1909, %v1901
  %v3110 = vpack.c.b16 %v1918, %v1910
  %v3111 = vpack.c.b16 %v1919, %v1911
  %v3112 = vpack.c.b16 %v1920, %v1912
  %v3113 = vpack.c.b16 %v1921, %v1913
  %v3114 = vpack.c.b16 %v1922, %v1914
  %v3115 = vpack.c.b16 %v1923, %v1915
  %v3116 = vpack.c.b16 %v1924, %v1916
  %v3117 = vpack.c.b16 %v1925, %v1917
  %v3118 = vpack.c.b16 %v1934, %v1926
  %v3119 = vpack.c.b16 %v1935, %v1927
  %v3120 = vpack.c.b16 %v1936, %v1928
  %v3121 = vpack.c.b16 %v1937, %v1929
  %v3122 = vpack.c.b16 %v1938, %v1930
  %v3123 = vpack.c.b16 %v1939, %v1931
  %v3124 = vpack.c.b16 %v1940, %v1932
  %v3125 = vpack.c.b16 %v1941, %v1933
  %v3126 = vpack.c.b16 %v1950, %v1942
  %v3127 = vpack.c.b16 %v1951, %v1943
  %v3128 = vpack.c.b16 %v1952, %v1944
  %v3129 = vpack.c.b16 %v1953, %v1945
  %v3130 = vpack.c.b16 %v1954, %v1946
  %v3131 = vpack.c.b16 %v1955, %v1947
  %v3132 = vpack.c.b16 %v1956, %v1948
  %v3133 = vpack.c.b16 %v1957, %v1949
  %v3134 = vpack.c.b16 %v1966, %v1958
  %v3135 = vpack.c.b16 %v1967, %v1959
  %v3136 = vpack.c.b16 %v1968, %v1960
  %v3137 = vpack.c.b16 %v1969, %v1961
  %v3138 = vpack.c.b16 %v1970, %v1962
  %v3139 = vpack.c.b16 %v1971, %v1963
  %v3140 = vpack.c.b16 %v1972, %v1964
  %v3141 = vpack.c.b16 %v1973, %v1965
  %v3142 = vpack.c.b16 %v1982, %v1974
  %v3143 = vpack.c.b16 %v1983, %v1975
  %v3144 = vpack.c.b16 %v1984, %v1976
  %v3145 = vpack.c.b16 %v1985, %v1977
  %v3146 = vpack.c.b16 %v1986, %v1978
  %v3147 = vpack.c.b16 %v1987, %v1979
  %v3148 = vpack.c.b16 %v1988, %v1980
  %v3149 = vpack.c.b16 %v1989, %v1981
  %v3150 = vpack.c.b16 %v1998, %v1990
  %v3151 = vpack.c.b16 %v1999, %v1991
  %v3152 = vpack.c.b16 %v2000, %v1992
  %v3153 = vpack.c.b16 %v2001, %v1993
  %v3154 = vpack.c.b16 %v2002, %v1994
  %v3155 = vpack.c.b16 %v2003, %v1995
  %v3156 = vpack.c.b16 %v2004, %v1996
  %v3157 = vpack.c.b16 %v2005, %v1997
  %v3158 = vpack.c.b16 %v2014, %v2006
  %v3159 = vpack.c.b16 %v2015, %v2007
  %v3160 = vpack.c.b16 %v2016, %v2008
  %v3161 = vpack.c.b16 %v2017, %v2009
  %v3162 = vpack.c.b16 %v2018, %v2010
  %v3163 = vpack.c.b16 %v2019, %v2011
  %v3164 = vpack.c.b16 %v2020, %v2012
  %v3165 = vpack.c.b16 %v2021, %v2013
  %v3166 = vpack.c.b16 %v2030, %v2022
  %v3167 = vpack.c.b16 %v2031, %v2023
  %v3168 = vpack.c.b16 %v2032, %v2024
  %v3169 = vpack.c.b16 %v2033, %v2025
  %v3170 = vpack.c.b16 %v2034, %v2026
  %v3171 = vpack.c.b16 %v2035, %v2027
  %v3172 = vpack.c.b16 %v2036, %v2028
  %v3173 = vpack.c.b16 %v2037, %v2029
  %v3174 = vpack.c.b16 %v2046, %v2038
  %v3175 = vpack.c.b16 %v2047, %v2039
  %v3176 = vpack.c.b16 %v2048, %v2040
  %v3177 = vpack.c.b16 %v2049, %v2041
  %v3178 = vpack.c.b16 %v2050, %v2042
  %v3179 = vpack.c.b16 %v2051, %v2043
  %v3180 = vpack.c.b16 %v2052, %v2044
  %v3181 = vpack.c.b16 %v2053, %v2045
  %v3182 = vpack.c.b16 %v2062, %v2054
  %v3183 = vpack.c.b16 %v2063, %v2055
  %v3184 = vpack.c.b16 %v2064, %v2056
  %v3185 = vpack.c.b16 %v2065, %v2057
  %v3186 = vpack.c.b16 %v2066, %v2058
  %v3187 = vpack.c.b16 %v2067, %v2059
  %v3188 = vpack.c.b16 %v2068, %v2060
  %v3189 = vpack.c.b16 %v2069, %v2061
  %v3190 = vpack.c.b16 %v2078, %v2070
  %v3191 = vpack.c.b16 %v2079, %v2071
  %v3192 = vpack.c.b16 %v2080, %v2072
  %v3193 = vpack.c.b16 %v2081, %v2073
  %v3194 = vpack.c.b16 %v2082, %v2074
  %v3195 = vpack.c.b16 %v2083, %v2075
  %v3196 = vpack.c.b16 %v2084, %v2076
  %v3197 = vpack.c.b16 %v2085, %v2077
  %v3198 = vpack.c.b16 %v2094, %v2086
  %v3199 = vpack.c.b16 %v2095, %v2087
  %v3200 = vpack.c.b16 %v2096, %v2088
  %v3201 = vpack.c.b16 %v2097, %v2089
  %v3202 = vpack.c.b16 %v2098, %v2090
  %v3203 = vpack.c.b16 %v2099, %v2091
  %v3204 = vpack.c.b16 %v2100, %v2092
  %v3205 = vpack.c.b16 %v2101, %v2093
  %v3206 = vpack.c.b16 %v2110, %v2102
  %v3207 = vpack.c.b16 %v2111, %v2103
  %v3208 = vpack.c.b16 %v2112, %v2104
  %v3209 = vpack.c.b16 %v2113, %v2105
  %v3210 = vpack.c.b16 %v2114, %v2106
  %v3211 = vpack.c.b16 %v2115, %v2107
  %v3212 = vpack.c.b16 %v2116, %v2108
  %v3213 = vpack.c.b16 %v2117, %v2109
  %v3214 = vpack.c.b16 %v2126, %v2118
  %v3215 = vpack.c.b16 %v2127, %v2119
  %v3216 = vpack.c.b16 %v2128, %v2120
  %v3217 = vpack.c.b16 %v2129, %v2121
  %v3218 = vpack.c.b16 %v2130, %v2122
  %v3219 = vpack.c.b16 %v2131, %v2123
  %v3220 = vpack.c.b16 %v2132, %v2124
  %v3221 = vpack.c.b16 %v2133, %v2125
  %v3222 = vpack.c.b16 %v2142, %v2134
  %v3223 = vpack.c.b16 %v2143, %v2135
  %v3224 = vpack.c.b16 %v2144, %v2136
  %v3225 = vpack.c.b16 %v2145, %v2137
  %v3226 = vpack.c.b16 %v2146, %v2138
  %v3227 = vpack.c.b16 %v2147, %v2139
  %v3228 = vpack.c.b16 %v2148, %v2140
  %v3229 = vpack.c.b16 %v2149, %v2141
  %v3230 = vpack.c.b16 %v2158, %v2150
  %v3231 = vpack.c.b16 %v2159, %v2151
  %v3232 = vpack.c.b16 %v2160, %v2152
  %v3233 = vpack.c.b16 %v2161, %v2153
  %v3234 = vpack.c.b16 %v2162, %v2154
  %v3235 = vpack.c.b16 %v2163, %v2155
  %v3236 = vpack.c.b16 %v2164, %v2156
  %v3237 = vpack.c.b16 %v2165, %v2157
  %v3238 = vpack.c.b16 %v2174, %v2166
  %v3239 = vpack.c.b16 %v2175, %v2167
  %v3240 = vpack.c.b16 %v2176, %v2168
  %v3241 = vpack.c.b16 %v2177, %v2169
  %v3242 = vpack.c.b16 %v2178, %v2170
  %v3243 = vpack.c.b16 %v2179, %v2171
  %v3244 = vpack.c.b16 %v2180, %v2172
  %v3245 = vpack.c.b16 %v2181, %v2173
  %v3246 = vpack.c.b16 %v2190, %v2182
  %v3247 = vpack.c.b16 %v2191, %v2183
  %v3248 = vpack.c.b16 %v2192, %v2184
  %v3249 = vpack.c.b16 %v2193, %v2185
  %v3250 = vpack.c.b16 %v2194, %v2186
  %v3251 = vpack.c.b16 %v2195, %v2187
  %v3252 = vpack.c.b16 %v2196, %v2188
  %v3253 = vpack.c.b16 %v2197, %v2189
  %v3254 = vpack.c.b16 %v2206, %v2198
  %v3255 = vpack.c.b16 %v2207, %v2199
  %v3256 = vpack.c.b16 %v2208, %v2200
  %v3257 = vpack.c.b16 %v2209, %v2201
  %v3258 = vpack.c.b16 %v2210, %v2202
  %v3259 = vpack.c.b16 %v2211, %v2203
  %v3260 = vpack.c.b16 %v2212, %v2204
  %v3261 = vpack.c.b16 %v2213, %v2205
  %v3262 = vpack.c.b16 %v2222, %v2214
  %v3263 = vpack.c.b16 %v2223, %v2215
  %v3264 = vpack.c.b16 %v2224, %v2216
  %v3265 = vpack.c.b16 %v2225, %v2217
  %v3266 = vpack.c.b16 %v2226, %v2218
  %v3267 = vpack.c.b16 %v2227, %v2219
  %v3268 = vpack.c.b16 %v2228, %v2220
  %v3269 = vpack.c.b16 %v2229, %v2221
  %v3270 = vpack.c.b16 %v2238, %v2230
  %v3271 = vpack.c.b16 %v2239, %v2231
  %v3272 = vpack.c.b16 %v2240, %v2232
  %v3273 = vpack.c.b16 %v2241, %v2233
  %v3274 = vpack.c.b16 %v2242, %v2234
  %v3275 = vpack.c.b16 %v2243, %v2235
  %v3276 = vpack.c.b16 %v2244, %v2236
  %v3277 = vpack.c.b16 %v2245, %v2237
  %v3278 = vpack.c.b16 %v2254, %v2246
  %v3279 = vpack.c.b16 %v2255, %v2247
  %v3280 = vpack.c.b16 %v2256, %v2248
  %v3281 = vpack.c.b16 %v2257, %v2249
  %v3282 = vpack.c.b16 %v2258, %v2250
  %v3283 = vpack.c.b16 %v2259, %v2251
  %v3284 = vpack.c.b16 %v2260, %v2252
  %v3285 = vpack.c.b16 %v2261, %v2253
  %v3286 = vpack.c.b16 %v2270, %v2262
  %v3287 = vpack.c.b16 %v2271, %v2263
  %v3288 = vpack.c.b16 %v2272, %v2264
  %v3289 = vpack.c.b16 %v2273, %v2265
  %v3290 = vpack.c.b16 %v2274, %v2266
  %v3291 = vpack.c.b16 %v2275, %v2267
  %v3292 = vpack.c.b16 %v2276, %v2268
  %v3293 = vpack.c.b16 %v2277, %v2269
  %v3294 = vpack.c.b16 %v2286, %v2278
  %v3295 = vpack.c.b16 %v2287, %v2279
  %v3296 = vpack.c.b16 %v2288, %v2280
  %v3297 = vpack.c.b16 %v2289, %v2281
  %v3298 = vpack.c.b16 %v2290, %v2282
  %v3299 = vpack.c.b16 %v2291, %v2283
  %v3300 = vpack.c.b16 %v2292, %v2284
  %v3301 = vpack.c.b16 %v2293, %v2285
  %v3302 = vpack.c.b16 %v2302, %v2294
  %v3303 = vpack.c.b16 %v2303, %v2295
  %v3304 = vpack.c.b16 %v2304, %v2296
  %v3305 = vpack.c.b16 %v2305, %v2297
  %v3306 = vpack.c.b16 %v2306, %v2298
  %v3307 = vpack.c.b16 %v2307, %v2299
  %v3308 = vpack.c.b16 %v2308, %v2300
  %v3309 = vpack.c.b16 %v2309, %v2301
  %v3310 = vpack.c.b16 %v2318, %v2310
  %v3311 = vpack.c.b16 %v2319, %v2311
  %v3312 = vpack.c.b16 %v2320, %v2312
  %v3313 = vpack.c.b16 %v2321, %v2313
  %v3314 = vpack.c.b16 %v2322, %v2314
  %v3315 = vpack.c.b16 %v2323, %v2315
  %v3316 = vpack.c.b16 %v2324, %v2316
  %v3317 = vpack.c.b16 %v2325, %v2317
  %v3318 = vpack.c.b16 %v2334, %v2326
  %v3319 = vpack.c.b16 %v2335, %v2327
  %v3320 = vpack.c.b16 %v2336, %v2328
  %v3321 = vpack.c.b16 %v2337, %v2329
  %v3322 = vpack.c.b16 %v2338, %v2330
  %v3323 = vpack.c.b16 %v2339, %v2331
  %v3324 = vpack.c.b16 %v2340, %v2332
  %v3325 = vpack.c.b16 %v2341, %v2333
  %v3326 = vpack.c.b16 %v2350, %v2342
  %v3327 = vpack.c.b16 %v2351, %v2343
  %v3328 = vpack.c.b16 %v2352, %v2344
  %v3329 = vpack.c.b16 %v2353, %v2345
  %v3330 = vpack.c.b16 %v2354, %v2346
  %v3331 = vpack.c.b16 %v2355, %v2347
  %v3332 = vpack.c.b16 %v2356, %v2348
  %v3333 = vpack.c.b16 %v2357, %v2349
  %v3334 = vpack.c.b16 %v2366, %v2358
  %v3335 = vpack.c.b16 %v2367, %v2359
  %v3336 = vpack.c.b16 %v2368, %v2360
  %v3337 = vpack.c.b16 %v2369, %v2361
  %v3338 = vpack.c.b16 %v2370, %v2362
  %v3339 = vpack.c.b16 %v2371, %v2363
  %v3340 = vpack.c.b16 %v2372, %v2364
  %v3341 = vpack.c.b16 %v2373, %v2365
  %v3342 = vpack.c.b16 %v2382, %v2374
  %v3343 = vpack.c.b16 %v2383, %v2375
  %v3344 = vpack.c.b16 %v2384, %v2376
  %v3345 = vpack.c.b16 %v2385, %v2377
  %v3346 = vpack.c.b16 %v2386, %v2378
  %v3347 = vpack.c.b16 %v2387, %v2379
  %v3348 = vpack.c.b16 %v2388, %v2380
  %v3349 = vpack.c.b16 %v2389, %v2381
  %v3350 = vpack.c.b16 %v2398, %v2390
  %v3351 = vpack.c.b16 %v2399, %v2391
  %v3352 = vpack.c.b16 %v2400, %v2392
  %v3353 = vpack.c.b16 %v2401, %v2393
  %v3354 = vpack.c.b16 %v2402, %v2394
  %v3355 = vpack.c.b16 %v2403, %v2395
  %v3356 = vpack.c.b16 %v2404, %v2396
  %v3357 = vpack.c.b16 %v2405, %v2397
  %v3358 = vpack.c.b16 %v2414, %v2406
  %v3359 = vpack.c.b16 %v2415, %v2407
  %v3360 = vpack.c.b16 %v2416, %v2408
  %v3361 = vpack.c.b16 %v2417, %v2409
  %v3362 = vpack.c.b16 %v2418, %v2410
  %v3363 = vpack.c.b16 %v2419, %v2411
  %v3364 = vpack.c.b16 %v2420, %v2412
  %v3365 = vpack.c.b16 %v2421, %v2413
  %v3366 = vpack.c.b16 %v2430, %v2422
  %v3367 = vpack.c.b16 %v2431, %v2423
  %v3368 = vpack.c.b16 %v2432, %v2424
  %v3369 = vpack.c.b16 %v2433, %v2425
  %v3370 = vpack.c.b16 %v2434, %v2426
  %v3371 = vpack.c.b16 %v2435, %v2427
  %v3372 = vpack.c.b16 %v2436, %v2428
  %v3373 = vpack.c.b16 %v2437, %v2429
  %v3374 = vpack.c.b16 %v2446, %v2438
  %v3375 = vpack.c.b16 %v2447, %v2439
  %v3376 = vpack.c.b16 %v2448, %v2440
  %v3377 = vpack.c.b16 %v2449, %v2441
  %v3378 = vpack.c.b16 %v2450, %v2442
  %v3379 = vpack.c.b16 %v2451, %v2443
  %v3380 = vpack.c.b16 %v2452, %v2444
  %v3381 = vpack.c.b16 %v2453, %v2445
  %v3382 = vpack.c.b16 %v2462, %v2454
  %v3383 = vpack.c.b16 %v2463, %v2455
  %v3384 = vpack.c.b16 %v2464, %v2456
  %v3385 = vpack.c.b16 %v2465, %v2457
  %v3386 = vpack.c.b16 %v2466, %v2458
  %v3387 = vpack.c.b16 %v2467, %v2459
  %v3388 = vpack.c.b16 %v2468, %v2460
  %v3389 = vpack.c.b16 %v2469, %v2461
  %v3390 = vpack.c.b16 %v2478, %v2470
  %v3391 = vpack.c.b16 %v2479, %v2471
  %v3392 = vpack.c.b16 %v2480, %v2472
  %v3393 = vpack.c.b16 %v2481, %v2473
  %v3394 = vpack.c.b16 %v2482, %v2474
  %v3395 = vpack.c.b16 %v2483, %v2475
  %v3396 = vpack.c.b16 %v2484, %v2476
  %v3397 = vpack.c.b16 %v2485, %v2477
  %v3398 = vpack.c.b16 %v2494, %v2486
  %v3399 = vpack.c.b16 %v2495, %v2487
  %v3400 = vpack.c.b16 %v2496, %v2488
  %v3401 = vpack.c.b16 %v2497, %v2489
  %v3402 = vpack.c.b16 %v2498, %v2490
  %v3403 = vpack.c.b16 %v2499, %v2491
  %v3404 = vpack.c.b16 %v2500, %v2492
  %v3405 = vpack.c.b16 %v2501, %v2493
  %v3406 = vpack.c.b16 %v2510, %v2502
  %v3407 = vpack.c.b16 %v2511, %v2503
  %v3408 = vpack.c.b16 %v2512, %v2504
  %v3409 = vpack.c.b16 %v2513, %v2505
  %v3410 = vpack.c.b16 %v2514, %v2506
  %v3411 = vpack.c.b16 %v2515, %v2507
  %v3412 = vpack.c.b16 %v2516, %v2508
  %v3413 = vpack.c.b16 %v2517, %v2509
  %v3414 = vpack.c.b16 %v2526, %v2518
  %v3415 = vpack.c.b16 %v2527, %v2519
  %v3416 = vpack.c.b16 %v2528, %v2520
  %v3417 = vpack.c.b16 %v2529, %v2521
  %v3418 = vpack.c.b16 %v2530, %v2522
  %v3419 = vpack.c.b16 %v2531, %v2523
  %v3420 = vpack.c.b16 %v2532, %v2524
  %v3421 = vpack.c.b16 %v2533, %v2525
  %v3422 = vpack.c.b16 %v2542, %v2534
  %v3423 = vpack.c.b16 %v2543, %v2535
  %v3424 = vpack.c.b16 %v2544, %v2536
  %v3425 = vpack.c.b16 %v2545, %v2537
  %v3426 = vpack.c.b16 %v2546, %v2538
  %v3427 = vpack.c.b16 %v2547, %v2539
  %v3428 = vpack.c.b16 %v2548, %v2540
  %v3429 = vpack.c.b16 %v2549, %v2541
  %v3430 = vpack.c.b16 %v2558, %v2550
  %v3431 = vpack.c.b16 %v2559, %v2551
  %v3432 = vpack.c.b16 %v2560, %v2552
  %v3433 = vpack.c.b16 %v2561, %v2553
  %v3434 = vpack.c.b16 %v2562, %v2554
  %v3435 = vpack.c.b16 %v2563, %v2555
  %v3436 = vpack.c.b16 %v2564, %v2556
  %v3437 = vpack.c.b16 %v2565, %v2557
  %v3438 = vpack.c.b16 %v2574, %v2566
  %v3439 = vpack.c.b16 %v2575, %v2567
  %v3440 = vpack.c.b16 %v2576, %v2568
  %v3441 = vpack.c.b16 %v2577, %v2569
  %v3442 = vpack.c.b16 %v2578, %v2570
  %v3443 = vpack.c.b16 %v2579, %v2571
  %v3444 = vpack.c.b16 %v2580, %v2572
  %v3445 = vpack.c.b16 %v2581, %v2573
  %v3446 = vpack.c.b16 %v2590, %v2582
  %v3447 = vpack.c.b16 %v2591, %v2583
  %v3448 = vpack.c.b16 %v2592, %v2584
  %v3449 = vpack.c.b16 %v2593, %v2585
  %v3450 = vpack.c.b16 %v2594, %v2586
  %v3451 = vpack.c.b16 %v2595, %v2587
  %v3452 = vpack.c.b16 %v2596, %v2588
  %v3453 = vpack.c.b16 %v2597, %v2589
  %v3454 = vpack.c.b16 %v2606, %v2598
  %v3455 = vpack.c.b16 %v2607, %v2599
  %v3456 = vpack.c.b16 %v2608, %v2600
  %v3457 = vpack.c.b16 %v2609, %v2601
  %v3458 = vpack.c.b16 %v2610, %v2602
  %v3459 = vpack.c.b16 %v2611, %v2603
  %v3460 = vpack.c.b16 %v2612, %v2604
  %v3461 = vpack.c.b16 %v2613, %v2605
  %v3462 = vpack.c.b16 %v2622, %v2614
  %v3463 = vpack.c.b16 %v2623, %v2615
  %v3464 = vpack.c.b16 %v2624, %v2616
  %v3465 = vpack.c.b16 %v2625, %v2617
  %v3466 = vpack.c.b16 %v2626, %v2618
  %v3467 = vpack.c.b16 %v2627, %v2619
  %v3468 = vpack.c.b16 %v2628, %v2620
  %v3469 = vpack.c.b16 %v2629, %v2621
  %v3470 = vpack.c.b16 %v2638, %v2630
  %v3471 = vpack.c.b16 %v2639, %v2631
  %v3472 = vpack.c.b16 %v2640, %v2632
  %v3473 = vpack.c.b16 %v2641, %v2633
  %v3474 = vpack.c.b16 %v2642, %v2634
  %v3475 = vpack.c.b16 %v2643, %v2635
  %v3476 = vpack.c.b16 %v2644, %v2636
  %v3477 = vpack.c.b16 %v2645, %v2637
  %v3478 = vpack.c.b16 %v2654, %v2646
  %v3479 = vpack.c.b16 %v2655, %v2647
  %v3480 = vpack.c.b16 %v2656, %v2648
  %v3481 = vpack.c.b16 %v2657, %v2649
  %v3482 = vpack.c.b16 %v2658, %v2650
  %v3483 = vpack.c.b16 %v2659, %v2651
  %v3484 = vpack.c.b16 %v2660, %v2652
  %v3485 = vpack.c.b16 %v2661, %v2653
  %v3486 = vpack.c.b16 %v2670, %v2662
  %v3487 = vpack.c.b16 %v2671, %v2663
  %v3488 = vpack.c.b16 %v2672, %v2664
  %v3489 = vpack.c.b16 %v2673, %v2665
  %v3490 = vpack.c.b16 %v2674, %v2666
  %v3491 = vpack.c.b16 %v2675, %v2667
  %v3492 = vpack.c.b16 %v2676, %v2668
  %v3493 = vpack.c.b16 %v2677, %v2669
  %v3494 = vpack.c.b16 %v2686, %v2678
  %v3495 = vpack.c.b16 %v2687, %v2679
  %v3496 = vpack.c.b16 %v2688, %v2680
  %v3497 = vpack.c.b16 %v2689, %v2681
  %v3498 = vpack.c.b16 %v2690, %v2682
  %v3499 = vpack.c.b16 %v2691, %v2683
  %v3500 = vpack.c.b16 %v2692, %v2684
  %v3501 = vpack.c.b16 %v2693, %v2685
  %v3502 = vpack.c.b16 %v2702, %v2694
  %v3503 = vpack.c.b16 %v2703, %v2695
  %v3504 = vpack.c.b16 %v2704, %v2696
  %v3505 = vpack.c.b16 %v2705, %v2697
  %v3506 = vpack.c.b16 %v2706, %v2698
  %v3507 = vpack.c.b16 %v2707, %v2699
  %v3508 = vpack.c.b16 %v2708, %v2700
  %v3509 = vpack.c.b16 %v2709, %v2701
  %v3510 = vpack.c.b16 %v2718, %v2710
  %v3511 = vpack.c.b16 %v2719, %v2711
  %v3512 = vpack.c.b16 %v2720, %v2712
  %v3513 = vpack.c.b16 %v2721, %v2713
  %v3514 = vpack.c.b16 %v2722, %v2714
  %v3515 = vpack.c.b16 %v2723, %v2715
  %v3516 = vpack.c.b16 %v2724, %v2716
  %v3517 = vpack.c.b16 %v2725, %v2717
  %v3518 = vpack.c.b16 %v2734, %v2726
  %v3519 = vpack.c.b16 %v2735, %v2727
  %v3520 = vpack.c.b16 %v2736, %v2728
  %v3521 = vpack.c.b16 %v2737, %v2729
  %v3522 = vpack.c.b16 %v2738, %v2730
  %v3523 = vpack.c.b16 %v2739, %v2731
  %v3524 = vpack.c.b16 %v2740, %v2732
  %v3525 = vpack.c.b16 %v2741, %v2733
  %v3526 = vpack.c.b16 %v2750, %v2742
  %v3527 = vpack.c.b16 %v2751, %v2743
  %v3528 = vpack.c.b16 %v2752, %v2744
  %v3529 = vpack.c.b16 %v2753, %v2745
  %v3530 = vpack.c.b16 %v2754, %v2746
  %v3531 = vpack.c.b16 %v2755, %v2747
  %v3532 = vpack.c.b16 %v2756, %v2748
  %v3533 = vpack.c.b16 %v2757, %v2749
  %v3534 = vpack.c.b16 %v2766, %v2758
  %v3535 = vpack.c.b16 %v2767, %v2759
  %v3536 = vpack.c.b16 %v2768, %v2760
  %v3537 = vpack.c.b16 %v2769, %v2761
  %v3538 = vpack.c.b16 %v2770, %v2762
  %v3539 = vpack.c.b16 %v2771, %v2763
  %v3540 = vpack.c.b16 %v2772, %v2764
  %v3541 = vpack.c.b16 %v2773, %v2765
  %v3542 = vpack.c.b16 %v2782, %v2774
  %v3543 = vpack.c.b16 %v2783, %v2775
  %v3544 = vpack.c.b16 %v2784, %v2776
  %v3545 = vpack.c.b16 %v2785, %v2777
  %v3546 = vpack.c.b16 %v2786, %v2778
  %v3547 = vpack.c.b16 %v2787, %v2779
  %v3548 = vpack.c.b16 %v2788, %v2780
  %v3549 = vpack.c.b16 %v2789, %v2781
  %v3550 = vpack.c.b16 %v2798, %v2790
  %v3551 = vpack.c.b16 %v2799, %v2791
  %v3552 = vpack.c.b16 %v2800, %v2792
  %v3553 = vpack.c.b16 %v2801, %v2793
  %v3554 = vpack.c.b16 %v2802, %v2794
  %v3555 = vpack.c.b16 %v2803, %v2795
  %v3556 = vpack.c.b16 %v2804, %v2796
  %v3557 = vpack.c.b16 %v2805, %v2797
  %v3558 = vpack.c.b16 %v2814, %v2806
  %v3559 = vpack.c.b16 %v2815, %v2807
  %v3560 = vpack.c.b16 %v2816, %v2808
  %v3561 = vpack.c.b16 %v2817, %v2809
  %v3562 = vpack.c.b16 %v2818, %v2810
  %v3563 = vpack.c.b16 %v2819, %v2811
  %v3564 = vpack.c.b16 %v2820, %v2812
  %v3565 = vpack.c.b16 %v2821, %v2813
  %v3566 = vpack.c.b16 %v2830, %v2822
  %v3567 = vpack.c.b16 %v2831, %v2823
  %v3568 = vpack.c.b16 %v2832, %v2824
  %v3569 = vpack.c.b16 %v2833, %v2825
  %v3570 = vpack.c.b16 %v2834, %v2826
  %v3571 = vpack.c.b16 %v2835, %v2827
  %v3572 = vpack.c.b16 %v2836, %v2828
  %v3573 = vpack.c.b16 %v2837, %v2829
  %v3574 = vpack.c.b16 %v2846, %v2838
  %v3575 = vpack.c.b16 %v2847, %v2839
  %v3576 = vpack.c.b16 %v2848, %v2840
  %v3577 = vpack.c.b16 %v2849, %v2841
  %v3578 = vpack.c.b16 %v2850, %v2842
  %v3579 = vpack.c.b16 %v2851, %v2843
  %v3580 = vpack.c.b16 %v2852, %v2844
  %v3581 = vpack.c.b16 %v2853, %v2845
  %v3582 = vpack.c.b16 %v2862, %v2854
  %v3583 = vpack.c.b16 %v2863, %v2855
  %v3584 = vpack.c.b16 %v2864, %v2856
  %v3585 = vpack.c.b16 %v2865, %v2857
  %v3586 = vpack.c.b16 %v2866, %v2858
  %v3587 = vpack.c.b16 %v2867, %v2859
  %v3588 = vpack.c.b16 %v2868, %v2860
  %v3589 = vpack.c.b16 %v2869, %v2861
  %v3590 = vpack.c.b16 %v2878, %v2870
  %v3591 = vpack.c.b16 %v2879, %v2871
  %v3592 = vpack.c.b16 %v2880, %v2872
  %v3593 = vpack.c.b16 %v2881, %v2873
  %v3594 = vpack.c.b16 %v2882, %v2874
  %v3595 = vpack.c.b16 %v2883, %v2875
  %v3596 = vpack.c.b16 %v2884, %v2876
  %v3597 = vpack.c.b16 %v2885, %v2877
  %v3598 = vpack.c.b16 %v2894, %v2886
  %v3599 = vpack.c.b16 %v2895, %v2887
  %v3600 = vpack.c.b16 %v2896, %v2888
  %v3601 = vpack.c.b16 %v2897, %v2889
  %v3602 = vpack.c.b16 %v2898, %v2890
  %v3603 = vpack.c.b16 %v2899, %v2891
  %v3604 = vpack.c.b16 %v2900, %v2892
  %v3605 = vpack.c.b16 %v2901, %v2893
  %4310 = vmatprep.subr.bf16.mxu0 %v2903
  %4311 = vmatpush1.bf16.msra.mxu0 %v2902
  %4312 = vmatprep.subr.bf16.mxu0 %v2911
  %4313 = vmatpush1.bf16.msra.mxu0 %v2910
  %4314 = vmatprep.subr.bf16.mxu0 %v2919
  %4315 = vmatpush1.bf16.msra.mxu0 %v2918
  %4316 = vmatprep.subr.bf16.mxu0 %v2927
  %4317 = vmatpush1.bf16.msra.mxu0 %v2926
  %4318 = vmatprep.subr.bf16.mxu0 %v2935
  %4319 = vmatpush1.bf16.msra.mxu0 %v2934
  %4320 = vmatprep.subr.bf16.mxu0 %v2943
  %4321 = vmatpush1.bf16.msra.mxu0 %v2942
  %4322 = vmatprep.subr.bf16.mxu0 %v2951
  %4323 = vmatpush1.bf16.msra.mxu0 %v2950
  %4324 = vmatprep.subr.bf16.mxu0 %v2959
  %4325 = vmatpush1.bf16.msra.mxu0 %v2958
  %4326 = vmatprep.subr.bf16.mxu0 %v2967
  %4327 = vmatpush1.bf16.msra.mxu0 %v2966
  %4328 = vmatprep.subr.bf16.mxu0 %v2975
  %4329 = vmatpush1.bf16.msra.mxu0 %v2974
  %4330 = vmatprep.subr.bf16.mxu0 %v2983
  %4331 = vmatpush1.bf16.msra.mxu0 %v2982
  %4332 = vmatprep.subr.bf16.mxu0 %v2991
  %4333 = vmatpush1.bf16.msra.mxu0 %v2990
  %4334 = vmatprep.subr.bf16.mxu0 %v2999
  %4335 = vmatpush1.bf16.msra.mxu0 %v2998
  %4336 = vmatprep.subr.bf16.mxu0 %v3007
  %4337 = vmatpush1.bf16.msra.mxu0 %v3006
  %4338 = vmatprep.subr.bf16.mxu0 %v3015
  %4339 = vmatpush1.bf16.msra.mxu0 %v3014
  %4340 = vmatprep.subr.bf16.mxu0 %v3023
  %4341 = vmatpush1.bf16.msra.mxu0 %v3022
  %4342 = vmatprep.mubr.bf16.mxu0 %v769
  %4343 = vmatmul.mubr.bf16.gmra.mrb[0].mxu0 %v768
  %v4344 = vpop.f32.mrb[0].mxu0
  %v4345 = vadd.f32 0.0, %v4344
  %v4346 = vpop.f32.mrb[0].mxu0
  %v4347 = vadd.f32 0.0, %v4346
  %v4348 = vpop.f32.mrb[0].mxu0
  %v4349 = vadd.f32 0.0, %v4348
  %v4350 = vpop.f32.mrb[0].mxu0
  %v4351 = vadd.f32 0.0, %v4350
  %4352 = vdwg.mxu0
  %4353 = vmatprep.subr.bf16.mxu0 %v3031
  %4354 = vmatpush1.bf16.msra.mxu0 %v3030
  %4355 = vmatprep.subr.bf16.mxu0 %v3039
  %4356 = vmatpush1.bf16.msra.mxu0 %v3038
  %4357 = vmatprep.subr.bf16.mxu0 %v3047
  %4358 = vmatpush1.bf16.msra.mxu0 %v3046
  %4359 = vmatprep.subr.bf16.mxu0 %v3055
  %4360 = vmatpush1.bf16.msra.mxu0 %v3054
  %4361 = vmatprep.subr.bf16.mxu0 %v3063
  %4362 = vmatpush1.bf16.msra.mxu0 %v3062
  %4363 = vmatprep.subr.bf16.mxu0 %v3071
  %4364 = vmatpush1.bf16.msra.mxu0 %v3070
  %4365 = vmatprep.subr.bf16.mxu0 %v3079
  %4366 = vmatpush1.bf16.msra.mxu0 %v3078
  %4367 = vmatprep.subr.bf16.mxu0 %v3087
  %4368 = vmatpush1.bf16.msra.mxu0 %v3086
  %4369 = vmatprep.subr.bf16.mxu0 %v3095
  %4370 = vmatpush1.bf16.msra.mxu0 %v3094
  %4371 = vmatprep.subr.bf16.mxu0 %v3103
  %4372 = vmatpush1.bf16.msra.mxu0 %v3102
  %4373 = vmatprep.subr.bf16.mxu0 %v3111
  %4374 = vmatpush1.bf16.msra.mxu0 %v3110
  %4375 = vmatprep.subr.bf16.mxu0 %v3119
  %4376 = vmatpush1.bf16.msra.mxu0 %v3118
  %4377 = vmatprep.subr.bf16.mxu0 %v3127
  %4378 = vmatpush1.bf16.msra.mxu0 %v3126
  %4379 = vmatprep.subr.bf16.mxu0 %v3135
  %4380 = vmatpush1.bf16.msra.mxu0 %v3134
  %4381 = vmatprep.subr.bf16.mxu0 %v3143
  %4382 = vmatpush1.bf16.msra.mxu0 %v3142
  %4383 = vmatprep.subr.bf16.mxu0 %v3151
  %4384 = vmatpush1.bf16.msra.mxu0 %v3150
  %4385 = vmatprep.mubr.bf16.mxu0 %v771
  %4386 = vmatmul.mubr.bf16.gmra.mrb[0].mxu0 %v770
  %v4387 = vpop.f32.mrb[0].mxu0
  %v4388 = vadd.f32 %v4345, %v4387
  %v4389 = vpop.f32.mrb[0].mxu0
  %v4390 = vadd.f32 %v4347, %v4389
  %v4391 = vpop.f32.mrb[0].mxu0
  %v4392 = vadd.f32 %v4349, %v4391
  %v4393 = vpop.f32.mrb[0].mxu0
  %v4394 = vadd.f32 %v4351, %v4393
  %4395 = vdwg.mxu0
  %4396 = vmatprep.subr.bf16.mxu0 %v3159
  %4397 = vmatpush1.bf16.msra.mxu0 %v3158
  %4398 = vmatprep.subr.bf16.mxu0 %v3167
  %4399 = vmatpush1.bf16.msra.mxu0 %v3166
  %4400 = vmatprep.subr.bf16.mxu0 %v3175
  %4401 = vmatpush1.bf16.msra.mxu0 %v3174
  %4402 = vmatprep.subr.bf16.mxu0 %v3183
  %4403 = vmatpush1.bf16.msra.mxu0 %v3182
  %4404 = vmatprep.subr.bf16.mxu0 %v3191
  %4405 = vmatpush1.bf16.msra.mxu0 %v3190
  %4406 = vmatprep.subr.bf16.mxu0 %v3199
  %4407 = vmatpush1.bf16.msra.mxu0 %v3198
  %4408 = vmatprep.subr.bf16.mxu0 %v3207
  %4409 = vmatpush1.bf16.msra.mxu0 %v3206
  %4410 = vmatprep.subr.bf16.mxu0 %v3215
  %4411 = vmatpush1.bf16.msra.mxu0 %v3214
  %4412 = vmatprep.subr.bf16.mxu0 %v3223
  %4413 = vmatpush1.bf16.msra.mxu0 %v3222
  %4414 = vmatprep.subr.bf16.mxu0 %v3231
  %4415 = vmatpush1.bf16.msra.mxu0 %v3230
  %4416 = vmatprep.subr.bf16.mxu0 %v3239
  %4417 = vmatpush1.bf16.msra.mxu0 %v3238
  %4418 = vmatprep.subr.bf16.mxu0 %v3247
  %4419 = vmatpush1.bf16.msra.mxu0 %v3246
  %4420 = vmatprep.subr.bf16.mxu0 %v3255
  %4421 = vmatpush1.bf16.msra.mxu0 %v3254
  %4422 = vmatprep.subr.bf16.mxu0 %v3263
  %4423 = vmatpush1.bf16.msra.mxu0 %v3262
  %4424 = vmatprep.subr.bf16.mxu0 %v3271
  %4425 = vmatpush1.bf16.msra.mxu0 %v3270
  %4426 = vmatprep.subr.bf16.mxu0 %v3279
  %4427 = vmatpush1.bf16.msra.mxu0 %v3278
  %4428 = vmatprep.mubr.bf16.mxu0 %v773
  %4429 = vmatmul.mubr.bf16.gmra.mrb[0].mxu0 %v772
  %v4430 = vpop.f32.mrb[0].mxu0
  %v4431 = vadd.f32 %v4388, %v4430
  %v4432 = vpop.f32.mrb[0].mxu0
  %v4433 = vadd.f32 %v4390, %v4432
  %v4434 = vpop.f32.mrb[0].mxu0
  %v4435 = vadd.f32 %v4392, %v4434
  %v4436 = vpop.f32.mrb[0].mxu0
  %v4437 = vadd.f32 %v4394, %v4436
  %4438 = vdwg.mxu0
  %4439 = vmatprep.subr.bf16.mxu0 %v3287
  %4440 = vmatpush1.bf16.msra.mxu0 %v3286
  %4441 = vmatprep.subr.bf16.mxu0 %v3295
  %4442 = vmatpush1.bf16.msra.mxu0 %v3294
  %4443 = vmatprep.subr.bf16.mxu0 %v3303
  %4444 = vmatpush1.bf16.msra.mxu0 %v3302
  %4445 = vmatprep.subr.bf16.mxu0 %v3311
  %4446 = vmatpush1.bf16.msra.mxu0 %v3310
  %4447 = vmatprep.subr.bf16.mxu0 %v3319
  %4448 = vmatpush1.bf16.msra.mxu0 %v3318
  %4449 = vmatprep.subr.bf16.mxu0 %v3327
  %4450 = vmatpush1.bf16.msra.mxu0 %v3326
  %4451 = vmatprep.subr.bf16.mxu0 %v3335
  %4452 = vmatpush1.bf16.msra.mxu0 %v3334
  %4453 = vmatprep.subr.bf16.mxu0 %v3343
  %4454 = vmatpush1.bf16.msra.mxu0 %v3342
  %4455 = vmatprep.subr.bf16.mxu0 %v3351
  %4456 = vmatpush1.bf16.msra.mxu0 %v3350
  %4457 = vmatprep.subr.bf16.mxu0 %v3359
  %4458 = vmatpush1.bf16.msra.mxu0 %v3358
  %4459 = vmatprep.subr.bf16.mxu0 %v3367
  %4460 = vmatpush1.bf16.msra.mxu0 %v3366
  %4461 = vmatprep.subr.bf16.mxu0 %v3375
  %4462 = vmatpush1.bf16.msra.mxu0 %v3374
  %4463 = vmatprep.subr.bf16.mxu0 %v3383
  %4464 = vmatpush1.bf16.msra.mxu0 %v3382
  %4465 = vmatprep.subr.bf16.mxu0 %v3391
  %4466 = vmatpush1.bf16.msra.mxu0 %v3390
  %4467 = vmatprep.subr.bf16.mxu0 %v3399
  %4468 = vmatpush1.bf16.msra.mxu0 %v3398
  %4469 = vmatprep.subr.bf16.mxu0 %v3407
  %4470 = vmatpush1.bf16.msra.mxu0 %v3406
  %4471 = vmatprep.mubr.bf16.mxu0 %v775
  %4472 = vmatmul.mubr.bf16.gmra.mrb[0].mxu0 %v774
  %v4473 = vpop.f32.mrb[0].mxu0
  %v4474 = vadd.f32 %v4431, %v4473
  %v4475 = vpop.f32.mrb[0].mxu0
  %v4476 = vadd.f32 %v4433, %v4475
  %v4477 = vpop.f32.mrb[0].mxu0
  %v4478 = vadd.f32 %v4435, %v4477
  %v4479 = vpop.f32.mrb[0].mxu0
  %v4480 = vadd.f32 %v4437, %v4479
  %4481 = vdwg.mxu0
  %4482 = vmatprep.subr.bf16.mxu0 %v3415
  %4483 = vmatpush1.bf16.msra.mxu0 %v3414
  %4484 = vmatprep.subr.bf16.mxu0 %v3423
  %4485 = vmatpush1.bf16.msra.mxu0 %v3422
  %4486 = vmatprep.subr.bf16.mxu0 %v3431
  %4487 = vmatpush1.bf16.msra.mxu0 %v3430
  %4488 = vmatprep.subr.bf16.mxu0 %v3439
  %4489 = vmatpush1.bf16.msra.mxu0 %v3438
  %4490 = vmatprep.subr.bf16.mxu0 %v3447
  %4491 = vmatpush1.bf16.msra.mxu0 %v3446
  %4492 = vmatprep.subr.bf16.mxu0 %v3455
  %4493 = vmatpush1.bf16.msra.mxu0 %v3454
  %4494 = vmatprep.subr.bf16.mxu0 %v3463
  %4495 = vmatpush1.bf16.msra.mxu0 %v3462
  %4496 = vmatprep.subr.bf16.mxu0 %v3471
  %4497 = vmatpush1.bf16.msra.mxu0 %v3470
  %4498 = vmatprep.subr.bf16.mxu0 %v3479
  %4499 = vmatpush1.bf16.msra.mxu0 %v3478
  %4500 = vmatprep.subr.bf16.mxu0 %v3487
  %4501 = vmatpush1.bf16.msra.mxu0 %v3486
  %4502 = vmatprep.subr.bf16.mxu0 %v3495
  %4503 = vmatpush1.bf16.msra.mxu0 %v3494
  %4504 = vmatprep.subr.bf16.mxu0 %v3503
  %4505 = vmatpush1.bf16.msra.mxu0 %v3502
  %4506 = vmatprep.subr.bf16.mxu0 %v3511
  %4507 = vmatpush1.bf16.msra.mxu0 %v3510
  %4508 = vmatprep.subr.bf16.mxu0 %v3519
  %4509 = vmatpush1.bf16.msra.mxu0 %v3518
  %4510 = vmatprep.subr.bf16.mxu0 %v3527
  %4511 = vmatpush1.bf16.msra.mxu0 %v3526
  %4512 = vmatprep.subr.bf16.mxu0 %v3535
  %4513 = vmatpush1.bf16.msra.mxu0 %v3534
  %4514 = vmatprep.mubr.bf16.mxu0 %v777
  %4515 = vmatmul.mubr.bf16.gmra.mrb[0].mxu0 %v776
  %v4516 = vpop.f32.mrb[0].mxu0
  %v4517 = vadd.f32 %v4474, %v4516
  %v4518 = vpop.f32.mrb[0].mxu0
  %v4519 = vadd.f32 %v4476, %v4518
  %v4520 = vpop.f32.mrb[0].mxu0
  %v4521 = vadd.f32 %v4478, %v4520
  %v4522 = vpop.f32.mrb[0].mxu0
  %v4523 = vadd.f32 %v4480, %v4522
  %4524 = vdwg.mxu0
  %4525 = vmatprep.subr.bf16.mxu0 %v3543
  %4526 = vmatpush1.bf16.msra.mxu0 %v3542
  %4527 = vmatprep.subr.bf16.mxu0 %v3551
  %4528 = vmatpush1.bf16.msra.mxu0 %v3550
  %4529 = vmatprep.subr.bf16.mxu0 %v3559
  %4530 = vmatpush1.bf16.msra.mxu0 %v3558
  %4531 = vmatprep.subr.bf16.mxu0 %v3567
  %4532 = vmatpush1.bf16.msra.mxu0 %v3566
  %4533 = vmatprep.subr.bf16.mxu0 %v3575
  %4534 = vmatpush1.bf16.msra.mxu0 %v3574
  %4535 = vmatprep.subr.bf16.mxu0 %v3583
  %4536 = vmatpush1.bf16.msra.mxu0 %v3582
  %4537 = vmatprep.subr.bf16.mxu0 %v3591
  %4538 = vmatpush1.bf16.msra.mxu0 %v3590
  %4539 = vmatprep.subr.bf16.mxu0 %v3599
  %4540 = vmatpush1.bf16.msra.mxu0 %v3598
  %4541 = vmatprep.subr.bf16.mxu0 0
  %4542 = vmatpush1.bf16.msra.mxu0 0
  %4543 = vmatprep.subr.bf16.mxu0 0
  %4544 = vmatpush1.bf16.msra.mxu0 0
  %4545 = vmatprep.subr.bf16.mxu0 0
  %4546 = vmatpush1.bf16.msra.mxu0 0
  %4547 = vmatprep.subr.bf16.mxu0 0
  %4548 = vmatpush1.bf16.msra.mxu0 0
  %4549 = vmatprep.subr.bf16.mxu0 0
  %4550 = vmatpush1.bf16.msra.mxu0 0
  %4551 = vmatprep.subr.bf16.mxu0 0
  %4552 = vmatpush1.bf16.msra.mxu0 0
  %4553 = vmatprep.subr.bf16.mxu0 0
  %4554 = vmatpush1.bf16.msra.mxu0 0
  %4555 = vmatprep.subr.bf16.mxu0 0
  %4556 = vmatpush1.bf16.msra.mxu0 0
  %4557 = vmatprep.mubr.bf16.mxu0 0
  %4558 = vmatmul.mubr.bf16.gmra.mrb[0].mxu0 %v778
  %v4559 = vpop.f32.mrb[0].mxu0
  %v4560 = vadd.f32 %v4517, %v4559
  %v4561 = vpop.f32.mrb[0].mxu0
  %v4562 = vadd.f32 %v4519, %v4561
  %v4563 = vpop.f32.mrb[0].mxu0
  %v4564 = vadd.f32 %v4521, %v4563
  %v4565 = vpop.f32.mrb[0].mxu0
  %v4566 = vadd.f32 %v4523, %v4565
  %4567 = vdwg.mxu0
  %4568 = vmatprep.subr.bf16.mxu0 %v2905
  %4569 = vmatpush1.bf16.msra.mxu0 %v2904
  %4570 = vmatprep.subr.bf16.mxu0 %v2913
  %4571 = vmatpush1.bf16.msra.mxu0 %v2912
  %4572 = vmatprep.subr.bf16.mxu0 %v2921
  %4573 = vmatpush1.bf16.msra.mxu0 %v2920
  %4574 = vmatprep.subr.bf16.mxu0 %v2929
  %4575 = vmatpush1.bf16.msra.mxu0 %v2928
  %4576 = vmatprep.subr.bf16.mxu0 %v2937
  %4577 = vmatpush1.bf16.msra.mxu0 %v2936
  %4578 = vmatprep.subr.bf16.mxu0 %v2945
  %4579 = vmatpush1.bf16.msra.mxu0 %v2944
  %4580 = vmatprep.subr.bf16.mxu0 %v2953
  %4581 = vmatpush1.bf16.msra.mxu0 %v2952
  %4582 = vmatprep.subr.bf16.mxu0 %v2961
  %4583 = vmatpush1.bf16.msra.mxu0 %v2960
  %4584 = vmatprep.subr.bf16.mxu0 %v2969
  %4585 = vmatpush1.bf16.msra.mxu0 %v2968
  %4586 = vmatprep.subr.bf16.mxu0 %v2977
  %4587 = vmatpush1.bf16.msra.mxu0 %v2976
  %4588 = vmatprep.subr.bf16.mxu0 %v2985
  %4589 = vmatpush1.bf16.msra.mxu0 %v2984
  %4590 = vmatprep.subr.bf16.mxu0 %v2993
  %4591 = vmatpush1.bf16.msra.mxu0 %v2992
  %4592 = vmatprep.subr.bf16.mxu0 %v3001
  %4593 = vmatpush1.bf16.msra.mxu0 %v3000
  %4594 = vmatprep.subr.bf16.mxu0 %v3009
  %4595 = vmatpush1.bf16.msra.mxu0 %v3008
  %4596 = vmatprep.subr.bf16.mxu0 %v3017
  %4597 = vmatpush1.bf16.msra.mxu0 %v3016
  %4598 = vmatprep.subr.bf16.mxu0 %v3025
  %4599 = vmatpush1.bf16.msra.mxu0 %v3024
  %4600 = vmatprep.mubr.bf16.mxu0 %v769
  %4601 = vmatmul.mubr.bf16.gmra.mrb[0].mxu0 %v768
  %v4602 = vpop.f32.mrb[0].mxu0
  %v4603 = vadd.f32 0.0, %v4602
  %v4604 = vpop.f32.mrb[0].mxu0
  %v4605 = vadd.f32 0.0, %v4604
  %v4606 = vpop.f32.mrb[0].mxu0
  %v4607 = vadd.f32 0.0, %v4606
  %v4608 = vpop.f32.mrb[0].mxu0
  %v4609 = vadd.f32 0.0, %v4608
  %4610 = vdwg.mxu0
  %4611 = vmatprep.subr.bf16.mxu0 %v3033
  %4612 = vmatpush1.bf16.msra.mxu0 %v3032
  %4613 = vmatprep.subr.bf16.mxu0 %v3041
  %4614 = vmatpush1.bf16.msra.mxu0 %v3040
  %4615 = vmatprep.subr.bf16.mxu0 %v3049
  %4616 = vmatpush1.bf16.msra.mxu0 %v3048
  %4617 = vmatprep.subr.bf16.mxu0 %v3057
  %4618 = vmatpush1.bf16.msra.mxu0 %v3056
  %4619 = vmatprep.subr.bf16.mxu0 %v3065
  %4620 = vmatpush1.bf16.msra.mxu0 %v3064
  %4621 = vmatprep.subr.bf16.mxu0 %v3073
  %4622 = vmatpush1.bf16.msra.mxu0 %v3072
  %4623 = vmatprep.subr.bf16.mxu0 %v3081
  %4624 = vmatpush1.bf16.msra.mxu0 %v3080
  %4625 = vmatprep.subr.bf16.mxu0 %v3089
  %4626 = vmatpush1.bf16.msra.mxu0 %v3088
  %4627 = vmatprep.subr.bf16.mxu0 %v3097
  %4628 = vmatpush1.bf16.msra.mxu0 %v3096
  %4629 = vmatprep.subr.bf16.mxu0 %v3105
  %4630 = vmatpush1.bf16.msra.mxu0 %v3104
  %4631 = vmatprep.subr.bf16.mxu0 %v3113
  %4632 = vmatpush1.bf16.msra.mxu0 %v3112
  %4633 = vmatprep.subr.bf16.mxu0 %v3121
  %4634 = vmatpush1.bf16.msra.mxu0 %v3120
  %4635 = vmatprep.subr.bf16.mxu0 %v3129
  %4636 = vmatpush1.bf16.msra.mxu0 %v3128
  %4637 = vmatprep.subr.bf16.mxu0 %v3137
  %4638 = vmatpush1.bf16.msra.mxu0 %v3136
  %4639 = vmatprep.subr.bf16.mxu0 %v3145
  %4640 = vmatpush1.bf16.msra.mxu0 %v3144
  %4641 = vmatprep.subr.bf16.mxu0 %v3153
  %4642 = vmatpush1.bf16.msra.mxu0 %v3152
  %4643 = vmatprep.mubr.bf16.mxu0 %v771
  %4644 = vmatmul.mubr.bf16.gmra.mrb[0].mxu0 %v770
  %v4645 = vpop.f32.mrb[0].mxu0
  %v4646 = vadd.f32 %v4603, %v4645
  %v4647 = vpop.f32.mrb[0].mxu0
  %v4648 = vadd.f32 %v4605, %v4647
  %v4649 = vpop.f32.mrb[0].mxu0
  %v4650 = vadd.f32 %v4607, %v4649
  %v4651 = vpop.f32.mrb[0].mxu0
  %v4652 = vadd.f32 %v4609, %v4651
  %4653 = vdwg.mxu0
  %4654 = vmatprep.subr.bf16.mxu0 %v3161
  %4655 = vmatpush1.bf16.msra.mxu0 %v3160
  %4656 = vmatprep.subr.bf16.mxu0 %v3169
  %4657 = vmatpush1.bf16.msra.mxu0 %v3168
  %4658 = vmatprep.subr.bf16.mxu0 %v3177
  %4659 = vmatpush1.bf16.msra.mxu0 %v3176
  %4660 = vmatprep.subr.bf16.mxu0 %v3185
  %4661 = vmatpush1.bf16.msra.mxu0 %v3184
  %4662 = vmatprep.subr.bf16.mxu0 %v3193
  %4663 = vmatpush1.bf16.msra.mxu0 %v3192
  %4664 = vmatprep.subr.bf16.mxu0 %v3201
  %4665 = vmatpush1.bf16.msra.mxu0 %v3200
  %4666 = vmatprep.subr.bf16.mxu0 %v3209
  %4667 = vmatpush1.bf16.msra.mxu0 %v3208
  %4668 = vmatprep.subr.bf16.mxu0 %v3217
  %4669 = vmatpush1.bf16.msra.mxu0 %v3216
  %4670 = vmatprep.subr.bf16.mxu0 %v3225
  %4671 = vmatpush1.bf16.msra.mxu0 %v3224
  %4672 = vmatprep.subr.bf16.mxu0 %v3233
  %4673 = vmatpush1.bf16.msra.mxu0 %v3232
  %4674 = vmatprep.subr.bf16.mxu0 %v3241
  %4675 = vmatpush1.bf16.msra.mxu0 %v3240
  %4676 = vmatprep.subr.bf16.mxu0 %v3249
  %4677 = vmatpush1.bf16.msra.mxu0 %v3248
  %4678 = vmatprep.subr.bf16.mxu0 %v3257
  %4679 = vmatpush1.bf16.msra.mxu0 %v3256
  %4680 = vmatprep.subr.bf16.mxu0 %v3265
  %4681 = vmatpush1.bf16.msra.mxu0 %v3264
  %4682 = vmatprep.subr.bf16.mxu0 %v3273
  %4683 = vmatpush1.bf16.msra.mxu0 %v3272
  %4684 = vmatprep.subr.bf16.mxu0 %v3281
  %4685 = vmatpush1.bf16.msra.mxu0 %v3280
  %4686 = vmatprep.mubr.bf16.mxu0 %v773
  %4687 = vmatmul.mubr.bf16.gmra.mrb[0].mxu0 %v772
  %v4688 = vpop.f32.mrb[0].mxu0
  %v4689 = vadd.f32 %v4646, %v4688
  %v4690 = vpop.f32.mrb[0].mxu0
  %v4691 = vadd.f32 %v4648, %v4690
  %v4692 = vpop.f32.mrb[0].mxu0
  %v4693 = vadd.f32 %v4650, %v4692
  %v4694 = vpop.f32.mrb[0].mxu0
  %v4695 = vadd.f32 %v4652, %v4694
  %4696 = vdwg.mxu0
  %4697 = vmatprep.subr.bf16.mxu0 %v3289
  %4698 = vmatpush1.bf16.msra.mxu0 %v3288
  %4699 = vmatprep.subr.bf16.mxu0 %v3297
  %4700 = vmatpush1.bf16.msra.mxu0 %v3296
  %4701 = vmatprep.subr.bf16.mxu0 %v3305
  %4702 = vmatpush1.bf16.msra.mxu0 %v3304
  %4703 = vmatprep.subr.bf16.mxu0 %v3313
  %4704 = vmatpush1.bf16.msra.mxu0 %v3312
  %4705 = vmatprep.subr.bf16.mxu0 %v3321
  %4706 = vmatpush1.bf16.msra.mxu0 %v3320
  %4707 = vmatprep.subr.bf16.mxu0 %v3329
  %4708 = vmatpush1.bf16.msra.mxu0 %v3328
  %4709 = vmatprep.subr.bf16.mxu0 %v3337
  %4710 = vmatpush1.bf16.msra.mxu0 %v3336
  %4711 = vmatprep.subr.bf16.mxu0 %v3345
  %4712 = vmatpush1.bf16.msra.mxu0 %v3344
  %4713 = vmatprep.subr.bf16.mxu0 %v3353
  %4714 = vmatpush1.bf16.msra.mxu0 %v3352
  %4715 = vmatprep.subr.bf16.mxu0 %v3361
  %4716 = vmatpush1.bf16.msra.mxu0 %v3360
  %4717 = vmatprep.subr.bf16.mxu0 %v3369
  %4718 = vmatpush1.bf16.msra.mxu0 %v3368
  %4719 = vmatprep.subr.bf16.mxu0 %v3377
  %4720 = vmatpush1.bf16.msra.mxu0 %v3376
  %4721 = vmatprep.subr.bf16.mxu0 %v3385
  %4722 = vmatpush1.bf16.msra.mxu0 %v3384
  %4723 = vmatprep.subr.bf16.mxu0 %v3393
  %4724 = vmatpush1.bf16.msra.mxu0 %v3392
  %4725 = vmatprep.subr.bf16.mxu0 %v3401
  %4726 = vmatpush1.bf16.msra.mxu0 %v3400
  %4727 = vmatprep.subr.bf16.mxu0 %v3409
  %4728 = vmatpush1.bf16.msra.mxu0 %v3408
  %4729 = vmatprep.mubr.bf16.mxu0 %v775
  %4730 = vmatmul.mubr.bf16.gmra.mrb[0].mxu0 %v774
  %v4731 = vpop.f32.mrb[0].mxu0
  %v4732 = vadd.f32 %v4689, %v4731
  %v4733 = vpop.f32.mrb[0].mxu0
  %v4734 = vadd.f32 %v4691, %v4733
  %v4735 = vpop.f32.mrb[0].mxu0
  %v4736 = vadd.f32 %v4693, %v4735
  %v4737 = vpop.f32.mrb[0].mxu0
  %v4738 = vadd.f32 %v4695, %v4737
  %4739 = vdwg.mxu0
  %4740 = vmatprep.subr.bf16.mxu0 %v3417
  %4741 = vmatpush1.bf16.msra.mxu0 %v3416
  %4742 = vmatprep.subr.bf16.mxu0 %v3425
  %4743 = vmatpush1.bf16.msra.mxu0 %v3424
  %4744 = vmatprep.subr.bf16.mxu0 %v3433
  %4745 = vmatpush1.bf16.msra.mxu0 %v3432
  %4746 = vmatprep.subr.bf16.mxu0 %v3441
  %4747 = vmatpush1.bf16.msra.mxu0 %v3440
  %4748 = vmatprep.subr.bf16.mxu0 %v3449
  %4749 = vmatpush1.bf16.msra.mxu0 %v3448
  %4750 = vmatprep.subr.bf16.mxu0 %v3457
  %4751 = vmatpush1.bf16.msra.mxu0 %v3456
  %4752 = vmatprep.subr.bf16.mxu0 %v3465
  %4753 = vmatpush1.bf16.msra.mxu0 %v3464
  %4754 = vmatprep.subr.bf16.mxu0 %v3473
  %4755 = vmatpush1.bf16.msra.mxu0 %v3472
  %4756 = vmatprep.subr.bf16.mxu0 %v3481
  %4757 = vmatpush1.bf16.msra.mxu0 %v3480
  %4758 = vmatprep.subr.bf16.mxu0 %v3489
  %4759 = vmatpush1.bf16.msra.mxu0 %v3488
  %4760 = vmatprep.subr.bf16.mxu0 %v3497
  %4761 = vmatpush1.bf16.msra.mxu0 %v3496
  %4762 = vmatprep.subr.bf16.mxu0 %v3505
  %4763 = vmatpush1.bf16.msra.mxu0 %v3504
  %4764 = vmatprep.subr.bf16.mxu0 %v3513
  %4765 = vmatpush1.bf16.msra.mxu0 %v3512
  %4766 = vmatprep.subr.bf16.mxu0 %v3521
  %4767 = vmatpush1.bf16.msra.mxu0 %v3520
  %4768 = vmatprep.subr.bf16.mxu0 %v3529
  %4769 = vmatpush1.bf16.msra.mxu0 %v3528
  %4770 = vmatprep.subr.bf16.mxu0 %v3537
  %4771 = vmatpush1.bf16.msra.mxu0 %v3536
  %4772 = vmatprep.mubr.bf16.mxu0 %v777
  %4773 = vmatmul.mubr.bf16.gmra.mrb[0].mxu0 %v776
  %v4774 = vpop.f32.mrb[0].mxu0
  %v4775 = vadd.f32 %v4732, %v4774
  %v4776 = vpop.f32.mrb[0].mxu0
  %v4777 = vadd.f32 %v4734, %v4776
  %v4778 = vpop.f32.mrb[0].mxu0
  %v4779 = vadd.f32 %v4736, %v4778
  %v4780 = vpop.f32.mrb[0].mxu0
  %v4781 = vadd.f32 %v4738, %v4780
  %4782 = vdwg.mxu0
  %4783 = vmatprep.subr.bf16.mxu0 %v3545
  %4784 = vmatpush1.bf16.msra.mxu0 %v3544
  %4785 = vmatprep.subr.bf16.mxu0 %v3553
  %4786 = vmatpush1.bf16.msra.mxu0 %v3552
  %4787 = vmatprep.subr.bf16.mxu0 %v3561
  %4788 = vmatpush1.bf16.msra.mxu0 %v3560
  %4789 = vmatprep.subr.bf16.mxu0 %v3569
  %4790 = vmatpush1.bf16.msra.mxu0 %v3568
  %4791 = vmatprep.subr.bf16.mxu0 %v3577
  %4792 = vmatpush1.bf16.msra.mxu0 %v3576
  %4793 = vmatprep.subr.bf16.mxu0 %v3585
  %4794 = vmatpush1.bf16.msra.mxu0 %v3584
  %4795 = vmatprep.subr.bf16.mxu0 %v3593
  %4796 = vmatpush1.bf16.msra.mxu0 %v3592
  %4797 = vmatprep.subr.bf16.mxu0 %v3601
  %4798 = vmatpush1.bf16.msra.mxu0 %v3600
  %4799 = vmatprep.subr.bf16.mxu0 0
  %4800 = vmatpush1.bf16.msra.mxu0 0
  %4801 = vmatprep.subr.bf16.mxu0 0
  %4802 = vmatpush1.bf16.msra.mxu0 0
  %4803 = vmatprep.subr.bf16.mxu0 0
  %4804 = vmatpush1.bf16.msra.mxu0 0
  %4805 = vmatprep.subr.bf16.mxu0 0
  %4806 = vmatpush1.bf16.msra.mxu0 0
  %4807 = vmatprep.subr.bf16.mxu0 0
  %4808 = vmatpush1.bf16.msra.mxu0 0
  %4809 = vmatprep.subr.bf16.mxu0 0
  %4810 = vmatpush1.bf16.msra.mxu0 0
  %4811 = vmatprep.subr.bf16.mxu0 0
  %4812 = vmatpush1.bf16.msra.mxu0 0
  %4813 = vmatprep.subr.bf16.mxu0 0
  %4814 = vmatpush1.bf16.msra.mxu0 0
  %4815 = vmatprep.mubr.bf16.mxu0 0
  %4816 = vmatmul.mubr.bf16.gmra.mrb[0].mxu0 %v778
  %v4817 = vpop.f32.mrb[0].mxu0
  %v4818 = vadd.f32 %v4775, %v4817
  %v4819 = vpop.f32.mrb[0].mxu0
  %v4820 = vadd.f32 %v4777, %v4819
  %v4821 = vpop.f32.mrb[0].mxu0
  %v4822 = vadd.f32 %v4779, %v4821
  %v4823 = vpop.f32.mrb[0].mxu0
  %v4824 = vadd.f32 %v4781, %v4823
  %4825 = vdwg.mxu0
  %4826 = vmatprep.subr.bf16.mxu0 %v2907
  %4827 = vmatpush1.bf16.msra.mxu0 %v2906
  %4828 = vmatprep.subr.bf16.mxu0 %v2915
  %4829 = vmatpush1.bf16.msra.mxu0 %v2914
  %4830 = vmatprep.subr.bf16.mxu0 %v2923
  %4831 = vmatpush1.bf16.msra.mxu0 %v2922
  %4832 = vmatprep.subr.bf16.mxu0 %v2931
  %4833 = vmatpush1.bf16.msra.mxu0 %v2930
  %4834 = vmatprep.subr.bf16.mxu0 %v2939
  %4835 = vmatpush1.bf16.msra.mxu0 %v2938
  %4836 = vmatprep.subr.bf16.mxu0 %v2947
  %4837 = vmatpush1.bf16.msra.mxu0 %v2946
  %4838 = vmatprep.subr.bf16.mxu0 %v2955
  %4839 = vmatpush1.bf16.msra.mxu0 %v2954
  %4840 = vmatprep.subr.bf16.mxu0 %v2963
  %4841 = vmatpush1.bf16.msra.mxu0 %v2962
  %4842 = vmatprep.subr.bf16.mxu0 %v2971
  %4843 = vmatpush1.bf16.msra.mxu0 %v2970
  %4844 = vmatprep.subr.bf16.mxu0 %v2979
  %4845 = vmatpush1.bf16.msra.mxu0 %v2978
  %4846 = vmatprep.subr.bf16.mxu0 %v2987
  %4847 = vmatpush1.bf16.msra.mxu0 %v2986
  %4848 = vmatprep.subr.bf16.mxu0 %v2995
  %4849 = vmatpush1.bf16.msra.mxu0 %v2994
  %4850 = vmatprep.subr.bf16.mxu0 %v3003
  %4851 = vmatpush1.bf16.msra.mxu0 %v3002
  %4852 = vmatprep.subr.bf16.mxu0 %v3011
  %4853 = vmatpush1.bf16.msra.mxu0 %v3010
  %4854 = vmatprep.subr.bf16.mxu0 %v3019
  %4855 = vmatpush1.bf16.msra.mxu0 %v3018
  %4856 = vmatprep.subr.bf16.mxu0 %v3027
  %4857 = vmatpush1.bf16.msra.mxu0 %v3026
  %4858 = vmatprep.mubr.bf16.mxu0 %v769
  %4859 = vmatmul.mubr.bf16.gmra.mrb[0].mxu0 %v768
  %v4860 = vpop.f32.mrb[0].mxu0
  %v4861 = vadd.f32 0.0, %v4860
  %v4862 = vpop.f32.mrb[0].mxu0
  %v4863 = vadd.f32 0.0, %v4862
  %v4864 = vpop.f32.mrb[0].mxu0
  %v4865 = vadd.f32 0.0, %v4864
  %v4866 = vpop.f32.mrb[0].mxu0
  %v4867 = vadd.f32 0.0, %v4866
  %4868 = vdwg.mxu0
  %4869 = vmatprep.subr.bf16.mxu0 %v3035
  %4870 = vmatpush1.bf16.msra.mxu0 %v3034
  %4871 = vmatprep.subr.bf16.mxu0 %v3043
  %4872 = vmatpush1.bf16.msra.mxu0 %v3042
  %4873 = vmatprep.subr.bf16.mxu0 %v3051
  %4874 = vmatpush1.bf16.msra.mxu0 %v3050
  %4875 = vmatprep.subr.bf16.mxu0 %v3059
  %4876 = vmatpush1.bf16.msra.mxu0 %v3058
  %4877 = vmatprep.subr.bf16.mxu0 %v3067
  %4878 = vmatpush1.bf16.msra.mxu0 %v3066
  %4879 = vmatprep.subr.bf16.mxu0 %v3075
  %4880 = vmatpush1.bf16.msra.mxu0 %v3074
  %4881 = vmatprep.subr.bf16.mxu0 %v3083
  %4882 = vmatpush1.bf16.msra.mxu0 %v3082
  %4883 = vmatprep.subr.bf16.mxu0 %v3091
  %4884 = vmatpush1.bf16.msra.mxu0 %v3090
  %4885 = vmatprep.subr.bf16.mxu0 %v3099
  %4886 = vmatpush1.bf16.msra.mxu0 %v3098
  %4887 = vmatprep.subr.bf16.mxu0 %v3107
  %4888 = vmatpush1.bf16.msra.mxu0 %v3106
  %4889 = vmatprep.subr.bf16.mxu0 %v3115
  %4890 = vmatpush1.bf16.msra.mxu0 %v3114
  %4891 = vmatprep.subr.bf16.mxu0 %v3123
  %4892 = vmatpush1.bf16.msra.mxu0 %v3122
  %4893 = vmatprep.subr.bf16.mxu0 %v3131
  %4894 = vmatpush1.bf16.msra.mxu0 %v3130
  %4895 = vmatprep.subr.bf16.mxu0 %v3139
  %4896 = vmatpush1.bf16.msra.mxu0 %v3138
  %4897 = vmatprep.subr.bf16.mxu0 %v3147
  %4898 = vmatpush1.bf16.msra.mxu0 %v3146
  %4899 = vmatprep.subr.bf16.mxu0 %v3155
  %4900 = vmatpush1.bf16.msra.mxu0 %v3154
  %4901 = vmatprep.mubr.bf16.mxu0 %v771
  %4902 = vmatmul.mubr.bf16.gmra.mrb[0].mxu0 %v770
  %v4903 = vpop.f32.mrb[0].mxu0
  %v4904 = vadd.f32 %v4861, %v4903
  %v4905 = vpop.f32.mrb[0].mxu0
  %v4906 = vadd.f32 %v4863, %v4905
  %v4907 = vpop.f32.mrb[0].mxu0
  %v4908 = vadd.f32 %v4865, %v4907
  %v4909 = vpop.f32.mrb[0].mxu0
  %v4910 = vadd.f32 %v4867, %v4909
  %4911 = vdwg.mxu0
  %4912 = vmatprep.subr.bf16.mxu0 %v3163
  %4913 = vmatpush1.bf16.msra.mxu0 %v3162
  %4914 = vmatprep.subr.bf16.mxu0 %v3171
  %4915 = vmatpush1.bf16.msra.mxu0 %v3170
  %4916 = vmatprep.subr.bf16.mxu0 %v3179
  %4917 = vmatpush1.bf16.msra.mxu0 %v3178
  %4918 = vmatprep.subr.bf16.mxu0 %v3187
  %4919 = vmatpush1.bf16.msra.mxu0 %v3186
  %4920 = vmatprep.subr.bf16.mxu0 %v3195
  %4921 = vmatpush1.bf16.msra.mxu0 %v3194
  %4922 = vmatprep.subr.bf16.mxu0 %v3203
  %4923 = vmatpush1.bf16.msra.mxu0 %v3202
  %4924 = vmatprep.subr.bf16.mxu0 %v3211
  %4925 = vmatpush1.bf16.msra.mxu0 %v3210
  %4926 = vmatprep.subr.bf16.mxu0 %v3219
  %4927 = vmatpush1.bf16.msra.mxu0 %v3218
  %4928 = vmatprep.subr.bf16.mxu0 %v3227
  %4929 = vmatpush1.bf16.msra.mxu0 %v3226
  %4930 = vmatprep.subr.bf16.mxu0 %v3235
  %4931 = vmatpush1.bf16.msra.mxu0 %v3234
  %4932 = vmatprep.subr.bf16.mxu0 %v3243
  %4933 = vmatpush1.bf16.msra.mxu0 %v3242
  %4934 = vmatprep.subr.bf16.mxu0 %v3251
  %4935 = vmatpush1.bf16.msra.mxu0 %v3250
  %4936 = vmatprep.subr.bf16.mxu0 %v3259
  %4937 = vmatpush1.bf16.msra.mxu0 %v3258
  %4938 = vmatprep.subr.bf16.mxu0 %v3267
  %4939 = vmatpush1.bf16.msra.mxu0 %v3266
  %4940 = vmatprep.subr.bf16.mxu0 %v3275
  %4941 = vmatpush1.bf16.msra.mxu0 %v3274
  %4942 = vmatprep.subr.bf16.mxu0 %v3283
  %4943 = vmatpush1.bf16.msra.mxu0 %v3282
  %4944 = vmatprep.mubr.bf16.mxu0 %v773
  %4945 = vmatmul.mubr.bf16.gmra.mrb[0].mxu0 %v772
  %v4946 = vpop.f32.mrb[0].mxu0
  %v4947 = vadd.f32 %v4904, %v4946
  %v4948 = vpop.f32.mrb[0].mxu0
  %v4949 = vadd.f32 %v4906, %v4948
  %v4950 = vpop.f32.mrb[0].mxu0
  %v4951 = vadd.f32 %v4908, %v4950
  %v4952 = vpop.f32.mrb[0].mxu0
  %v4953 = vadd.f32 %v4910, %v4952
  %4954 = vdwg.mxu0
  %4955 = vmatprep.subr.bf16.mxu0 %v3291
  %4956 = vmatpush1.bf16.msra.mxu0 %v3290
  %4957 = vmatprep.subr.bf16.mxu0 %v3299
  %4958 = vmatpush1.bf16.msra.mxu0 %v3298
  %4959 = vmatprep.subr.bf16.mxu0 %v3307
  %4960 = vmatpush1.bf16.msra.mxu0 %v3306
  %4961 = vmatprep.subr.bf16.mxu0 %v3315
  %4962 = vmatpush1.bf16.msra.mxu0 %v3314
  %4963 = vmatprep.subr.bf16.mxu0 %v3323
  %4964 = vmatpush1.bf16.msra.mxu0 %v3322
  %4965 = vmatprep.subr.bf16.mxu0 %v3331
  %4966 = vmatpush1.bf16.msra.mxu0 %v3330
  %4967 = vmatprep.subr.bf16.mxu0 %v3339
  %4968 = vmatpush1.bf16.msra.mxu0 %v3338
  %4969 = vmatprep.subr.bf16.mxu0 %v3347
  %4970 = vmatpush1.bf16.msra.mxu0 %v3346
  %4971 = vmatprep.subr.bf16.mxu0 %v3355
  %4972 = vmatpush1.bf16.msra.mxu0 %v3354
  %4973 = vmatprep.subr.bf16.mxu0 %v3363
  %4974 = vmatpush1.bf16.msra.mxu0 %v3362
  %4975 = vmatprep.subr.bf16.mxu0 %v3371
  %4976 = vmatpush1.bf16.msra.mxu0 %v3370
  %4977 = vmatprep.subr.bf16.mxu0 %v3379
  %4978 = vmatpush1.bf16.msra.mxu0 %v3378
  %4979 = vmatprep.subr.bf16.mxu0 %v3387
  %4980 = vmatpush1.bf16.msra.mxu0 %v3386
  %4981 = vmatprep.subr.bf16.mxu0 %v3395
  %4982 = vmatpush1.bf16.msra.mxu0 %v3394
  %4983 = vmatprep.subr.bf16.mxu0 %v3403
  %4984 = vmatpush1.bf16.msra.mxu0 %v3402
  %4985 = vmatprep.subr.bf16.mxu0 %v3411
  %4986 = vmatpush1.bf16.msra.mxu0 %v3410
  %4987 = vmatprep.mubr.bf16.mxu0 %v775
  %4988 = vmatmul.mubr.bf16.gmra.mrb[0].mxu0 %v774
  %v4989 = vpop.f32.mrb[0].mxu0
  %v4990 = vadd.f32 %v4947, %v4989
  %v4991 = vpop.f32.mrb[0].mxu0
  %v4992 = vadd.f32 %v4949, %v4991
  %v4993 = vpop.f32.mrb[0].mxu0
  %v4994 = vadd.f32 %v4951, %v4993
  %v4995 = vpop.f32.mrb[0].mxu0
  %v4996 = vadd.f32 %v4953, %v4995
  %4997 = vdwg.mxu0
  %4998 = vmatprep.subr.bf16.mxu0 %v3419
  %4999 = vmatpush1.bf16.msra.mxu0 %v3418
  %5000 = vmatprep.subr.bf16.mxu0 %v3427
  %5001 = vmatpush1.bf16.msra.mxu0 %v3426
  %5002 = vmatprep.subr.bf16.mxu0 %v3435
  %5003 = vmatpush1.bf16.msra.mxu0 %v3434
  %5004 = vmatprep.subr.bf16.mxu0 %v3443
  %5005 = vmatpush1.bf16.msra.mxu0 %v3442
  %5006 = vmatprep.subr.bf16.mxu0 %v3451
  %5007 = vmatpush1.bf16.msra.mxu0 %v3450
  %5008 = vmatprep.subr.bf16.mxu0 %v3459
  %5009 = vmatpush1.bf16.msra.mxu0 %v3458
  %5010 = vmatprep.subr.bf16.mxu0 %v3467
  %5011 = vmatpush1.bf16.msra.mxu0 %v3466
  %5012 = vmatprep.subr.bf16.mxu0 %v3475
  %5013 = vmatpush1.bf16.msra.mxu0 %v3474
  %5014 = vmatprep.subr.bf16.mxu0 %v3483
  %5015 = vmatpush1.bf16.msra.mxu0 %v3482
  %5016 = vmatprep.subr.bf16.mxu0 %v3491
  %5017 = vmatpush1.bf16.msra.mxu0 %v3490
  %5018 = vmatprep.subr.bf16.mxu0 %v3499
  %5019 = vmatpush1.bf16.msra.mxu0 %v3498
  %5020 = vmatprep.subr.bf16.mxu0 %v3507
  %5021 = vmatpush1.bf16.msra.mxu0 %v3506
  %5022 = vmatprep.subr.bf16.mxu0 %v3515
  %5023 = vmatpush1.bf16.msra.mxu0 %v3514
  %5024 = vmatprep.subr.bf16.mxu0 %v3523
  %5025 = vmatpush1.bf16.msra.mxu0 %v3522
  %5026 = vmatprep.subr.bf16.mxu0 %v3531
  %5027 = vmatpush1.bf16.msra.mxu0 %v3530
  %5028 = vmatprep.subr.bf16.mxu0 %v3539
  %5029 = vmatpush1.bf16.msra.mxu0 %v3538
  %5030 = vmatprep.mubr.bf16.mxu0 %v777
  %5031 = vmatmul.mubr.bf16.gmra.mrb[0].mxu0 %v776
  %v5032 = vpop.f32.mrb[0].mxu0
  %v5033 = vadd.f32 %v4990, %v5032
  %v5034 = vpop.f32.mrb[0].mxu0
  %v5035 = vadd.f32 %v4992, %v5034
  %v5036 = vpop.f32.mrb[0].mxu0
  %v5037 = vadd.f32 %v4994, %v5036
  %v5038 = vpop.f32.mrb[0].mxu0
  %v5039 = vadd.f32 %v4996, %v5038
  %5040 = vdwg.mxu0
  %5041 = vmatprep.subr.bf16.mxu0 %v3547
  %5042 = vmatpush1.bf16.msra.mxu0 %v3546
  %5043 = vmatprep.subr.bf16.mxu0 %v3555
  %5044 = vmatpush1.bf16.msra.mxu0 %v3554
  %5045 = vmatprep.subr.bf16.mxu0 %v3563
  %5046 = vmatpush1.bf16.msra.mxu0 %v3562
  %5047 = vmatprep.subr.bf16.mxu0 %v3571
  %5048 = vmatpush1.bf16.msra.mxu0 %v3570
  %5049 = vmatprep.subr.bf16.mxu0 %v3579
  %5050 = vmatpush1.bf16.msra.mxu0 %v3578
  %5051 = vmatprep.subr.bf16.mxu0 %v3587
  %5052 = vmatpush1.bf16.msra.mxu0 %v3586
  %5053 = vmatprep.subr.bf16.mxu0 %v3595
  %5054 = vmatpush1.bf16.msra.mxu0 %v3594
  %5055 = vmatprep.subr.bf16.mxu0 %v3603
  %5056 = vmatpush1.bf16.msra.mxu0 %v3602
  %5057 = vmatprep.subr.bf16.mxu0 0
  %5058 = vmatpush1.bf16.msra.mxu0 0
  %5059 = vmatprep.subr.bf16.mxu0 0
  %5060 = vmatpush1.bf16.msra.mxu0 0
  %5061 = vmatprep.subr.bf16.mxu0 0
  %5062 = vmatpush1.bf16.msra.mxu0 0
  %5063 = vmatprep.subr.bf16.mxu0 0
  %5064 = vmatpush1.bf16.msra.mxu0 0
  %5065 = vmatprep.subr.bf16.mxu0 0
  %5066 = vmatpush1.bf16.msra.mxu0 0
  %5067 = vmatprep.subr.bf16.mxu0 0
  %5068 = vmatpush1.bf16.msra.mxu0 0
  %5069 = vmatprep.subr.bf16.mxu0 0
  %5070 = vmatpush1.bf16.msra.mxu0 0
  %5071 = vmatprep.subr.bf16.mxu0 0
  %5072 = vmatpush1.bf16.msra.mxu0 0
  %5073 = vmatprep.mubr.bf16.mxu0 0
  %5074 = vmatmul.mubr.bf16.gmra.mrb[0].mxu0 %v778
  %v5075 = vpop.f32.mrb[0].mxu0
  %v5076 = vadd.f32 %v5033, %v5075
  %v5077 = vpop.f32.mrb[0].mxu0
  %v5078 = vadd.f32 %v5035, %v5077
  %v5079 = vpop.f32.mrb[0].mxu0
  %v5080 = vadd.f32 %v5037, %v5079
  %v5081 = vpop.f32.mrb[0].mxu0
  %v5082 = vadd.f32 %v5039, %v5081
  %5083 = vdwg.mxu0
  %5084 = vmatprep.subr.bf16.mxu0 %v2909
  %5085 = vmatpush1.bf16.msra.mxu0 %v2908
  %5086 = vmatprep.subr.bf16.mxu0 %v2917
  %5087 = vmatpush1.bf16.msra.mxu0 %v2916
  %5088 = vmatprep.subr.bf16.mxu0 %v2925
  %5089 = vmatpush1.bf16.msra.mxu0 %v2924
  %5090 = vmatprep.subr.bf16.mxu0 %v2933
  %5091 = vmatpush1.bf16.msra.mxu0 %v2932
  %5092 = vmatprep.subr.bf16.mxu0 %v2941
  %5093 = vmatpush1.bf16.msra.mxu0 %v2940
  %5094 = vmatprep.subr.bf16.mxu0 %v2949
  %5095 = vmatpush1.bf16.msra.mxu0 %v2948
  %5096 = vmatprep.subr.bf16.mxu0 %v2957
  %5097 = vmatpush1.bf16.msra.mxu0 %v2956
  %5098 = vmatprep.subr.bf16.mxu0 %v2965
  %5099 = vmatpush1.bf16.msra.mxu0 %v2964
  %5100 = vmatprep.subr.bf16.mxu0 %v2973
  %5101 = vmatpush1.bf16.msra.mxu0 %v2972
  %5102 = vmatprep.subr.bf16.mxu0 %v2981
  %5103 = vmatpush1.bf16.msra.mxu0 %v2980
  %5104 = vmatprep.subr.bf16.mxu0 %v2989
  %5105 = vmatpush1.bf16.msra.mxu0 %v2988
  %5106 = vmatprep.subr.bf16.mxu0 %v2997
  %5107 = vmatpush1.bf16.msra.mxu0 %v2996
  %5108 = vmatprep.subr.bf16.mxu0 %v3005
  %5109 = vmatpush1.bf16.msra.mxu0 %v3004
  %5110 = vmatprep.subr.bf16.mxu0 %v3013
  %5111 = vmatpush1.bf16.msra.mxu0 %v3012
  %5112 = vmatprep.subr.bf16.mxu0 %v3021
  %5113 = vmatpush1.bf16.msra.mxu0 %v3020
  %5114 = vmatprep.subr.bf16.mxu0 %v3029
  %5115 = vmatpush1.bf16.msra.mxu0 %v3028
  %5116 = vmatprep.mubr.bf16.mxu0 %v769
  %5117 = vmatmul.mubr.bf16.gmra.mrb[0].mxu0 %v768
  %v5118 = vpop.f32.mrb[0].mxu0
  %v5119 = vadd.f32 0.0, %v5118
  %v5120 = vpop.f32.mrb[0].mxu0
  %v5121 = vadd.f32 0.0, %v5120
  %v5122 = vpop.f32.mrb[0].mxu0
  %v5123 = vadd.f32 0.0, %v5122
  %v5124 = vpop.f32.mrb[0].mxu0
  %v5125 = vadd.f32 0.0, %v5124
  %5126 = vdwg.mxu0
  %5127 = vmatprep.subr.bf16.mxu0 %v3037
  %5128 = vmatpush1.bf16.msra.mxu0 %v3036
  %5129 = vmatprep.subr.bf16.mxu0 %v3045
  %5130 = vmatpush1.bf16.msra.mxu0 %v3044
  %5131 = vmatprep.subr.bf16.mxu0 %v3053
  %5132 = vmatpush1.bf16.msra.mxu0 %v3052
  %5133 = vmatprep.subr.bf16.mxu0 %v3061
  %5134 = vmatpush1.bf16.msra.mxu0 %v3060
  %5135 = vmatprep.subr.bf16.mxu0 %v3069
  %5136 = vmatpush1.bf16.msra.mxu0 %v3068
  %5137 = vmatprep.subr.bf16.mxu0 %v3077
  %5138 = vmatpush1.bf16.msra.mxu0 %v3076
  %5139 = vmatprep.subr.bf16.mxu0 %v3085
  %5140 = vmatpush1.bf16.msra.mxu0 %v3084
  %5141 = vmatprep.subr.bf16.mxu0 %v3093
  %5142 = vmatpush1.bf16.msra.mxu0 %v3092
  %5143 = vmatprep.subr.bf16.mxu0 %v3101
  %5144 = vmatpush1.bf16.msra.mxu0 %v3100
  %5145 = vmatprep.subr.bf16.mxu0 %v3109
  %5146 = vmatpush1.bf16.msra.mxu0 %v3108
  %5147 = vmatprep.subr.bf16.mxu0 %v3117
  %5148 = vmatpush1.bf16.msra.mxu0 %v3116
  %5149 = vmatprep.subr.bf16.mxu0 %v3125
  %5150 = vmatpush1.bf16.msra.mxu0 %v3124
  %5151 = vmatprep.subr.bf16.mxu0 %v3133
  %5152 = vmatpush1.bf16.msra.mxu0 %v3132
  %5153 = vmatprep.subr.bf16.mxu0 %v3141
  %5154 = vmatpush1.bf16.msra.mxu0 %v3140
  %5155 = vmatprep.subr.bf16.mxu0 %v3149
  %5156 = vmatpush1.bf16.msra.mxu0 %v3148
  %5157 = vmatprep.subr.bf16.mxu0 %v3157
  %5158 = vmatpush1.bf16.msra.mxu0 %v3156
  %5159 = vmatprep.mubr.bf16.mxu0 %v771
  %5160 = vmatmul.mubr.bf16.gmra.mrb[0].mxu0 %v770
  %v5161 = vpop.f32.mrb[0].mxu0
  %v5162 = vadd.f32 %v5119, %v5161
  %v5163 = vpop.f32.mrb[0].mxu0
  %v5164 = vadd.f32 %v5121, %v5163
  %v5165 = vpop.f32.mrb[0].mxu0
  %v5166 = vadd.f32 %v5123, %v5165
  %v5167 = vpop.f32.mrb[0].mxu0
  %v5168 = vadd.f32 %v5125, %v5167
  %5169 = vdwg.mxu0
  %5170 = vmatprep.subr.bf16.mxu0 %v3165
  %5171 = vmatpush1.bf16.msra.mxu0 %v3164
  %5172 = vmatprep.subr.bf16.mxu0 %v3173
  %5173 = vmatpush1.bf16.msra.mxu0 %v3172
  %5174 = vmatprep.subr.bf16.mxu0 %v3181
  %5175 = vmatpush1.bf16.msra.mxu0 %v3180
  %5176 = vmatprep.subr.bf16.mxu0 %v3189
  %5177 = vmatpush1.bf16.msra.mxu0 %v3188
  %5178 = vmatprep.subr.bf16.mxu0 %v3197
  %5179 = vmatpush1.bf16.msra.mxu0 %v3196
  %5180 = vmatprep.subr.bf16.mxu0 %v3205
  %5181 = vmatpush1.bf16.msra.mxu0 %v3204
  %5182 = vmatprep.subr.bf16.mxu0 %v3213
  %5183 = vmatpush1.bf16.msra.mxu0 %v3212
  %5184 = vmatprep.subr.bf16.mxu0 %v3221
  %5185 = vmatpush1.bf16.msra.mxu0 %v3220
  %5186 = vmatprep.subr.bf16.mxu0 %v3229
  %5187 = vmatpush1.bf16.msra.mxu0 %v3228
  %5188 = vmatprep.subr.bf16.mxu0 %v3237
  %5189 = vmatpush1.bf16.msra.mxu0 %v3236
  %5190 = vmatprep.subr.bf16.mxu0 %v3245
  %5191 = vmatpush1.bf16.msra.mxu0 %v3244
  %5192 = vmatprep.subr.bf16.mxu0 %v3253
  %5193 = vmatpush1.bf16.msra.mxu0 %v3252
  %5194 = vmatprep.subr.bf16.mxu0 %v3261
  %5195 = vmatpush1.bf16.msra.mxu0 %v3260
  %5196 = vmatprep.subr.bf16.mxu0 %v3269
  %5197 = vmatpush1.bf16.msra.mxu0 %v3268
  %5198 = vmatprep.subr.bf16.mxu0 %v3277
  %5199 = vmatpush1.bf16.msra.mxu0 %v3276
  %5200 = vmatprep.subr.bf16.mxu0 %v3285
  %5201 = vmatpush1.bf16.msra.mxu0 %v3284
  %5202 = vmatprep.mubr.bf16.mxu0 %v773
  %5203 = vmatmul.mubr.bf16.gmra.mrb[0].mxu0 %v772
  %v5204 = vpop.f32.mrb[0].mxu0
  %v5205 = vadd.f32 %v5162, %v5204
  %v5206 = vpop.f32.mrb[0].mxu0
  %v5207 = vadd.f32 %v5164, %v5206
  %v5208 = vpop.f32.mrb[0].mxu0
  %v5209 = vadd.f32 %v5166, %v5208
  %v5210 = vpop.f32.mrb[0].mxu0
  %v5211 = vadd.f32 %v5168, %v5210
  %5212 = vdwg.mxu0
  %5213 = vmatprep.subr.bf16.mxu0 %v3293
  %5214 = vmatpush1.bf16.msra.mxu0 %v3292
  %5215 = vmatprep.subr.bf16.mxu0 %v3301
  %5216 = vmatpush1.bf16.msra.mxu0 %v3300
  %5217 = vmatprep.subr.bf16.mxu0 %v3309
  %5218 = vmatpush1.bf16.msra.mxu0 %v3308
  %5219 = vmatprep.subr.bf16.mxu0 %v3317
  %5220 = vmatpush1.bf16.msra.mxu0 %v3316
  %5221 = vmatprep.subr.bf16.mxu0 %v3325
  %5222 = vmatpush1.bf16.msra.mxu0 %v3324
  %5223 = vmatprep.subr.bf16.mxu0 %v3333
  %5224 = vmatpush1.bf16.msra.mxu0 %v3332
  %5225 = vmatprep.subr.bf16.mxu0 %v3341
  %5226 = vmatpush1.bf16.msra.mxu0 %v3340
  %5227 = vmatprep.subr.bf16.mxu0 %v3349
  %5228 = vmatpush1.bf16.msra.mxu0 %v3348
  %5229 = vmatprep.subr.bf16.mxu0 %v3357
  %5230 = vmatpush1.bf16.msra.mxu0 %v3356
  %5231 = vmatprep.subr.bf16.mxu0 %v3365
  %5232 = vmatpush1.bf16.msra.mxu0 %v3364
  %5233 = vmatprep.subr.bf16.mxu0 %v3373
  %5234 = vmatpush1.bf16.msra.mxu0 %v3372
  %5235 = vmatprep.subr.bf16.mxu0 %v3381
  %5236 = vmatpush1.bf16.msra.mxu0 %v3380
  %5237 = vmatprep.subr.bf16.mxu0 %v3389
  %5238 = vmatpush1.bf16.msra.mxu0 %v3388
  %5239 = vmatprep.subr.bf16.mxu0 %v3397
  %5240 = vmatpush1.bf16.msra.mxu0 %v3396
  %5241 = vmatprep.subr.bf16.mxu0 %v3405
  %5242 = vmatpush1.bf16.msra.mxu0 %v3404
  %5243 = vmatprep.subr.bf16.mxu0 %v3413
  %5244 = vmatpush1.bf16.msra.mxu0 %v3412
  %5245 = vmatprep.mubr.bf16.mxu0 %v775
  %5246 = vmatmul.mubr.bf16.gmra.mrb[0].mxu0 %v774
  %v5247 = vpop.f32.mrb[0].mxu0
  %v5248 = vadd.f32 %v5205, %v5247
  %v5249 = vpop.f32.mrb[0].mxu0
  %v5250 = vadd.f32 %v5207, %v5249
  %v5251 = vpop.f32.mrb[0].mxu0
  %v5252 = vadd.f32 %v5209, %v5251
  %v5253 = vpop.f32.mrb[0].mxu0
  %v5254 = vadd.f32 %v5211, %v5253
  %5255 = vdwg.mxu0
  %5256 = vmatprep.subr.bf16.mxu0 %v3421
  %5257 = vmatpush1.bf16.msra.mxu0 %v3420
  %5258 = vmatprep.subr.bf16.mxu0 %v3429
  %5259 = vmatpush1.bf16.msra.mxu0 %v3428
  %5260 = vmatprep.subr.bf16.mxu0 %v3437
  %5261 = vmatpush1.bf16.msra.mxu0 %v3436
  %5262 = vmatprep.subr.bf16.mxu0 %v3445
  %5263 = vmatpush1.bf16.msra.mxu0 %v3444
  %5264 = vmatprep.subr.bf16.mxu0 %v3453
  %5265 = vmatpush1.bf16.msra.mxu0 %v3452
  %5266 = vmatprep.subr.bf16.mxu0 %v3461
  %5267 = vmatpush1.bf16.msra.mxu0 %v3460
  %5268 = vmatprep.subr.bf16.mxu0 %v3469
  %5269 = vmatpush1.bf16.msra.mxu0 %v3468
  %5270 = vmatprep.subr.bf16.mxu0 %v3477
  %5271 = vmatpush1.bf16.msra.mxu0 %v3476
  %5272 = vmatprep.subr.bf16.mxu0 %v3485
  %5273 = vmatpush1.bf16.msra.mxu0 %v3484
  %5274 = vmatprep.subr.bf16.mxu0 %v3493
  %5275 = vmatpush1.bf16.msra.mxu0 %v3492
  %5276 = vmatprep.subr.bf16.mxu0 %v3501
  %5277 = vmatpush1.bf16.msra.mxu0 %v3500
  %5278 = vmatprep.subr.bf16.mxu0 %v3509
  %5279 = vmatpush1.bf16.msra.mxu0 %v3508
  %5280 = vmatprep.subr.bf16.mxu0 %v3517
  %5281 = vmatpush1.bf16.msra.mxu0 %v3516
  %5282 = vmatprep.subr.bf16.mxu0 %v3525
  %5283 = vmatpush1.bf16.msra.mxu0 %v3524
  %5284 = vmatprep.subr.bf16.mxu0 %v3533
  %5285 = vmatpush1.bf16.msra.mxu0 %v3532
  %5286 = vmatprep.subr.bf16.mxu0 %v3541
  %5287 = vmatpush1.bf16.msra.mxu0 %v3540
  %5288 = vmatprep.mubr.bf16.mxu0 %v777
  %5289 = vmatmul.mubr.bf16.gmra.mrb[0].mxu0 %v776
  %v5290 = vpop.f32.mrb[0].mxu0
  %v5291 = vadd.f32 %v5248, %v5290
  %v5292 = vpop.f32.mrb[0].mxu0
  %v5293 = vadd.f32 %v5250, %v5292
  %v5294 = vpop.f32.mrb[0].mxu0
  %v5295 = vadd.f32 %v5252, %v5294
  %v5296 = vpop.f32.mrb[0].mxu0
  %v5297 = vadd.f32 %v5254, %v5296
  %5298 = vdwg.mxu0
  %5299 = vmatprep.subr.bf16.mxu0 %v3549
  %5300 = vmatpush1.bf16.msra.mxu0 %v3548
  %5301 = vmatprep.subr.bf16.mxu0 %v3557
  %5302 = vmatpush1.bf16.msra.mxu0 %v3556
  %5303 = vmatprep.subr.bf16.mxu0 %v3565
  %5304 = vmatpush1.bf16.msra.mxu0 %v3564
  %5305 = vmatprep.subr.bf16.mxu0 %v3573
  %5306 = vmatpush1.bf16.msra.mxu0 %v3572
  %5307 = vmatprep.subr.bf16.mxu0 %v3581
  %5308 = vmatpush1.bf16.msra.mxu0 %v3580
  %5309 = vmatprep.subr.bf16.mxu0 %v3589
  %5310 = vmatpush1.bf16.msra.mxu0 %v3588
  %5311 = vmatprep.subr.bf16.mxu0 %v3597
  %5312 = vmatpush1.bf16.msra.mxu0 %v3596
  %5313 = vmatprep.subr.bf16.mxu0 %v3605
  %5314 = vmatpush1.bf16.msra.mxu0 %v3604
  %5315 = vmatprep.subr.bf16.mxu0 0
  %5316 = vmatpush1.bf16.msra.mxu0 0
  %5317 = vmatprep.subr.bf16.mxu0 0
  %5318 = vmatpush1.bf16.msra.mxu0 0
  %5319 = vmatprep.subr.bf16.mxu0 0
  %5320 = vmatpush1.bf16.msra.mxu0 0
  %5321 = vmatprep.subr.bf16.mxu0 0
  %5322 = vmatpush1.bf16.msra.mxu0 0
  %5323 = vmatprep.subr.bf16.mxu0 0
  %5324 = vmatpush1.bf16.msra.mxu0 0
  %5325 = vmatprep.subr.bf16.mxu0 0
  %5326 = vmatpush1.bf16.msra.mxu0 0
  %5327 = vmatprep.subr.bf16.mxu0 0
  %5328 = vmatpush1.bf16.msra.mxu0 0
  %5329 = vmatprep.subr.bf16.mxu0 0
  %5330 = vmatpush1.bf16.msra.mxu0 0
  %5331 = vmatprep.mubr.bf16.mxu0 0
  %5332 = vmatmul.mubr.bf16.gmra.mrb[0].mxu0 %v778
  %v5333 = vpop.f32.mrb[0].mxu0
  %v5334 = vadd.f32 %v5291, %v5333
  %v5335 = vpop.f32.mrb[0].mxu0
  %v5336 = vadd.f32 %v5293, %v5335
  %v5337 = vpop.f32.mrb[0].mxu0
  %v5338 = vadd.f32 %v5295, %v5337
  %v5339 = vpop.f32.mrb[0].mxu0
  %v5340 = vadd.f32 %v5297, %v5339
  %5341 = vdwg.mxu0
  %5342 = vst [vmem:[#allocation2] sm:$0xff] %v4560
  %5343 = vst [vmem:[#allocation2 + $0x8] sm:$0xff] %v4562
  %5344 = vst [vmem:[#allocation2 + $0x10] sm:$0xff] %v4818
  %5345 = vst [vmem:[#allocation2 + $0x18] sm:$0xff] %v4820
  %5346 = vst [vmem:[#allocation2 + $0x20] sm:$0xff] %v5076
  %5347 = vst [vmem:[#allocation2 + $0x28] sm:$0xff] %v5078
  %5348 = vst [vmem:[#allocation2 + $0x30] sm:$0xff] %v5334
  %5349 = vst [vmem:[#allocation2 + $0x38] sm:$0xff] %v5336
  %5350 = vst [vmem:[#allocation2 + $0x40] sm:$0xff] %v4564
  %5351 = vst [vmem:[#allocation2 + $0x48] sm:$0xff] %v4566
  %5352 = vst [vmem:[#allocation2 + $0x50] sm:$0xff] %v4822
  %5353 = vst [vmem:[#allocation2 + $0x58] sm:$0xff] %v4824
  %5354 = vst [vmem:[#allocation2 + $0x60] sm:$0xff] %v5080
  %5355 = vst [vmem:[#allocation2 + $0x68] sm:$0xff] %v5082
  %5356 = vst [vmem:[#allocation2 + $0x70] sm:$0xff] %v5338
  %5357 = vst [vmem:[#allocation2 + $0x78] sm:$0xff] %v5340
  %p5358 = scmp.eq.s32.totalorder 0, 0
  // Predicated region
  $region18: #{adaptive_spatial_condenser.2} parent=0 // pred_check
    %p5359 = pneg %p5358
  $region19: #{adaptive_spatial_condenser.2} parent=0 // pred_check_branch
    %5361 = sbr.rel (%p5359) target = $region21
  $region20: #{adaptive_spatial_condenser.2} parent=0 // pred_region
    %v5362 = vld [vmem:[#allocation2] sm:$0xff]
    %v5363 = vld [vmem:[#allocation2 + $0x8] sm:$0xff]
    %v5364 = vld [vmem:[#allocation2 + $0x10] sm:$0xff]
    %v5365 = vld [vmem:[#allocation2 + $0x18] sm:$0xff]
    %v5366 = vld [vmem:[#allocation2 + $0x20] sm:$0xff]
    %v5367 = vld [vmem:[#allocation2 + $0x28] sm:$0xff]
    %v5368 = vld [vmem:[#allocation2 + $0x30] sm:$0xff]
    %v5369 = vld [vmem:[#allocation2 + $0x38] sm:$0xff]
    %v5370 = vld [vmem:[#allocation2 + $0x40] sm:$0xff]
    %v5371 = vld [vmem:[#allocation2 + $0x48] sm:$0xff]
    %v5372 = vld [vmem:[#allocation2 + $0x50] sm:$0xff]
    %v5373 = vld [vmem:[#allocation2 + $0x58] sm:$0xff]
    %v5374 = vld [vmem:[#allocation2 + $0x60] sm:$0xff]
    %v5375 = vld [vmem:[#allocation2 + $0x68] sm:$0xff]
    %v5376 = vld [vmem:[#allocation2 + $0x70] sm:$0xff]
    %v5377 = vld [vmem:[#allocation2 + $0x78] sm:$0xff]
    %v5378 = vadd.f32 %v5362, %v5363
    %v5379 = vadd.f32 %v5378, %v5364
    %v5380 = vadd.f32 %v5379, %v5365
    %v5381 = vadd.f32 %v5380, %v5366
    %v5382 = vadd.f32 %v5381, %v5367
    %v5383 = vadd.f32 %v5382, %v5368
    %v5384 = vadd.f32 %v5383, %v5369
    %5385 = vadd.xlane.f32.xlu0 %v5384
    %v5386 = vpop.xlane.xlu0 %5385
    %v5387 = vadd.f32 %v5370, %v5371
    %v5388 = vadd.f32 %v5387, %v5372
    %v5389 = vadd.f32 %v5388, %v5373
    %v5390 = vadd.f32 %v5389, %v5374
    %v5391 = vadd.f32 %v5390, %v5375
    %v5392 = vadd.f32 %v5391, %v5376
    %v5393 = vadd.f32 %v5392, %v5377
    %5394 = vadd.xlane.f32.xlu0 %v5393
    %v5395 = vpop.xlane.xlu0 %5394
    %v5396 = vmul.f32 %v5386, 0.0009765625
    %v5397 = vmul.f32 %v5395, 0.0009765625
    %v5398 = vsub.f32 %v5362, %v5396
    %v5399 = vsub.f32 %v5363, %v5396
    %v5400 = vsub.f32 %v5364, %v5396
    %v5401 = vsub.f32 %v5365, %v5396
    %v5402 = vsub.f32 %v5366, %v5396
    %v5403 = vsub.f32 %v5367, %v5396
    %v5404 = vsub.f32 %v5368, %v5396
    %v5405 = vsub.f32 %v5369, %v5396
    %v5406 = vsub.f32 %v5370, %v5397
    %v5407 = vsub.f32 %v5371, %v5397
    %v5408 = vsub.f32 %v5372, %v5397
    %v5409 = vsub.f32 %v5373, %v5397
    %v5410 = vsub.f32 %v5374, %v5397
    %v5411 = vsub.f32 %v5375, %v5397
    %v5412 = vsub.f32 %v5376, %v5397
    %v5413 = vsub.f32 %v5377, %v5397
    %v5414 = vmul.f32 %v5398, %v5398
    %v5415 = vmul.f32 %v5399, %v5399
    %v5416 = vmul.f32 %v5400, %v5400
    %v5417 = vmul.f32 %v5401, %v5401
    %v5418 = vmul.f32 %v5402, %v5402
    %v5419 = vmul.f32 %v5403, %v5403
    %v5420 = vmul.f32 %v5404, %v5404
    %v5421 = vmul.f32 %v5405, %v5405
    %v5422 = vmul.f32 %v5406, %v5406
    %v5423 = vmul.f32 %v5407, %v5407
    %v5424 = vmul.f32 %v5408, %v5408
    %v5425 = vmul.f32 %v5409, %v5409
    %v5426 = vmul.f32 %v5410, %v5410
    %v5427 = vmul.f32 %v5411, %v5411
    %v5428 = vmul.f32 %v5412, %v5412
    %v5429 = vmul.f32 %v5413, %v5413
    %v5430 = vadd.f32 %v5414, %v5415
    %v5431 = vadd.f32 %v5430, %v5416
    %v5432 = vadd.f32 %v5431, %v5417
    %v5433 = vadd.f32 %v5432, %v5418
    %v5434 = vadd.f32 %v5433, %v5419
    %v5435 = vadd.f32 %v5434, %v5420
    %v5436 = vadd.f32 %v5435, %v5421
    %5437 = vadd.xlane.f32.xlu0 %v5436
    %v5438 = vpop.xlane.xlu0 %5437
    %v5439 = vadd.f32 %v5422, %v5423
    %v5440 = vadd.f32 %v5439, %v5424
    %v5441 = vadd.f32 %v5440, %v5425
    %v5442 = vadd.f32 %v5441, %v5426
    %v5443 = vadd.f32 %v5442, %v5427
    %v5444 = vadd.f32 %v5443, %v5428
    %v5445 = vadd.f32 %v5444, %v5429
    %5446 = vadd.xlane.f32.xlu0 %v5445
    %v5447 = vpop.xlane.xlu0 %5446
    %v5448 = vmul.f32 %v5438, 0.0009765625
    %v5449 = vmul.f32 %v5447, 0.0009765625
    %v5450 = vld [vmem:[%s2] sm:$0xff]
    %v5451 = vld [vmem:[%s2 + $0x8] sm:$0xff]
    %v5452 = vadd.f32 %v5448, 1e-05
    %v5453 = vadd.f32 %v5449, 1e-05
    %v5454 = vrsqrt.pop %v5452
    %v5455 = vrsqrt.pop %v5453
    %v5456 = vmul.f32 %v5450, %v5454
    %v5457 = vmul.f32 %v5451, %v5455
    %v5458 = vld [vmem:[%s3] sm:$0xff]
    %v5459 = vld [vmem:[%s3 + $0x8] sm:$0xff]
    %v5460 = vmul.f32 %v5396, %v5456
    %v5461 = vmul.f32 %v5397, %v5457
    %v5462 = vsub.f32 %v5458, %v5460
    %v5463 = vsub.f32 %v5459, %v5461
    %5465 = vset.pattern.permute.xlu0 0
    %5466 = vperm.xlu0 %5465, %v5456
    %v5467 = vpop.permute.xlu0 %5466
    %5470 = vset.pattern.permute.xlu0 0
    %5471 = vperm.xlu0 %5470, %v5457
    %v5472 = vpop.permute.xlu0 %5471
    %v5474 = vmul.f32 %v5362, %v5467
    %v5475 = vmul.f32 %v5363, %v5467
    %v5476 = vmul.f32 %v5364, %v5467
    %v5477 = vmul.f32 %v5365, %v5467
    %v5478 = vmul.f32 %v5366, %v5467
    %v5479 = vmul.f32 %v5367, %v5467
    %v5480 = vmul.f32 %v5368, %v5467
    %v5481 = vmul.f32 %v5369, %v5467
    %v5482 = vmul.f32 %v5370, %v5472
    %v5483 = vmul.f32 %v5371, %v5472
    %v5484 = vmul.f32 %v5372, %v5472
    %v5485 = vmul.f32 %v5373, %v5472
    %v5486 = vmul.f32 %v5374, %v5472
    %v5487 = vmul.f32 %v5375, %v5472
    %v5488 = vmul.f32 %v5376, %v5472
    %v5489 = vmul.f32 %v5377, %v5472
    %5491 = vset.pattern.permute.xlu0 0
    %5492 = vperm.xlu0 %5491, %v5462
    %v5493 = vpop.permute.xlu0 %5492
    %5496 = vset.pattern.permute.xlu0 0
    %5497 = vperm.xlu0 %5496, %v5463
    %v5498 = vpop.permute.xlu0 %5497
    %v5500 = vadd.f32 %v5474, %v5493
    %v5501 = vadd.f32 %v5475, %v5493
    %v5502 = vadd.f32 %v5476, %v5493
    %v5503 = vadd.f32 %v5477, %v5493
    %v5504 = vadd.f32 %v5478, %v5493
    %v5505 = vadd.f32 %v5479, %v5493
    %v5506 = vadd.f32 %v5480, %v5493
    %v5507 = vadd.f32 %v5481, %v5493
    %v5508 = vadd.f32 %v5482, %v5498
    %v5509 = vadd.f32 %v5483, %v5498
    %v5510 = vadd.f32 %v5484, %v5498
    %v5511 = vadd.f32 %v5485, %v5498
    %v5512 = vadd.f32 %v5486, %v5498
    %v5513 = vadd.f32 %v5487, %v5498
    %v5514 = vadd.f32 %v5488, %v5498
    %v5515 = vadd.f32 %v5489, %v5498
    %v5516 = vmax.f32 %v5500, 0.0
    %v5517 = vmax.f32 %v5501, 0.0
    %v5518 = vmax.f32 %v5502, 0.0
    %v5519 = vmax.f32 %v5503, 0.0
    %v5520 = vmax.f32 %v5504, 0.0
    %v5521 = vmax.f32 %v5505, 0.0
    %v5522 = vmax.f32 %v5506, 0.0
    %v5523 = vmax.f32 %v5507, 0.0
    %v5524 = vmax.f32 %v5508, 0.0
    %v5525 = vmax.f32 %v5509, 0.0
    %v5526 = vmax.f32 %v5510, 0.0
    %v5527 = vmax.f32 %v5511, 0.0
    %v5528 = vmax.f32 %v5512, 0.0
    %v5529 = vmax.f32 %v5513, 0.0
    %v5530 = vmax.f32 %v5514, 0.0
    %v5531 = vmax.f32 %v5515, 0.0
    %v5532 = vpack.c.bf16 %v5524, %v5516
    %v5533 = vpack.c.bf16 %v5525, %v5517
    %v5534 = vpack.c.bf16 %v5526, %v5518
    %v5535 = vpack.c.bf16 %v5527, %v5519
    %v5536 = vpack.c.bf16 %v5528, %v5520
    %v5537 = vpack.c.bf16 %v5529, %v5521
    %v5538 = vpack.c.bf16 %v5530, %v5522
    %v5539 = vpack.c.bf16 %v5531, %v5523
    %v5548 = vunpack.c.l.b16 %v5532
    %v5549 = vunpack.c.l.b16 %v5533
    %v5550 = vunpack.c.l.b16 %v5534
    %v5551 = vunpack.c.l.b16 %v5535
    %v5552 = vunpack.c.l.b16 %v5536
    %v5553 = vunpack.c.l.b16 %v5537
    %v5554 = vunpack.c.l.b16 %v5538
    %v5555 = vunpack.c.l.b16 %v5539
    %v5556 = vunpack.c.h.b16 %v5532
    %v5557 = vunpack.c.h.b16 %v5533
    %v5558 = vunpack.c.h.b16 %v5534
    %v5559 = vunpack.c.h.b16 %v5535
    %v5560 = vunpack.c.h.b16 %v5536
    %v5561 = vunpack.c.h.b16 %v5537
    %v5562 = vunpack.c.h.b16 %v5538
    %v5563 = vunpack.c.h.b16 %v5539
    %v5564 = vpack.c.b16 %v5549, %v5548
    %v5565 = vpack.c.b16 %v5551, %v5550
    %v5566 = vpack.c.b16 %v5553, %v5552
    %v5567 = vpack.c.b16 %v5555, %v5554
    %v5568 = vpack.c.b16 %v5557, %v5556
    %v5569 = vpack.c.b16 %v5559, %v5558
    %v5570 = vpack.c.b16 %v5561, %v5560
    %v5571 = vpack.c.b16 %v5563, %v5562
    %5580 = vst [vmem:[%s4] sm:$0xff] %v5564
    %5581 = vst [vmem:[%s4 + $0x8] sm:$0xff] %v5565
    %5582 = vst [vmem:[%s4 + $0x10] sm:$0xff] %v5566
    %5583 = vst [vmem:[%s4 + $0x18] sm:$0xff] %v5567
    %5584 = vst [vmem:[%s4 + $0x20] sm:$0xff] %v5568
    %5585 = vst [vmem:[%s4 + $0x28] sm:$0xff] %v5569
    %5586 = vst [vmem:[%s4 + $0x30] sm:$0xff] %v5570
    %5587 = vst [vmem:[%s4 + $0x38] sm:$0xff] %v5571
  $region21: #{adaptive_spatial_condenser.2} parent=0 // pred_fallthru
    _
  // Predicated region
  $region22: #{adaptive_spatial_condenser.2} parent=0 // pred_check
    _
  $region23: #{adaptive_spatial_condenser.2} parent=0 // pred_check_branch
    %5589 = sbr.rel (0) target = $region25
  $region24: #{adaptive_spatial_condenser.2} parent=0 // pred_region
    _
  $region25: #{adaptive_spatial_condenser.2} parent=0 // pred_fallthru
    _
  // Predicated region
  $region26: #{adaptive_spatial_condenser.2} parent=0 // pred_check
    _
  $region27: #{adaptive_spatial_condenser.2} parent=0 // pred_check_branch
    %5591 = sbr.rel (0) target = $region29
  $region28: #{adaptive_spatial_condenser.2} parent=0 // pred_region
    _
  $region29: #{adaptive_spatial_condenser.2} parent=0 // pred_fallthru
    _

// kernel: adaptive_spatial_condenser.3
$region0: #{adaptive_spatial_condenser.3}
  #allocation0 [shape = 'u32[]', space=smem, size = 0x4, offset = 0x4, fixed_abs, tag = 'smem constant byte address 0x4 - core index']
  #allocation1 [shape = 'u32[144,128]{1,0:T(1,128)}', space=vmem, size = 0x12000, scoped, tag = 'internal scratch']
  #allocation2 [shape = 'f32[16,128]{1,0:T(8,128)}', space=vmem, size = 0x2000, scoped, tag = 'scratch operand']
  %s0 = inlined_call_operand.vmem [shape: bf16[1408,128], index: 0, kind: input, shape index: {}]
  %s1 = inlined_call_operand.vmem [shape: bf16[16,1408], index: 1, kind: input, shape index: {}]
  %s2 = inlined_call_operand.vmem [shape: f32[16,1], index: 2, kind: input, shape index: {}]
  %s3 = inlined_call_operand.vmem [shape: f32[16,1], index: 3, kind: input, shape index: {}]
  %s4 = inlined_call_operand.vmem [shape: f32[16,128], index: 4, kind: output, shape index: {}]
  %s5 = sld [smem:[#allocation0]]
  $region30: #{adaptive_spatial_condenser.3} parent=0
    _
  %s7 = ssub.s32 1, %s5
  %s8 = scalar_select 0, %s7, %s5
  // Predicated region
  $region2: #{adaptive_spatial_condenser.3} parent=0 // pred_check
    _
  $region3: #{adaptive_spatial_condenser.3} parent=0 // pred_check_branch
    %10 = sbr.rel (0) target = $region5
  $region4: #{adaptive_spatial_condenser.3} parent=0 // pred_region
    _
  $region5: #{adaptive_spatial_condenser.3} parent=0 // pred_fallthru
    _
  // Predicated region
  $region6: #{adaptive_spatial_condenser.3} parent=0 // pred_check
    _
  $region7: #{adaptive_spatial_condenser.3} parent=0 // pred_check_branch
    %12 = sbr.rel (0) target = $region9
  $region8: #{adaptive_spatial_condenser.3} parent=0 // pred_region
    _
  $region9: #{adaptive_spatial_condenser.3} parent=0 // pred_fallthru
    _
  // Predicated region
  $region10: #{adaptive_spatial_condenser.3} parent=0 // pred_check
    _
  $region11: #{adaptive_spatial_condenser.3} parent=0 // pred_check_branch
    %14 = sbr.rel (0) target = $region13
  $region12: #{adaptive_spatial_condenser.3} parent=0 // pred_region
    _
  $region13: #{adaptive_spatial_condenser.3} parent=0 // pred_fallthru
    _
  // Predicated region
  $region14: #{adaptive_spatial_condenser.3} parent=0 // pred_check
    _
  $region15: #{adaptive_spatial_condenser.3} parent=0 // pred_check_branch
    %16 = sbr.rel (0) target = $region17
  $region16: #{adaptive_spatial_condenser.3} parent=0 // pred_region
    _
  $region17: #{adaptive_spatial_condenser.3} parent=0 // pred_fallthru
    _
  %v18 = vld [vmem:[%s1] sm:$0xff]
  %v19 = vld [vmem:[%s1 + $0x8] sm:$0xff]
  %v20 = vld [vmem:[%s1 + $0x10] sm:$0xff]
  %v21 = vld [vmem:[%s1 + $0x18] sm:$0xff]
  %v22 = vld [vmem:[%s1 + $0x20] sm:$0xff]
  %v23 = vld [vmem:[%s1 + $0x28] sm:$0xf]
  %v24 = vld [vmem:[%s1 + $0x2c] sm:$0xff]
  %v25 = vld [vmem:[%s1 + $0x34] sm:$0xff]
  %v26 = vld [vmem:[%s1 + $0x3c] sm:$0xff]
  %v27 = vld [vmem:[%s1 + $0x44] sm:$0xff]
  %v28 = vld [vmem:[%s1 + $0x4c] sm:$0xff]
  %v29 = vld [vmem:[%s1 + $0x54] sm:$0xf]
  %v30 = vld [vmem:[%s0] sm:$0xf]
  %v31 = vld [vmem:[%s0 + $0x4] sm:$0xf]
  %v32 = vld [vmem:[%s0 + $0x8] sm:$0xf]
  %v33 = vld [vmem:[%s0 + $0xc] sm:$0xf]
  %v34 = vld [vmem:[%s0 + $0x10] sm:$0xf]
  %v35 = vld [vmem:[%s0 + $0x14] sm:$0xf]
  %v36 = vld [vmem:[%s0 + $0x18] sm:$0xf]
  %v37 = vld [vmem:[%s0 + $0x1c] sm:$0xf]
  %v38 = vld [vmem:[%s0 + $0x20] sm:$0xf]
  %v39 = vld [vmem:[%s0 + $0x24] sm:$0xf]
  %v40 = vld [vmem:[%s0 + $0x28] sm:$0xf]
  %v41 = vld [vmem:[%s0 + $0x2c] sm:$0xf]
  %v42 = vld [vmem:[%s0 + $0x30] sm:$0xf]
  %v43 = vld [vmem:[%s0 + $0x34] sm:$0xf]
  %v44 = vld [vmem:[%s0 + $0x38] sm:$0xf]
  %v45 = vld [vmem:[%s0 + $0x3c] sm:$0xf]
  %v46 = vld [vmem:[%s0 + $0x40] sm:$0xf]
  %v47 = vld [vmem:[%s0 + $0x44] sm:$0xf]
  %v48 = vld [vmem:[%s0 + $0x48] sm:$0xf]
  %v49 = vld [vmem:[%s0 + $0x4c] sm:$0xf]
  %v50 = vld [vmem:[%s0 + $0x50] sm:$0xf]
  %v51 = vld [vmem:[%s0 + $0x54] sm:$0xf]
  %v52 = vld [vmem:[%s0 + $0x58] sm:$0xf]
  %v53 = vld [vmem:[%s0 + $0x5c] sm:$0xf]
  %v54 = vld [vmem:[%s0 + $0x60] sm:$0xf]
  %v55 = vld [vmem:[%s0 + $0x64] sm:$0xf]
  %v56 = vld [vmem:[%s0 + $0x68] sm:$0xf]
  %v57 = vld [vmem:[%s0 + $0x6c] sm:$0xf]
  %v58 = vld [vmem:[%s0 + $0x70] sm:$0xf]
  %v59 = vld [vmem:[%s0 + $0x74] sm:$0xf]
  %v60 = vld [vmem:[%s0 + $0x78] sm:$0xf]
  %v61 = vld [vmem:[%s0 + $0x7c] sm:$0xf]
  %v62 = vld [vmem:[%s0 + $0x80] sm:$0xf]
  %v63 = vld [vmem:[%s0 + $0x84] sm:$0xf]
  %v64 = vld [vmem:[%s0 + $0x88] sm:$0xf]
  %v65 = vld [vmem:[%s0 + $0x8c] sm:$0xf]
  %v66 = vld [vmem:[%s0 + $0x90] sm:$0xf]
  %v67 = vld [vmem:[%s0 + $0x94] sm:$0xf]
  %v68 = vld [vmem:[%s0 + $0x98] sm:$0xf]
  %v69 = vld [vmem:[%s0 + $0x9c] sm:$0xf]
  %v70 = vld [vmem:[%s0 + $0xa0] sm:$0xf]
  %v71 = vld [vmem:[%s0 + $0xa4] sm:$0xf]
  %v72 = vld [vmem:[%s0 + $0xa8] sm:$0xf]
  %v73 = vld [vmem:[%s0 + $0xac] sm:$0xf]
  %v74 = vld [vmem:[%s0 + $0xb0] sm:$0xf]
  %v75 = vld [vmem:[%s0 + $0xb4] sm:$0xf]
  %v76 = vld [vmem:[%s0 + $0xb8] sm:$0xf]
  %v77 = vld [vmem:[%s0 + $0xbc] sm:$0xf]
  %v78 = vld [vmem:[%s0 + $0xc0] sm:$0xf]
  %v79 = vld [vmem:[%s0 + $0xc4] sm:$0xf]
  %v80 = vld [vmem:[%s0 + $0xc8] sm:$0xf]
  %v81 = vld [vmem:[%s0 + $0xcc] sm:$0xf]
  %v82 = vld [vmem:[%s0 + $0xd0] sm:$0xf]
  %v83 = vld [vmem:[%s0 + $0xd4] sm:$0xf]
  %v84 = vld [vmem:[%s0 + $0xd8] sm:$0xf]
  %v85 = vld [vmem:[%s0 + $0xdc] sm:$0xf]
  %v86 = vld [vmem:[%s0 + $0xe0] sm:$0xf]
  %v87 = vld [vmem:[%s0 + $0xe4] sm:$0xf]
  %v88 = vld [vmem:[%s0 + $0xe8] sm:$0xf]
  %v89 = vld [vmem:[%s0 + $0xec] sm:$0xf]
  %v90 = vld [vmem:[%s0 + $0xf0] sm:$0xf]
  %v91 = vld [vmem:[%s0 + $0xf4] sm:$0xf]
  %v92 = vld [vmem:[%s0 + $0xf8] sm:$0xf]
  %v93 = vld [vmem:[%s0 + $0xfc] sm:$0xf]
  %v94 = vld [vmem:[%s0 + $0x100] sm:$0xf]
  %v95 = vld [vmem:[%s0 + $0x104] sm:$0xf]
  %v96 = vld [vmem:[%s0 + $0x108] sm:$0xf]
  %v97 = vld [vmem:[%s0 + $0x10c] sm:$0xf]
  %v98 = vld [vmem:[%s0 + $0x110] sm:$0xf]
  %v99 = vld [vmem:[%s0 + $0x114] sm:$0xf]
  %v100 = vld [vmem:[%s0 + $0x118] sm:$0xf]
  %v101 = vld [vmem:[%s0 + $0x11c] sm:$0xf]
  %v102 = vld [vmem:[%s0 + $0x120] sm:$0xf]
  %v103 = vld [vmem:[%s0 + $0x124] sm:$0xf]
  %v104 = vld [vmem:[%s0 + $0x128] sm:$0xf]
  %v105 = vld [vmem:[%s0 + $0x12c] sm:$0xf]
  %v106 = vld [vmem:[%s0 + $0x130] sm:$0xf]
  %v107 = vld [vmem:[%s0 + $0x134] sm:$0xf]
  %v108 = vld [vmem:[%s0 + $0x138] sm:$0xf]
  %v109 = vld [vmem:[%s0 + $0x13c] sm:$0xf]
  %v110 = vld [vmem:[%s0 + $0x140] sm:$0xf]
  %v111 = vld [vmem:[%s0 + $0x144] sm:$0xf]
  %v112 = vld [vmem:[%s0 + $0x148] sm:$0xf]
  %v113 = vld [vmem:[%s0 + $0x14c] sm:$0xf]
  %v114 = vld [vmem:[%s0 + $0x150] sm:$0xf]
  %v115 = vld [vmem:[%s0 + $0x154] sm:$0xf]
  %v116 = vld [vmem:[%s0 + $0x158] sm:$0xf]
  %v117 = vld [vmem:[%s0 + $0x15c] sm:$0xf]
  %v118 = vld [vmem:[%s0 + $0x160] sm:$0xf]
  %v119 = vld [vmem:[%s0 + $0x164] sm:$0xf]
  %v120 = vld [vmem:[%s0 + $0x168] sm:$0xf]
  %v121 = vld [vmem:[%s0 + $0x16c] sm:$0xf]
  %v122 = vld [vmem:[%s0 + $0x170] sm:$0xf]
  %v123 = vld [vmem:[%s0 + $0x174] sm:$0xf]
  %v124 = vld [vmem:[%s0 + $0x178] sm:$0xf]
  %v125 = vld [vmem:[%s0 + $0x17c] sm:$0xf]
  %v126 = vld [vmem:[%s0 + $0x180] sm:$0xf]
  %v127 = vld [vmem:[%s0 + $0x184] sm:$0xf]
  %v128 = vld [vmem:[%s0 + $0x188] sm:$0xf]
  %v129 = vld [vmem:[%s0 + $0x18c] sm:$0xf]
  %v130 = vld [vmem:[%s0 + $0x190] sm:$0xf]
  %v131 = vld [vmem:[%s0 + $0x194] sm:$0xf]
  %v132 = vld [vmem:[%s0 + $0x198] sm:$0xf]
  %v133 = vld [vmem:[%s0 + $0x19c] sm:$0xf]
  %v134 = vld [vmem:[%s0 + $0x1a0] sm:$0xf]
  %v135 = vld [vmem:[%s0 + $0x1a4] sm:$0xf]
  %v136 = vld [vmem:[%s0 + $0x1a8] sm:$0xf]
  %v137 = vld [vmem:[%s0 + $0x1ac] sm:$0xf]
  %v138 = vld [vmem:[%s0 + $0x1b0] sm:$0xf]
  %v139 = vld [vmem:[%s0 + $0x1b4] sm:$0xf]
  %v140 = vld [vmem:[%s0 + $0x1b8] sm:$0xf]
  %v141 = vld [vmem:[%s0 + $0x1bc] sm:$0xf]
  %v142 = vld [vmem:[%s0 + $0x1c0] sm:$0xf]
  %v143 = vld [vmem:[%s0 + $0x1c4] sm:$0xf]
  %v144 = vld [vmem:[%s0 + $0x1c8] sm:$0xf]
  %v145 = vld [vmem:[%s0 + $0x1cc] sm:$0xf]
  %v146 = vld [vmem:[%s0 + $0x1d0] sm:$0xf]
  %v147 = vld [vmem:[%s0 + $0x1d4] sm:$0xf]
  %v148 = vld [vmem:[%s0 + $0x1d8] sm:$0xf]
  %v149 = vld [vmem:[%s0 + $0x1dc] sm:$0xf]
  %v150 = vld [vmem:[%s0 + $0x1e0] sm:$0xf]
  %v151 = vld [vmem:[%s0 + $0x1e4] sm:$0xf]
  %v152 = vld [vmem:[%s0 + $0x1e8] sm:$0xf]
  %v153 = vld [vmem:[%s0 + $0x1ec] sm:$0xf]
  %v154 = vld [vmem:[%s0 + $0x1f0] sm:$0xf]
  %v155 = vld [vmem:[%s0 + $0x1f4] sm:$0xf]
  %v156 = vld [vmem:[%s0 + $0x1f8] sm:$0xf]
  %v157 = vld [vmem:[%s0 + $0x1fc] sm:$0xf]
  %v158 = vld [vmem:[%s0 + $0x200] sm:$0xf]
  %v159 = vld [vmem:[%s0 + $0x204] sm:$0xf]
  %v160 = vld [vmem:[%s0 + $0x208] sm:$0xf]
  %v161 = vld [vmem:[%s0 + $0x20c] sm:$0xf]
  %v162 = vld [vmem:[%s0 + $0x210] sm:$0xf]
  %v163 = vld [vmem:[%s0 + $0x214] sm:$0xf]
  %v164 = vld [vmem:[%s0 + $0x218] sm:$0xf]
  %v165 = vld [vmem:[%s0 + $0x21c] sm:$0xf]
  %v166 = vld [vmem:[%s0 + $0x220] sm:$0xf]
  %v167 = vld [vmem:[%s0 + $0x224] sm:$0xf]
  %v168 = vld [vmem:[%s0 + $0x228] sm:$0xf]
  %v169 = vld [vmem:[%s0 + $0x22c] sm:$0xf]
  %v170 = vld [vmem:[%s0 + $0x230] sm:$0xf]
  %v171 = vld [vmem:[%s0 + $0x234] sm:$0xf]
  %v172 = vld [vmem:[%s0 + $0x238] sm:$0xf]
  %v173 = vld [vmem:[%s0 + $0x23c] sm:$0xf]
  %v174 = vld [vmem:[%s0 + $0x240] sm:$0xf]
  %v175 = vld [vmem:[%s0 + $0x244] sm:$0xf]
  %v176 = vld [vmem:[%s0 + $0x248] sm:$0xf]
  %v177 = vld [vmem:[%s0 + $0x24c] sm:$0xf]
  %v178 = vld [vmem:[%s0 + $0x250] sm:$0xf]
  %v179 = vld [vmem:[%s0 + $0x254] sm:$0xf]
  %v180 = vld [vmem:[%s0 + $0x258] sm:$0xf]
  %v181 = vld [vmem:[%s0 + $0x25c] sm:$0xf]
  %v182 = vld [vmem:[%s0 + $0x260] sm:$0xf]
  %v183 = vld [vmem:[%s0 + $0x264] sm:$0xf]
  %v184 = vld [vmem:[%s0 + $0x268] sm:$0xf]
  %v185 = vld [vmem:[%s0 + $0x26c] sm:$0xf]
  %v186 = vld [vmem:[%s0 + $0x270] sm:$0xf]
  %v187 = vld [vmem:[%s0 + $0x274] sm:$0xf]
  %v188 = vld [vmem:[%s0 + $0x278] sm:$0xf]
  %v189 = vld [vmem:[%s0 + $0x27c] sm:$0xf]
  %v190 = vld [vmem:[%s0 + $0x280] sm:$0xf]
  %v191 = vld [vmem:[%s0 + $0x284] sm:$0xf]
  %v192 = vld [vmem:[%s0 + $0x288] sm:$0xf]
  %v193 = vld [vmem:[%s0 + $0x28c] sm:$0xf]
  %v194 = vld [vmem:[%s0 + $0x290] sm:$0xf]
  %v195 = vld [vmem:[%s0 + $0x294] sm:$0xf]
  %v196 = vld [vmem:[%s0 + $0x298] sm:$0xf]
  %v197 = vld [vmem:[%s0 + $0x29c] sm:$0xf]
  %v198 = vld [vmem:[%s0 + $0x2a0] sm:$0xf]
  %v199 = vld [vmem:[%s0 + $0x2a4] sm:$0xf]
  %v200 = vld [vmem:[%s0 + $0x2a8] sm:$0xf]
  %v201 = vld [vmem:[%s0 + $0x2ac] sm:$0xf]
  %v202 = vld [vmem:[%s0 + $0x2b0] sm:$0xf]
  %v203 = vld [vmem:[%s0 + $0x2b4] sm:$0xf]
  %v204 = vld [vmem:[%s0 + $0x2b8] sm:$0xf]
  %v205 = vld [vmem:[%s0 + $0x2bc] sm:$0xf]
  %v218 = vunpack.c.l.b16 %v18
  %v219 = vunpack.c.h.b16 %v18
  %v220 = vunpack.c.l.b16 %v19
  %v221 = vunpack.c.h.b16 %v19
  %v222 = vunpack.c.l.b16 %v20
  %v223 = vunpack.c.h.b16 %v20
  %v224 = vunpack.c.l.b16 %v21
  %v225 = vunpack.c.h.b16 %v21
  %v226 = vunpack.c.l.b16 %v22
  %v227 = vunpack.c.h.b16 %v22
  %v228 = vunpack.c.l.b16 %v23
  %v229 = vunpack.c.l.b16 %v24
  %v230 = vunpack.c.h.b16 %v24
  %v231 = vunpack.c.l.b16 %v25
  %v232 = vunpack.c.h.b16 %v25
  %v233 = vunpack.c.l.b16 %v26
  %v234 = vunpack.c.h.b16 %v26
  %v235 = vunpack.c.l.b16 %v27
  %v236 = vunpack.c.h.b16 %v27
  %v237 = vunpack.c.l.b16 %v28
  %v238 = vunpack.c.h.b16 %v28
  %v239 = vunpack.c.l.b16 %v29
  %v240 = vpack.c.b16 %v229, %v218
  %v241 = vpack.c.b16 %v230, %v219
  %v242 = vpack.c.b16 %v231, %v220
  %v243 = vpack.c.b16 %v232, %v221
  %v244 = vpack.c.b16 %v233, %v222
  %v245 = vpack.c.b16 %v234, %v223
  %v246 = vpack.c.b16 %v235, %v224
  %v247 = vpack.c.b16 %v236, %v225
  %v248 = vpack.c.b16 %v237, %v226
  %v249 = vpack.c.b16 %v238, %v227
  %v250 = vpack.c.b16 %v239, %v228
  %v438 = vunpack.c.l.b16 %v30
  %v439 = vunpack.c.l.b16 %v31
  %v440 = vunpack.c.l.b16 %v32
  %v441 = vunpack.c.l.b16 %v33
  %v442 = vunpack.c.l.b16 %v34
  %v443 = vunpack.c.l.b16 %v35
  %v444 = vunpack.c.l.b16 %v36
  %v445 = vunpack.c.l.b16 %v37
  %v446 = vunpack.c.l.b16 %v38
  %v447 = vunpack.c.l.b16 %v39
  %v448 = vunpack.c.l.b16 %v40
  %v449 = vunpack.c.l.b16 %v41
  %v450 = vunpack.c.l.b16 %v42
  %v451 = vunpack.c.l.b16 %v43
  %v452 = vunpack.c.l.b16 %v44
  %v453 = vunpack.c.l.b16 %v45
  %v454 = vunpack.c.l.b16 %v46
  %v455 = vunpack.c.l.b16 %v47
  %v456 = vunpack.c.l.b16 %v48
  %v457 = vunpack.c.l.b16 %v49
  %v458 = vunpack.c.l.b16 %v50
  %v459 = vunpack.c.l.b16 %v51
  %v460 = vunpack.c.l.b16 %v52
  %v461 = vunpack.c.l.b16 %v53
  %v462 = vunpack.c.l.b16 %v54
  %v463 = vunpack.c.l.b16 %v55
  %v464 = vunpack.c.l.b16 %v56
  %v465 = vunpack.c.l.b16 %v57
  %v466 = vunpack.c.l.b16 %v58
  %v467 = vunpack.c.l.b16 %v59
  %v468 = vunpack.c.l.b16 %v60
  %v469 = vunpack.c.l.b16 %v61
  %v470 = vunpack.c.l.b16 %v62
  %v471 = vunpack.c.l.b16 %v63
  %v472 = vunpack.c.l.b16 %v64
  %v473 = vunpack.c.l.b16 %v65
  %v474 = vunpack.c.l.b16 %v66
  %v475 = vunpack.c.l.b16 %v67
  %v476 = vunpack.c.l.b16 %v68
  %v477 = vunpack.c.l.b16 %v69
  %v478 = vunpack.c.l.b16 %v70
  %v479 = vunpack.c.l.b16 %v71
  %v480 = vunpack.c.l.b16 %v72
  %v481 = vunpack.c.l.b16 %v73
  %v482 = vunpack.c.l.b16 %v74
  %v483 = vunpack.c.l.b16 %v75
  %v484 = vunpack.c.l.b16 %v76
  %v485 = vunpack.c.l.b16 %v77
  %v486 = vunpack.c.l.b16 %v78
  %v487 = vunpack.c.l.b16 %v79
  %v488 = vunpack.c.l.b16 %v80
  %v489 = vunpack.c.l.b16 %v81
  %v490 = vunpack.c.l.b16 %v82
  %v491 = vunpack.c.l.b16 %v83
  %v492 = vunpack.c.l.b16 %v84
  %v493 = vunpack.c.l.b16 %v85
  %v494 = vunpack.c.l.b16 %v86
  %v495 = vunpack.c.l.b16 %v87
  %v496 = vunpack.c.l.b16 %v88
  %v497 = vunpack.c.l.b16 %v89
  %v498 = vunpack.c.l.b16 %v90
  %v499 = vunpack.c.l.b16 %v91
  %v500 = vunpack.c.l.b16 %v92
  %v501 = vunpack.c.l.b16 %v93
  %v502 = vunpack.c.l.b16 %v94
  %v503 = vunpack.c.l.b16 %v95
  %v504 = vunpack.c.l.b16 %v96
  %v505 = vunpack.c.l.b16 %v97
  %v506 = vunpack.c.l.b16 %v98
  %v507 = vunpack.c.l.b16 %v99
  %v508 = vunpack.c.l.b16 %v100
  %v509 = vunpack.c.l.b16 %v101
  %v510 = vunpack.c.l.b16 %v102
  %v511 = vunpack.c.l.b16 %v103
  %v512 = vunpack.c.l.b16 %v104
  %v513 = vunpack.c.l.b16 %v105
  %v514 = vunpack.c.l.b16 %v106
  %v515 = vunpack.c.l.b16 %v107
  %v516 = vunpack.c.l.b16 %v108
  %v517 = vunpack.c.l.b16 %v109
  %v518 = vunpack.c.l.b16 %v110
  %v519 = vunpack.c.l.b16 %v111
  %v520 = vunpack.c.l.b16 %v112
  %v521 = vunpack.c.l.b16 %v113
  %v522 = vunpack.c.l.b16 %v114
  %v523 = vunpack.c.l.b16 %v115
  %v524 = vunpack.c.l.b16 %v116
  %v525 = vunpack.c.l.b16 %v117
  %v526 = vunpack.c.l.b16 %v118
  %v527 = vunpack.c.l.b16 %v119
  %v528 = vunpack.c.l.b16 %v120
  %v529 = vunpack.c.l.b16 %v121
  %v530 = vunpack.c.l.b16 %v122
  %v531 = vunpack.c.l.b16 %v123
  %v532 = vunpack.c.l.b16 %v124
  %v533 = vunpack.c.l.b16 %v125
  %v534 = vunpack.c.l.b16 %v126
  %v535 = vunpack.c.l.b16 %v127
  %v536 = vunpack.c.l.b16 %v128
  %v537 = vunpack.c.l.b16 %v129
  %v538 = vunpack.c.l.b16 %v130
  %v539 = vunpack.c.l.b16 %v131
  %v540 = vunpack.c.l.b16 %v132
  %v541 = vunpack.c.l.b16 %v133
  %v542 = vunpack.c.l.b16 %v134
  %v543 = vunpack.c.l.b16 %v135
  %v544 = vunpack.c.l.b16 %v136
  %v545 = vunpack.c.l.b16 %v137
  %v546 = vunpack.c.l.b16 %v138
  %v547 = vunpack.c.l.b16 %v139
  %v548 = vunpack.c.l.b16 %v140
  %v549 = vunpack.c.l.b16 %v141
  %v550 = vunpack.c.l.b16 %v142
  %v551 = vunpack.c.l.b16 %v143
  %v552 = vunpack.c.l.b16 %v144
  %v553 = vunpack.c.l.b16 %v145
  %v554 = vunpack.c.l.b16 %v146
  %v555 = vunpack.c.l.b16 %v147
  %v556 = vunpack.c.l.b16 %v148
  %v557 = vunpack.c.l.b16 %v149
  %v558 = vunpack.c.l.b16 %v150
  %v559 = vunpack.c.l.b16 %v151
  %v560 = vunpack.c.l.b16 %v152
  %v561 = vunpack.c.l.b16 %v153
  %v562 = vunpack.c.l.b16 %v154
  %v563 = vunpack.c.l.b16 %v155
  %v564 = vunpack.c.l.b16 %v156
  %v565 = vunpack.c.l.b16 %v157
  %v566 = vunpack.c.l.b16 %v158
  %v567 = vunpack.c.l.b16 %v159
  %v568 = vunpack.c.l.b16 %v160
  %v569 = vunpack.c.l.b16 %v161
  %v570 = vunpack.c.l.b16 %v162
  %v571 = vunpack.c.l.b16 %v163
  %v572 = vunpack.c.l.b16 %v164
  %v573 = vunpack.c.l.b16 %v165
  %v574 = vunpack.c.l.b16 %v166
  %v575 = vunpack.c.l.b16 %v167
  %v576 = vunpack.c.l.b16 %v168
  %v577 = vunpack.c.l.b16 %v169
  %v578 = vunpack.c.l.b16 %v170
  %v579 = vunpack.c.l.b16 %v171
  %v580 = vunpack.c.l.b16 %v172
  %v581 = vunpack.c.l.b16 %v173
  %v582 = vunpack.c.l.b16 %v174
  %v583 = vunpack.c.l.b16 %v175
  %v584 = vunpack.c.l.b16 %v176
  %v585 = vunpack.c.l.b16 %v177
  %v586 = vunpack.c.l.b16 %v178
  %v587 = vunpack.c.l.b16 %v179
  %v588 = vunpack.c.l.b16 %v180
  %v589 = vunpack.c.l.b16 %v181
  %v590 = vunpack.c.l.b16 %v182
  %v591 = vunpack.c.l.b16 %v183
  %v592 = vunpack.c.l.b16 %v184
  %v593 = vunpack.c.l.b16 %v185
  %v594 = vunpack.c.l.b16 %v186
  %v595 = vunpack.c.l.b16 %v187
  %v596 = vunpack.c.l.b16 %v188
  %v597 = vunpack.c.l.b16 %v189
  %v598 = vunpack.c.l.b16 %v190
  %v599 = vunpack.c.l.b16 %v191
  %v600 = vunpack.c.l.b16 %v192
  %v601 = vunpack.c.l.b16 %v193
  %v602 = vunpack.c.l.b16 %v194
  %v603 = vunpack.c.l.b16 %v195
  %v604 = vunpack.c.l.b16 %v196
  %v605 = vunpack.c.l.b16 %v197
  %v606 = vunpack.c.l.b16 %v198
  %v607 = vunpack.c.l.b16 %v199
  %v608 = vunpack.c.l.b16 %v200
  %v609 = vunpack.c.l.b16 %v201
  %v610 = vunpack.c.l.b16 %v202
  %v611 = vunpack.c.l.b16 %v203
  %v612 = vunpack.c.l.b16 %v204
  %v613 = vunpack.c.l.b16 %v205
  %v614 = vpack.c.b16 %v439, %v438
  %v615 = vpack.c.b16 %v441, %v440
  %v616 = vpack.c.b16 %v443, %v442
  %v617 = vpack.c.b16 %v445, %v444
  %v618 = vpack.c.b16 %v447, %v446
  %v619 = vpack.c.b16 %v449, %v448
  %v620 = vpack.c.b16 %v451, %v450
  %v621 = vpack.c.b16 %v453, %v452
  %v622 = vpack.c.b16 %v455, %v454
  %v623 = vpack.c.b16 %v457, %v456
  %v624 = vpack.c.b16 %v459, %v458
  %v625 = vpack.c.b16 %v461, %v460
  %v626 = vpack.c.b16 %v463, %v462
  %v627 = vpack.c.b16 %v465, %v464
  %v628 = vpack.c.b16 %v467, %v466
  %v629 = vpack.c.b16 %v469, %v468
  %v630 = vpack.c.b16 %v471, %v470
  %v631 = vpack.c.b16 %v473, %v472
  %v632 = vpack.c.b16 %v475, %v474
  %v633 = vpack.c.b16 %v477, %v476
  %v634 = vpack.c.b16 %v479, %v478
  %v635 = vpack.c.b16 %v481, %v480
  %v636 = vpack.c.b16 %v483, %v482
  %v637 = vpack.c.b16 %v485, %v484
  %v638 = vpack.c.b16 %v487, %v486
  %v639 = vpack.c.b16 %v489, %v488
  %v640 = vpack.c.b16 %v491, %v490
  %v641 = vpack.c.b16 %v493, %v492
  %v642 = vpack.c.b16 %v495, %v494
  %v643 = vpack.c.b16 %v497, %v496
  %v644 = vpack.c.b16 %v499, %v498
  %v645 = vpack.c.b16 %v501, %v500
  %v646 = vpack.c.b16 %v503, %v502
  %v647 = vpack.c.b16 %v505, %v504
  %v648 = vpack.c.b16 %v507, %v506
  %v649 = vpack.c.b16 %v509, %v508
  %v650 = vpack.c.b16 %v511, %v510
  %v651 = vpack.c.b16 %v513, %v512
  %v652 = vpack.c.b16 %v515, %v514
  %v653 = vpack.c.b16 %v517, %v516
  %v654 = vpack.c.b16 %v519, %v518
  %v655 = vpack.c.b16 %v521, %v520
  %v656 = vpack.c.b16 %v523, %v522
  %v657 = vpack.c.b16 %v525, %v524
  %v658 = vpack.c.b16 %v527, %v526
  %v659 = vpack.c.b16 %v529, %v528
  %v660 = vpack.c.b16 %v531, %v530
  %v661 = vpack.c.b16 %v533, %v532
  %v662 = vpack.c.b16 %v535, %v534
  %v663 = vpack.c.b16 %v537, %v536
  %v664 = vpack.c.b16 %v539, %v538
  %v665 = vpack.c.b16 %v541, %v540
  %v666 = vpack.c.b16 %v543, %v542
  %v667 = vpack.c.b16 %v545, %v544
  %v668 = vpack.c.b16 %v547, %v546
  %v669 = vpack.c.b16 %v549, %v548
  %v670 = vpack.c.b16 %v551, %v550
  %v671 = vpack.c.b16 %v553, %v552
  %v672 = vpack.c.b16 %v555, %v554
  %v673 = vpack.c.b16 %v557, %v556
  %v674 = vpack.c.b16 %v559, %v558
  %v675 = vpack.c.b16 %v561, %v560
  %v676 = vpack.c.b16 %v563, %v562
  %v677 = vpack.c.b16 %v565, %v564
  %v678 = vpack.c.b16 %v567, %v566
  %v679 = vpack.c.b16 %v569, %v568
  %v680 = vpack.c.b16 %v571, %v570
  %v681 = vpack.c.b16 %v573, %v572
  %v682 = vpack.c.b16 %v575, %v574
  %v683 = vpack.c.b16 %v577, %v576
  %v684 = vpack.c.b16 %v579, %v578
  %v685 = vpack.c.b16 %v581, %v580
  %v686 = vpack.c.b16 %v583, %v582
  %v687 = vpack.c.b16 %v585, %v584
  %v688 = vpack.c.b16 %v587, %v586
  %v689 = vpack.c.b16 %v589, %v588
  %v690 = vpack.c.b16 %v591, %v590
  %v691 = vpack.c.b16 %v593, %v592
  %v692 = vpack.c.b16 %v595, %v594
  %v693 = vpack.c.b16 %v597, %v596
  %v694 = vpack.c.b16 %v599, %v598
  %v695 = vpack.c.b16 %v601, %v600
  %v696 = vpack.c.b16 %v603, %v602
  %v697 = vpack.c.b16 %v605, %v604
  %v698 = vpack.c.b16 %v607, %v606
  %v699 = vpack.c.b16 %v609, %v608
  %v700 = vpack.c.b16 %v611, %v610
  %v701 = vpack.c.b16 %v613, %v612
  %790 = vmatprep.subr.bf16.mxu0 0
  %791 = vmatpush1.bf16.msra.mxu0 %v614
  %792 = vmatprep.subr.bf16.mxu0 0
  %793 = vmatpush1.bf16.msra.mxu0 %v615
  %794 = vmatprep.subr.bf16.mxu0 0
  %795 = vmatpush1.bf16.msra.mxu0 %v616
  %796 = vmatprep.subr.bf16.mxu0 0
  %797 = vmatpush1.bf16.msra.mxu0 %v617
  %798 = vmatprep.subr.bf16.mxu0 0
  %799 = vmatpush1.bf16.msra.mxu0 %v618
  %800 = vmatprep.subr.bf16.mxu0 0
  %801 = vmatpush1.bf16.msra.mxu0 %v619
  %802 = vmatprep.subr.bf16.mxu0 0
  %803 = vmatpush1.bf16.msra.mxu0 %v620
  %804 = vmatprep.subr.bf16.mxu0 0
  %805 = vmatpush1.bf16.msra.mxu0 %v621
  %806 = vmatprep.subr.bf16.mxu0 0
  %807 = vmatpush1.bf16.msra.mxu0 %v622
  %808 = vmatprep.subr.bf16.mxu0 0
  %809 = vmatpush1.bf16.msra.mxu0 %v623
  %810 = vmatprep.subr.bf16.mxu0 0
  %811 = vmatpush1.bf16.msra.mxu0 %v624
  %812 = vmatprep.subr.bf16.mxu0 0
  %813 = vmatpush1.bf16.msra.mxu0 %v625
  %814 = vmatprep.subr.bf16.mxu0 0
  %815 = vmatpush1.bf16.msra.mxu0 %v626
  %816 = vmatprep.subr.bf16.mxu0 0
  %817 = vmatpush1.bf16.msra.mxu0 %v627
  %818 = vmatprep.subr.bf16.mxu0 0
  %819 = vmatpush1.bf16.msra.mxu0 %v628
  %820 = vmatprep.subr.bf16.mxu0 0
  %821 = vmatpush1.bf16.msra.mxu0 %v629
  %822 = vmatprep.mubr.bf16.mxu0 %v241
  %823 = vmatmul.mubr.bf16.gmra.mrb[0].mxu0 %v240
  %v824 = vpop.f32.mrb[0].mxu0
  %v825 = vadd.f32 0.0, %v824
  %v826 = vpop.f32.mrb[0].mxu0
  %v827 = vpop.f32.mrb[0].mxu0
  %v828 = vadd.f32 0.0, %v827
  %v829 = vpop.f32.mrb[0].mxu0
  %830 = vdwg.mxu0
  %831 = vmatprep.subr.bf16.mxu0 0
  %832 = vmatpush1.bf16.msra.mxu0 %v630
  %833 = vmatprep.subr.bf16.mxu0 0
  %834 = vmatpush1.bf16.msra.mxu0 %v631
  %835 = vmatprep.subr.bf16.mxu0 0
  %836 = vmatpush1.bf16.msra.mxu0 %v632
  %837 = vmatprep.subr.bf16.mxu0 0
  %838 = vmatpush1.bf16.msra.mxu0 %v633
  %839 = vmatprep.subr.bf16.mxu0 0
  %840 = vmatpush1.bf16.msra.mxu0 %v634
  %841 = vmatprep.subr.bf16.mxu0 0
  %842 = vmatpush1.bf16.msra.mxu0 %v635
  %843 = vmatprep.subr.bf16.mxu0 0
  %844 = vmatpush1.bf16.msra.mxu0 %v636
  %845 = vmatprep.subr.bf16.mxu0 0
  %846 = vmatpush1.bf16.msra.mxu0 %v637
  %847 = vmatprep.subr.bf16.mxu0 0
  %848 = vmatpush1.bf16.msra.mxu0 %v638
  %849 = vmatprep.subr.bf16.mxu0 0
  %850 = vmatpush1.bf16.msra.mxu0 %v639
  %851 = vmatprep.subr.bf16.mxu0 0
  %852 = vmatpush1.bf16.msra.mxu0 %v640
  %853 = vmatprep.subr.bf16.mxu0 0
  %854 = vmatpush1.bf16.msra.mxu0 %v641
  %855 = vmatprep.subr.bf16.mxu0 0
  %856 = vmatpush1.bf16.msra.mxu0 %v642
  %857 = vmatprep.subr.bf16.mxu0 0
  %858 = vmatpush1.bf16.msra.mxu0 %v643
  %859 = vmatprep.subr.bf16.mxu0 0
  %860 = vmatpush1.bf16.msra.mxu0 %v644
  %861 = vmatprep.subr.bf16.mxu0 0
  %862 = vmatpush1.bf16.msra.mxu0 %v645
  %863 = vmatprep.mubr.bf16.mxu0 %v243
  %864 = vmatmul.mubr.bf16.gmra.mrb[0].mxu0 %v242
  %v865 = vpop.f32.mrb[0].mxu0
  %v866 = vadd.f32 %v825, %v865
  %v867 = vpop.f32.mrb[0].mxu0
  %v868 = vpop.f32.mrb[0].mxu0
  %v869 = vadd.f32 %v828, %v868
  %v870 = vpop.f32.mrb[0].mxu0
  %871 = vdwg.mxu0
  %872 = vmatprep.subr.bf16.mxu0 0
  %873 = vmatpush1.bf16.msra.mxu0 %v646
  %874 = vmatprep.subr.bf16.mxu0 0
  %875 = vmatpush1.bf16.msra.mxu0 %v647
  %876 = vmatprep.subr.bf16.mxu0 0
  %877 = vmatpush1.bf16.msra.mxu0 %v648
  %878 = vmatprep.subr.bf16.mxu0 0
  %879 = vmatpush1.bf16.msra.mxu0 %v649
  %880 = vmatprep.subr.bf16.mxu0 0
  %881 = vmatpush1.bf16.msra.mxu0 %v650
  %882 = vmatprep.subr.bf16.mxu0 0
  %883 = vmatpush1.bf16.msra.mxu0 %v651
  %884 = vmatprep.subr.bf16.mxu0 0
  %885 = vmatpush1.bf16.msra.mxu0 %v652
  %886 = vmatprep.subr.bf16.mxu0 0
  %887 = vmatpush1.bf16.msra.mxu0 %v653
  %888 = vmatprep.subr.bf16.mxu0 0
  %889 = vmatpush1.bf16.msra.mxu0 %v654
  %890 = vmatprep.subr.bf16.mxu0 0
  %891 = vmatpush1.bf16.msra.mxu0 %v655
  %892 = vmatprep.subr.bf16.mxu0 0
  %893 = vmatpush1.bf16.msra.mxu0 %v656
  %894 = vmatprep.subr.bf16.mxu0 0
  %895 = vmatpush1.bf16.msra.mxu0 %v657
  %896 = vmatprep.subr.bf16.mxu0 0
  %897 = vmatpush1.bf16.msra.mxu0 %v658
  %898 = vmatprep.subr.bf16.mxu0 0
  %899 = vmatpush1.bf16.msra.mxu0 %v659
  %900 = vmatprep.subr.bf16.mxu0 0
  %901 = vmatpush1.bf16.msra.mxu0 %v660
  %902 = vmatprep.subr.bf16.mxu0 0
  %903 = vmatpush1.bf16.msra.mxu0 %v661
  %904 = vmatprep.mubr.bf16.mxu0 %v245
  %905 = vmatmul.mubr.bf16.gmra.mrb[0].mxu0 %v244
  %v906 = vpop.f32.mrb[0].mxu0
  %v907 = vadd.f32 %v866, %v906
  %v908 = vpop.f32.mrb[0].mxu0
  %v909 = vpop.f32.mrb[0].mxu0
  %v910 = vadd.f32 %v869, %v909
  %v911 = vpop.f32.mrb[0].mxu0
  %912 = vdwg.mxu0
  %913 = vmatprep.subr.bf16.mxu0 0
  %914 = vmatpush1.bf16.msra.mxu0 %v662
  %915 = vmatprep.subr.bf16.mxu0 0
  %916 = vmatpush1.bf16.msra.mxu0 %v663
  %917 = vmatprep.subr.bf16.mxu0 0
  %918 = vmatpush1.bf16.msra.mxu0 %v664
  %919 = vmatprep.subr.bf16.mxu0 0
  %920 = vmatpush1.bf16.msra.mxu0 %v665
  %921 = vmatprep.subr.bf16.mxu0 0
  %922 = vmatpush1.bf16.msra.mxu0 %v666
  %923 = vmatprep.subr.bf16.mxu0 0
  %924 = vmatpush1.bf16.msra.mxu0 %v667
  %925 = vmatprep.subr.bf16.mxu0 0
  %926 = vmatpush1.bf16.msra.mxu0 %v668
  %927 = vmatprep.subr.bf16.mxu0 0
  %928 = vmatpush1.bf16.msra.mxu0 %v669
  %929 = vmatprep.subr.bf16.mxu0 0
  %930 = vmatpush1.bf16.msra.mxu0 %v670
  %931 = vmatprep.subr.bf16.mxu0 0
  %932 = vmatpush1.bf16.msra.mxu0 %v671
  %933 = vmatprep.subr.bf16.mxu0 0
  %934 = vmatpush1.bf16.msra.mxu0 %v672
  %935 = vmatprep.subr.bf16.mxu0 0
  %936 = vmatpush1.bf16.msra.mxu0 %v673
  %937 = vmatprep.subr.bf16.mxu0 0
  %938 = vmatpush1.bf16.msra.mxu0 %v674
  %939 = vmatprep.subr.bf16.mxu0 0
  %940 = vmatpush1.bf16.msra.mxu0 %v675
  %941 = vmatprep.subr.bf16.mxu0 0
  %942 = vmatpush1.bf16.msra.mxu0 %v676
  %943 = vmatprep.subr.bf16.mxu0 0
  %944 = vmatpush1.bf16.msra.mxu0 %v677
  %945 = vmatprep.mubr.bf16.mxu0 %v247
  %946 = vmatmul.mubr.bf16.gmra.mrb[0].mxu0 %v246
  %v947 = vpop.f32.mrb[0].mxu0
  %v948 = vadd.f32 %v907, %v947
  %v949 = vpop.f32.mrb[0].mxu0
  %v950 = vpop.f32.mrb[0].mxu0
  %v951 = vadd.f32 %v910, %v950
  %v952 = vpop.f32.mrb[0].mxu0
  %953 = vdwg.mxu0
  %954 = vmatprep.subr.bf16.mxu0 0
  %955 = vmatpush1.bf16.msra.mxu0 %v678
  %956 = vmatprep.subr.bf16.mxu0 0
  %957 = vmatpush1.bf16.msra.mxu0 %v679
  %958 = vmatprep.subr.bf16.mxu0 0
  %959 = vmatpush1.bf16.msra.mxu0 %v680
  %960 = vmatprep.subr.bf16.mxu0 0
  %961 = vmatpush1.bf16.msra.mxu0 %v681
  %962 = vmatprep.subr.bf16.mxu0 0
  %963 = vmatpush1.bf16.msra.mxu0 %v682
  %964 = vmatprep.subr.bf16.mxu0 0
  %965 = vmatpush1.bf16.msra.mxu0 %v683
  %966 = vmatprep.subr.bf16.mxu0 0
  %967 = vmatpush1.bf16.msra.mxu0 %v684
  %968 = vmatprep.subr.bf16.mxu0 0
  %969 = vmatpush1.bf16.msra.mxu0 %v685
  %970 = vmatprep.subr.bf16.mxu0 0
  %971 = vmatpush1.bf16.msra.mxu0 %v686
  %972 = vmatprep.subr.bf16.mxu0 0
  %973 = vmatpush1.bf16.msra.mxu0 %v687
  %974 = vmatprep.subr.bf16.mxu0 0
  %975 = vmatpush1.bf16.msra.mxu0 %v688
  %976 = vmatprep.subr.bf16.mxu0 0
  %977 = vmatpush1.bf16.msra.mxu0 %v689
  %978 = vmatprep.subr.bf16.mxu0 0
  %979 = vmatpush1.bf16.msra.mxu0 %v690
  %980 = vmatprep.subr.bf16.mxu0 0
  %981 = vmatpush1.bf16.msra.mxu0 %v691
  %982 = vmatprep.subr.bf16.mxu0 0
  %983 = vmatpush1.bf16.msra.mxu0 %v692
  %984 = vmatprep.subr.bf16.mxu0 0
  %985 = vmatpush1.bf16.msra.mxu0 %v693
  %986 = vmatprep.mubr.bf16.mxu0 %v249
  %987 = vmatmul.mubr.bf16.gmra.mrb[0].mxu0 %v248
  %v988 = vpop.f32.mrb[0].mxu0
  %v989 = vadd.f32 %v948, %v988
  %v990 = vpop.f32.mrb[0].mxu0
  %v991 = vpop.f32.mrb[0].mxu0
  %v992 = vadd.f32 %v951, %v991
  %v993 = vpop.f32.mrb[0].mxu0
  %994 = vdwg.mxu0
  %995 = vmatprep.subr.bf16.mxu0 0
  %996 = vmatpush1.bf16.msra.mxu0 %v694
  %997 = vmatprep.subr.bf16.mxu0 0
  %998 = vmatpush1.bf16.msra.mxu0 %v695
  %999 = vmatprep.subr.bf16.mxu0 0
  %1000 = vmatpush1.bf16.msra.mxu0 %v696
  %1001 = vmatprep.subr.bf16.mxu0 0
  %1002 = vmatpush1.bf16.msra.mxu0 %v697
  %1003 = vmatprep.subr.bf16.mxu0 0
  %1004 = vmatpush1.bf16.msra.mxu0 %v698
  %1005 = vmatprep.subr.bf16.mxu0 0
  %1006 = vmatpush1.bf16.msra.mxu0 %v699
  %1007 = vmatprep.subr.bf16.mxu0 0
  %1008 = vmatpush1.bf16.msra.mxu0 %v700
  %1009 = vmatprep.subr.bf16.mxu0 0
  %1010 = vmatpush1.bf16.msra.mxu0 %v701
  %1011 = vmatprep.subr.bf16.mxu0 0
  %1012 = vmatpush1.bf16.msra.mxu0 0
  %1013 = vmatprep.subr.bf16.mxu0 0
  %1014 = vmatpush1.bf16.msra.mxu0 0
  %1015 = vmatprep.subr.bf16.mxu0 0
  %1016 = vmatpush1.bf16.msra.mxu0 0
  %1017 = vmatprep.subr.bf16.mxu0 0
  %1018 = vmatpush1.bf16.msra.mxu0 0
  %1019 = vmatprep.subr.bf16.mxu0 0
  %1020 = vmatpush1.bf16.msra.mxu0 0
  %1021 = vmatprep.subr.bf16.mxu0 0
  %1022 = vmatpush1.bf16.msra.mxu0 0
  %1023 = vmatprep.subr.bf16.mxu0 0
  %1024 = vmatpush1.bf16.msra.mxu0 0
  %1025 = vmatprep.subr.bf16.mxu0 0
  %1026 = vmatpush1.bf16.msra.mxu0 0
  %1027 = vmatprep.mubr.bf16.mxu0 0
  %1028 = vmatmul.mubr.bf16.gmra.mrb[0].mxu0 %v250
  %v1029 = vpop.f32.mrb[0].mxu0
  %v1030 = vadd.f32 %v989, %v1029
  %v1031 = vpop.f32.mrb[0].mxu0
  %v1032 = vpop.f32.mrb[0].mxu0
  %v1033 = vadd.f32 %v992, %v1032
  %v1034 = vpop.f32.mrb[0].mxu0
  %1035 = vdwg.mxu0
  %1036 = vst [vmem:[#allocation2] sm:$0xff] %v1030
  %1037 = vst [vmem:[#allocation2 + $0x8] sm:$0xff] %v1033
  %p1038 = scmp.eq.s32.totalorder 0, 0
  // Predicated region
  $region18: #{adaptive_spatial_condenser.3} parent=0 // pred_check
    %p1039 = pneg %p1038
  $region19: #{adaptive_spatial_condenser.3} parent=0 // pred_check_branch
    %1041 = sbr.rel (%p1039) target = $region21
  $region20: #{adaptive_spatial_condenser.3} parent=0 // pred_region
    %v1042 = vld [vmem:[#allocation2] sm:$0xff]
    %v1043 = vld [vmem:[#allocation2 + $0x8] sm:$0xff]
    %1044 = vadd.xlane.f32.xlu0 %v1042
    %v1045 = vpop.xlane.xlu0 %1044
    %1046 = vadd.xlane.f32.xlu0 %v1043
    %v1047 = vpop.xlane.xlu0 %1046
    %v1048 = vmul.f32 %v1045, 0.0078125
    %v1049 = vmul.f32 %v1047, 0.0078125
    %v1050 = vsub.f32 %v1042, %v1048
    %v1051 = vsub.f32 %v1043, %v1049
    %v1052 = vmul.f32 %v1050, %v1050
    %v1053 = vmul.f32 %v1051, %v1051
    %1054 = vadd.xlane.f32.xlu0 %v1052
    %v1055 = vpop.xlane.xlu0 %1054
    %1056 = vadd.xlane.f32.xlu0 %v1053
    %v1057 = vpop.xlane.xlu0 %1056
    %v1058 = vmul.f32 %v1055, 0.0078125
    %v1059 = vmul.f32 %v1057, 0.0078125
    %v1060 = vld [vmem:[%s2] sm:$0xff]
    %v1061 = vld [vmem:[%s2 + $0x8] sm:$0xff]
    %v1062 = vadd.f32 %v1058, 1e-05
    %v1063 = vadd.f32 %v1059, 1e-05
    %v1064 = vrsqrt.pop %v1062
    %v1065 = vrsqrt.pop %v1063
    %v1066 = vmul.f32 %v1060, %v1064
    %v1067 = vmul.f32 %v1061, %v1065
    %v1068 = vld [vmem:[%s3] sm:$0xff]
    %v1069 = vld [vmem:[%s3 + $0x8] sm:$0xff]
    %v1070 = vmul.f32 %v1048, %v1066
    %v1071 = vmul.f32 %v1049, %v1067
    %v1072 = vsub.f32 %v1068, %v1070
    %v1073 = vsub.f32 %v1069, %v1071
    %1075 = vset.pattern.permute.xlu0 0
    %1076 = vperm.xlu0 %1075, %v1066
    %v1077 = vpop.permute.xlu0 %1076
    %1080 = vset.pattern.permute.xlu0 0
    %1081 = vperm.xlu0 %1080, %v1067
    %v1082 = vpop.permute.xlu0 %1081
    %v1084 = vmul.f32 %v1042, %v1077
    %v1085 = vmul.f32 %v1043, %v1082
    %1087 = vset.pattern.permute.xlu0 0
    %1088 = vperm.xlu0 %1087, %v1072
    %v1089 = vpop.permute.xlu0 %1088
    %1092 = vset.pattern.permute.xlu0 0
    %1093 = vperm.xlu0 %1092, %v1073
    %v1094 = vpop.permute.xlu0 %1093
    %v1096 = vadd.f32 %v1084, %v1089
    %v1097 = vadd.f32 %v1085, %v1094
    %v1098 = vmax.f32 %v1096, 0.0
    %v1099 = vmax.f32 %v1097, 0.0
    %1100 = vst [vmem:[%s4] sm:$0xff] %v1098
    %1101 = vst [vmem:[%s4 + $0x8] sm:$0xff] %v1099
  $region21: #{adaptive_spatial_condenser.3} parent=0 // pred_fallthru
    _
  // Predicated region
  $region22: #{adaptive_spatial_condenser.3} parent=0 // pred_check
    _
  $region23: #{adaptive_spatial_condenser.3} parent=0 // pred_check_branch
    %1103 = sbr.rel (0) target = $region25
  $region24: #{adaptive_spatial_condenser.3} parent=0 // pred_region
    _
  $region25: #{adaptive_spatial_condenser.3} parent=0 // pred_fallthru
    _
  // Predicated region
  $region26: #{adaptive_spatial_condenser.3} parent=0 // pred_check
    _
  $region27: #{adaptive_spatial_condenser.3} parent=0 // pred_check_branch
    %1105 = sbr.rel (0) target = $region29
  $region28: #{adaptive_spatial_condenser.3} parent=0 // pred_region
    _
  $region29: #{adaptive_spatial_condenser.3} parent=0 // pred_fallthru
    _

</llo_original>
